<compile_context>
chip_gen: v6e
topology: v6e:2x2x1
jax: 0.10.0
libtpu: 0.0.40
codegen_flags: <defaults>
</compile_context>

<pallas_src>
import functools

import jax
import jax.numpy as jnp
import numpy as np
from jax.experimental import pallas as pl
from jax.experimental.pallas import tpu as pltpu


# ---------------------------------------------------------------------------
# Kernel
# ---------------------------------------------------------------------------
def _gru_head_kernel(x_ref, wih_ref, whh_ref, bx_ref, bhn_ref,
                     wout_ref, bout_ref, out_ref, h_ref):
    """One grid step = one (batch tile, time block) of the GRU recurrence.

    NOTE: correctness relies on grid=(batch, time) with the time axis
    innermost and "arbitrary" (sequential): the single h scratch is the
    per-batch-tile recurrent carry and would be clobbered under any other
    grid ordering.
    """
    tt, tb, _ = x_ref.shape          # time block, batch tile, input dim
    Hp = h_ref.shape[-1]             # per-gate lane-padded hidden width
    f32 = jnp.float32
    t_blk = pl.program_id(1)

    @pl.when(t_blk == 0)
    def _():
        h_ref[...] = jnp.zeros_like(h_ref)

    # Loop-invariant loads hoisted out of the unrolled time loop.
    wih = wih_ref[...]               # (I, 3*Hp)  gate cols at {0, Hp, 2*Hp}
    whh = whh_ref[...]               # (Hp, 3*Hp)
    bx = bx_ref[...]                 # (1, 3*Hp) f32: [b_ir+b_hr | b_iz+b_hz | b_in]
    bhn = bhn_ref[...]               # (1, Hp)   f32

    # x-side gate pre-activations for the WHOLE time block in one MXU call;
    # this pulls all non-serial matmul work off the recurrent critical path.
    x_blk = x_ref[...]                                       # (tt, tb, I)
    gx_all = jnp.dot(x_blk.reshape(tt * tb, wih.shape[0]), wih,
                     preferred_element_type=f32) + bx        # (tt*tb, 3*Hp) f32

    h = h_ref[...]                                           # (tb, Hp) f32 carry
    for i in range(tt):                                      # static unroll (tt <= 16)
        gx = gx_all[i * tb:(i + 1) * tb]                     # (tb, 3*Hp)
        gh = jnp.dot(h.astype(whh.dtype), whh,
                     preferred_element_type=f32)             # (tb, 3*Hp)
        # Fused r|z sigmoid over the contiguous, lane-aligned [0, 2*Hp) slice.
        rz = jax.nn.sigmoid(gx[:, :2 * Hp] + gh[:, :2 * Hp])
        r = rz[:, :Hp]
        z = rz[:, Hp:]
        n = jnp.tanh(gx[:, 2 * Hp:] + r * (gh[:, 2 * Hp:] + bhn))
        h = n + z * (h - n)                                  # == (1 - z)*n + z*h
    h_ref[...] = h

    @pl.when(t_blk == pl.num_programs(1) - 1)
    def _():
        out_ref[...] = (jnp.dot(h.astype(wout_ref.dtype), wout_ref[...],
                                preferred_element_type=f32)
                        + bout_ref[...]).astype(out_ref.dtype)


# ---------------------------------------------------------------------------
# Tiling helpers
# ---------------------------------------------------------------------------
def _round_up(v, m):
    return ((v + m - 1) // m) * m


def _pick_batch_block(B, max_block=256):
    """Largest multiple-of-8 divisor of B, preferring >=2 tiles (v7x 2 TCs)."""
    cands = [tb for tb in range(8, min(B, max_block) + 1, 8) if B % tb == 0]
    if not cands:
        return B                      # small/awkward B: one full-batch tile
    two = [tb for tb in cands if B // tb >= 2]
    return max(two) if two else max(cands)


def _pick_time_block(T, max_block=16):
    """Largest divisor of T <= max_block, preferring >=2 time blocks so the
    x-stream DMA pipelines.  Bounded so the static in-kernel unroll stays
    small (no compile-time / vreg-spill blowup)."""
    divs = [d for d in range(1, min(T, max_block) + 1) if T % d == 0]
    two = [d for d in divs if T // d >= 2]
    return max(two) if two else max(divs)


def _const_spec(shape, single_buffer):
    """BlockSpec for a grid-invariant operand (index map always 0)."""
    idx = lambda b, t: (0,) * len(shape)
    if single_buffer:
        # Constants are never re-DMA'd; single-buffering halves their VMEM.
        return pl.BlockSpec(shape, idx, pipeline_mode=pl.Buffered(1))
    return pl.BlockSpec(shape, idx)


# ---------------------------------------------------------------------------
# Forward
# ---------------------------------------------------------------------------
@functools.partial(jax.jit, static_argnames=("compute_dtype",
                                             "single_buffer_consts"))
def _forward(x, params, compute_dtype, single_buffer_consts):
    if x.ndim == 4 and x.shape[2] == 1:
        x = jnp.squeeze(x, axis=2)
    B, T, I = x.shape

    w_ih, w_hh = params["w_ih"], params["w_hh"]        # (3H, I), (3H, H)
    b_ih, b_hh = params["b_ih"], params["b_hh"]        # (3H,),  (3H,)
    w_out, b_out = params["w_out"], params["b_out"]    # (O, H), (O,)
    H = w_hh.shape[1]
    O = w_out.shape[0]

    f32 = jnp.float32
    # Per-gate lane padding: 128 keeps gate slices as aligned vreg views and
    # the gh matmul MXU-aligned.  (256 would further improve MXU fill on
    # v6e/v7x for large H at the cost of extra padding compute for small H.)
    Hp = _round_up(H, 128)
    Op = _round_up(O, 128)

    w_ir, w_iz, w_in = jnp.split(w_ih.astype(f32), 3, axis=0)
    w_hr, w_hz, w_hn = jnp.split(w_hh.astype(f32), 3, axis=0)
    b_ir, b_iz, b_in = jnp.split(b_ih.astype(f32), 3)
    b_hr, b_hz, b_hn = jnp.split(b_hh.astype(f32), 3)

    def pack_gate_cols(parts, rows):
        out = jnp.zeros((rows, 3 * Hp), f32)
        for g, p in enumerate(parts):
            out = out.at[:, g * Hp:g * Hp + H].set(p)
        return out

    # Fused, pre-transposed, per-gate-padded weights (right-multiplication).
    w_ih_p = pack_gate_cols([w_ir.T, w_iz.T, w_in.T], I)               # (I, 3Hp)
    w_hh_p = jnp.zeros((Hp, 3 * Hp), f32).at[:H, :].set(
        pack_gate_cols([w_hr.T, w_hz.T, w_hn.T], H))                   # (Hp, 3Hp)
    # b_hr / b_hz fold into the x-side bias; b_hn must stay inside r*(.).
    b_x3 = pack_gate_cols([(b_ir + b_hr)[None, :], (b_iz + b_hz)[None, :],
                           b_in[None, :]], 1)                          # (1, 3Hp)
    b_hn_p = jnp.zeros((1, Hp), f32).at[:, :H].set(b_hn[None, :])
    # Lane-padded head so the final store is unmasked.
    w_out_p = jnp.zeros((Hp, Op), f32).at[:H, :O].set(w_out.T.astype(f32))
    b_out_p = jnp.zeros((1, Op), f32).at[:, :O].set(
        b_out.astype(f32)[None, :])

    # MXU inputs in compute_dtype (default bf16); biases / h carry stay f32.
    wdt = compute_dtype
    w_ih_p = w_ih_p.astype(wdt)
    w_hh_p = w_hh_p.astype(wdt)
    w_out_p = w_out_p.astype(wdt)

    # Time-major so each timestep's gx slice is a contiguous row block and the
    # recurrence streams the leading axis.  For this module's small input_dim
    # the one-time transpose pass is negligible vs. streaming gains.
    x_tm = jnp.transpose(x, (1, 0, 2)).astype(wdt)      # (T, B, I)

    tb = _pick_batch_block(B)
    tt = _pick_time_block(T)
    nb, nt = B // tb, T // tt

    # Explicit VMEM budget (keeps large-H configs inside v7x's 64 MiB and
    # v5e's smaller scoped default).
    w_isz = jnp.dtype(wdt).itemsize
    x_blk_bytes = tt * tb * I * w_isz * 2                       # double-buffered
    const_bytes = (w_ih_p.size + w_hh_p.size + w_out_p.size) * w_isz \
        + (b_x3.size + b_hn_p.size + b_out_p.size) * 4
    const_bytes *= 1 if single_buffer_consts else 2
    out_bytes = tb * Op * 4 * 2
    scratch_bytes = tb * Hp * 4
    gx_bytes = tt * tb * 3 * Hp * 4                             # in-kernel gx_all
    est = x_blk_bytes + const_bytes + out_bytes + scratch_bytes + gx_bytes
    vmem_limit = int(min(max(2 * est, 32 * 2 ** 20), 100 * 2 ** 20))

    out = pl.pallas_call(
        _gru_head_kernel,
        out_shape=jax.ShapeDtypeStruct((B, Op), f32),
        grid_spec=pltpu.PrefetchScalarGridSpec(
            num_scalar_prefetch=0,
            grid=(nb, nt),
            in_specs=[
                pl.BlockSpec((tt, tb, I), lambda b, t: (t, b, 0)),   # x stream
                _const_spec((I, 3 * Hp), single_buffer_consts),      # W_ih fused
                _const_spec((Hp, 3 * Hp), single_buffer_consts),     # W_hh fused
                _const_spec((1, 3 * Hp), single_buffer_consts),      # x-side bias
                _const_spec((1, Hp), single_buffer_consts),          # b_hn
                _const_spec((Hp, Op), single_buffer_consts),         # W_out^T
                _const_spec((1, Op), single_buffer_consts),          # b_out
            ],
            out_specs=pl.BlockSpec((tb, Op), lambda b, t: (b, 0)),
            scratch_shapes=[pltpu.VMEM((tb, Hp), f32)],              # h carry
        ),
        compiler_params=pltpu.CompilerParams(
            dimension_semantics=("parallel", "arbitrary"),
            vmem_limit_bytes=vmem_limit),
    )(x_tm, w_ih_p, w_hh_p, b_x3, b_hn_p, w_out_p, b_out_p)

    summary = out[:, :O]
    # .unsqueeze(0).unsqueeze(-1).unsqueeze(-1)
    return summary[None, :, :, None, None]


def temporal_feature_aggregator(x, params, compute_dtype=jnp.bfloat16):
    """x: (B, T, I) or (B, T, 1, I). Returns (1, B, O, 1, 1) float32."""
    try:
        return _forward(x, params, compute_dtype=compute_dtype,
                        single_buffer_consts=True)
    except Exception:
        # pl.Buffered(1) (single-buffered constants) not supported on this
        # Pallas build -- fall back to default double-buffered constants.
        return _forward(x, params, compute_dtype=compute_dtype,
                        single_buffer_consts=False)


# ---------------------------------------------------------------------------
# Init + pure-JAX reference (for validation)
# ---------------------------------------------------------------------------
def _init_params(key, input_dim, hidden_dim, output_dim):
    # Deterministic init mimicking PyTorch's U(-1/sqrt(H), 1/sqrt(H)).
    ks = jax.random.split(key, 6)
    k = 1.0 / np.sqrt(hidden_dim)
    return {
        "w_ih": jax.random.uniform(ks[0], (3 * hidden_dim, input_dim),
                                   jnp.float32, -k, k),
        "w_hh": jax.random.uniform(ks[1], (3 * hidden_dim, hidden_dim),
                                   jnp.float32, -k, k),
        "b_ih": jax.random.uniform(ks[2], (3 * hidden_dim,),
                                   jnp.float32, -k, k),
        "b_hh": jax.random.uniform(ks[3], (3 * hidden_dim,),
                                   jnp.float32, -k, k),
        "w_out": jax.random.uniform(ks[4], (output_dim, hidden_dim),
                                    jnp.float32, -k, k),
        "b_out": jax.random.uniform(ks[5], (output_dim,),
                                    jnp.float32, -k, k),
    }


def _reference(x, params):
    if x.ndim == 4 and x.shape[2] == 1:
        x = jnp.squeeze(x, axis=2)
    B, T, I = x.shape
    H = params["w_hh"].shape[1]
    hp = jax.lax.Precision.HIGHEST
    dot = lambda a, b: jnp.dot(a, b, precision=hp)
    w_ir, w_iz, w_in = jnp.split(params["w_ih"], 3, axis=0)
    w_hr, w_hz, w_hn = jnp.split(params["w_hh"], 3, axis=0)
    b_ir, b_iz, b_in = jnp.split(params["b_ih"], 3)
    b_hr, b_hz, b_hn = jnp.split(params["b_hh"], 3)
    h = jnp.zeros((B, H), jnp.float32)
    for t in range(T):
        xt = x[:, t, :]
        r = jax.nn.sigmoid(dot(xt, w_ir.T) + b_ir + dot(h, w_hr.T) + b_hr)
        z = jax.nn.sigmoid(dot(xt, w_iz.T) + b_iz + dot(h, w_hz.T) + b_hz)
        n = jnp.tanh(dot(xt, w_in.T) + b_in + r * (dot(h, w_hn.T) + b_hn))
        h = (1.0 - z) * n + z * h
    out = dot(h, params["w_out"].T) + params["b_out"]
    return out[None, :, :, None, None]


if __name__ == "__main__":
    B, T, I, H, O = 2, 8, 4, 32, 16
    key = jax.random.PRNGKey(0)
    kx, kp = jax.random.split(key)
    # 4-D input with singleton dim 2, exercising the squeeze branch.
    x = jax.random.normal(kx, (B, T, 1, I), dtype=jnp.float32)
    params = _init_params(kp, I, H, O)

    ref = jax.block_until_ready(_reference(x, params))

    # Full-f32 compute path: tight check against the PyTorch-equivalent ref.
    out_f32 = jax.block_until_ready(
        temporal_feature_aggregator(x, params, compute_dtype=jnp.float32))
    assert out_f32.shape == (1, B, O, 1, 1), out_f32.shape
    np.testing.assert_allclose(np.asarray(out_f32), np.asarray(ref),
                               rtol=1e-3, atol=1e-3)

    # Default bf16-MXU path (f32 accumulation / f32 h carry): looser check.
    out_bf16 = jax.block_until_ready(temporal_feature_aggregator(x, params))
    assert out_bf16.shape == (1, B, O, 1, 1), out_bf16.shape
    np.testing.assert_allclose(np.asarray(out_bf16), np.asarray(ref),
                               rtol=3e-2, atol=3e-2)

    print("KERNEL_OK")
</pallas_src>

<mosaic_0001>
module attributes {stable_mosaic.version = 11 : i64} {
  func.func @_gru_head_kernel(%arg0: i32, %arg1: i32, %arg2: memref<4x2x4xf32, #tpu.memory_space<vmem>>, %arg3: memref<4x384xf32, #tpu.memory_space<vmem>>, %arg4: memref<128x384xf32, #tpu.memory_space<vmem>>, %arg5: memref<1x384xf32, #tpu.memory_space<vmem>>, %arg6: memref<1x128xf32, #tpu.memory_space<vmem>>, %arg7: memref<128x128xf32, #tpu.memory_space<vmem>>, %arg8: memref<1x128xf32, #tpu.memory_space<vmem>>, %arg9: memref<2x128xf32, #tpu.memory_space<vmem>>, %arg10: memref<2x128xf32, #tpu.memory_space<vmem>>) attributes {dimension_semantics = [#tpu.dimension_semantics<parallel>, #tpu.dimension_semantics<arbitrary>], iteration_bounds = array<i64: 1, 2>, scalar_prefetch = 0 : i64, scratch_operands = 1 : i64, tpu.core_type = #tpu.core_type<tc>, window_params = [{transform_indices = @transform_0, window_bounds = array<i64: 4, 2, 4>}, {pipeline_mode = #tpu.pipeline_mode<synchronous>, transform_indices = @transform_1, window_bounds = array<i64: 4, 384>}, {pipeline_mode = #tpu.pipeline_mode<synchronous>, transform_indices = @transform_2, window_bounds = array<i64: 128, 384>}, {pipeline_mode = #tpu.pipeline_mode<synchronous>, transform_indices = @transform_3, window_bounds = array<i64: 1, 384>}, {pipeline_mode = #tpu.pipeline_mode<synchronous>, transform_indices = @transform_4, window_bounds = array<i64: 1, 128>}, {pipeline_mode = #tpu.pipeline_mode<synchronous>, transform_indices = @transform_5, window_bounds = array<i64: 128, 128>}, {pipeline_mode = #tpu.pipeline_mode<synchronous>, transform_indices = @transform_6, window_bounds = array<i64: 1, 128>}, {transform_indices = @transform_7, window_bounds = array<i64: 2, 128>}]} {
    %c0_i32 = arith.constant 0 : i32
    %0 = arith.cmpi eq, %arg1, %c0_i32 : i32
    %1 = arith.extui %0 : i1 to i32
    %c0_i32_0 = arith.constant 0 : i32
    %2 = arith.cmpi ne, %1, %c0_i32_0 : i32
    scf.if %2 {
      %cst_24 = arith.constant 0.000000e+00 : f32
      %105 = vector.broadcast %cst_24 : f32 to vector<2x128xf32>
      %c0_25 = arith.constant 0 : index
      %c0_26 = arith.constant 0 : index
      %106 = vector.load %arg10[%c0_25, %c0_26] : memref<2x128xf32, #tpu.memory_space<vmem>>, vector<2x128xf32>
      tpu.vector_store %arg10[%c0_25, %c0_26], %105 {strides = array<i32>} : memref<2x128xf32, #tpu.memory_space<vmem>>, vector<2x128xf32>,
    } else {
    }
    %c0 = arith.constant 0 : index
    %c0_1 = arith.constant 0 : index
    %3 = vector.load %arg3[%c0, %c0_1] : memref<4x384xf32, #tpu.memory_space<vmem>>, vector<4x384xf32>
    %c0_2 = arith.constant 0 : index
    %c0_3 = arith.constant 0 : index
    %4 = vector.load %arg4[%c0_2, %c0_3] : memref<128x384xf32, #tpu.memory_space<vmem>>, vector<128x384xf32>
    %c0_4 = arith.constant 0 : index
    %c0_5 = arith.constant 0 : index
    %5 = vector.load %arg5[%c0_4, %c0_5] : memref<1x384xf32, #tpu.memory_space<vmem>>, vector<1x384xf32>
    %c0_6 = arith.constant 0 : index
    %c0_7 = arith.constant 0 : index
    %6 = vector.load %arg6[%c0_6, %c0_7] : memref<1x128xf32, #tpu.memory_space<vmem>>, vector<1x128xf32>
    %c0_8 = arith.constant 0 : index
    %c0_9 = arith.constant 0 : index
    %c0_10 = arith.constant 0 : index
    %7 = vector.load %arg2[%c0_8, %c0_9, %c0_10] : memref<4x2x4xf32, #tpu.memory_space<vmem>>, vector<4x2x4xf32>
    %8 = vector.shape_cast %7 : vector<4x2x4xf32> to vector<8x4xf32>
    %cst = arith.constant dense<0.000000e+00> : vector<8x384xf32>
    %9 = tpu.matmul %8, %3, %cst {dimension_numbers = #tpu.dot_dimension_numbers<[1], [0], [0], [1], [0, 0, 1, 1], [], []>} : vector<8x4xf32>, vector<4x384xf32>, vector<8x384xf32> -> vector<8x384xf32>
    %10 = vector.broadcast %5 : vector<1x384xf32> to vector<8x384xf32>
    %11 = arith.addf %9, %10 : vector<8x384xf32>
    %c0_11 = arith.constant 0 : index
    %c0_12 = arith.constant 0 : index
    %12 = vector.load %arg10[%c0_11, %c0_12] : memref<2x128xf32, #tpu.memory_space<vmem>>, vector<2x128xf32>
    %13 = vector.extract_strided_slice %11 {offsets = [0, 0], sizes = [2, 384], strides = [1, 1]} : vector<8x384xf32> to vector<2x384xf32>
    %cst_13 = arith.constant dense<0.000000e+00> : vector<2x384xf32>
    %14 = tpu.matmul %12, %4, %cst_13 {dimension_numbers = #tpu.dot_dimension_numbers<[1], [0], [0], [1], [0, 0, 1, 1], [], []>} : vector<2x128xf32>, vector<128x384xf32>, vector<2x384xf32> -> vector<2x384xf32>
    %15 = vector.extract_strided_slice %13 {offsets = [0, 0], sizes = [2, 256], strides = [1, 1]} : vector<2x384xf32> to vector<2x256xf32>
    %16 = vector.extract_strided_slice %14 {offsets = [0, 0], sizes = [2, 256], strides = [1, 1]} : vector<2x384xf32> to vector<2x256xf32>
    %17 = arith.addf %15, %16 : vector<2x256xf32>
    %18 = arith.negf %17 : vector<2x256xf32>
    %19 = math.exp %18 : vector<2x256xf32>
    %cst_14 = arith.constant 1.000000e+00 : f32
    %20 = vector.broadcast %cst_14 : f32 to vector<2x256xf32>
    %21 = arith.addf %20, %19 : vector<2x256xf32>
    %22 = arith.divf %20, %21 : vector<2x256xf32>
    %23 = vector.extract_strided_slice %22 {offsets = [0, 0], sizes = [2, 128], strides = [1, 1]} : vector<2x256xf32> to vector<2x128xf32>
    %24 = vector.extract_strided_slice %22 {offsets = [0, 128], sizes = [2, 128], strides = [1, 1]} : vector<2x256xf32> to vector<2x128xf32>
    %25 = vector.extract_strided_slice %13 {offsets = [0, 256], sizes = [2, 128], strides = [1, 1]} : vector<2x384xf32> to vector<2x128xf32>
    %26 = vector.extract_strided_slice %14 {offsets = [0, 256], sizes = [2, 128], strides = [1, 1]} : vector<2x384xf32> to vector<2x128xf32>
    %27 = vector.broadcast %6 : vector<1x128xf32> to vector<2x128xf32>
    %28 = arith.addf %26, %27 : vector<2x128xf32>
    %29 = arith.mulf %23, %28 : vector<2x128xf32>
    %30 = arith.addf %25, %29 : vector<2x128xf32>
    %31 = math.tanh %30 : vector<2x128xf32>
    %32 = arith.subf %12, %31 : vector<2x128xf32>
    %33 = arith.mulf %24, %32 : vector<2x128xf32>
    %34 = arith.addf %31, %33 : vector<2x128xf32>
    %35 = vector.extract_strided_slice %11 {offsets = [2, 0], sizes = [2, 384], strides = [1, 1]} : vector<8x384xf32> to vector<2x384xf32>
    %cst_15 = arith.constant dense<0.000000e+00> : vector<2x384xf32>
    %36 = tpu.matmul %34, %4, %cst_15 {dimension_numbers = #tpu.dot_dimension_numbers<[1], [0], [0], [1], [0, 0, 1, 1], [], []>} : vector<2x128xf32>, vector<128x384xf32>, vector<2x384xf32> -> vector<2x384xf32>
    %37 = vector.extract_strided_slice %35 {offsets = [0, 0], sizes = [2, 256], strides = [1, 1]} : vector<2x384xf32> to vector<2x256xf32>
    %38 = vector.extract_strided_slice %36 {offsets = [0, 0], sizes = [2, 256], strides = [1, 1]} : vector<2x384xf32> to vector<2x256xf32>
    %39 = arith.addf %37, %38 : vector<2x256xf32>
    %40 = arith.negf %39 : vector<2x256xf32>
    %41 = math.exp %40 : vector<2x256xf32>
    %cst_16 = arith.constant 1.000000e+00 : f32
    %42 = vector.broadcast %cst_16 : f32 to vector<2x256xf32>
    %43 = arith.addf %42, %41 : vector<2x256xf32>
    %44 = arith.divf %42, %43 : vector<2x256xf32>
    %45 = vector.extract_strided_slice %44 {offsets = [0, 0], sizes = [2, 128], strides = [1, 1]} : vector<2x256xf32> to vector<2x128xf32>
    %46 = vector.extract_strided_slice %44 {offsets = [0, 128], sizes = [2, 128], strides = [1, 1]} : vector<2x256xf32> to vector<2x128xf32>
    %47 = vector.extract_strided_slice %35 {offsets = [0, 256], sizes = [2, 128], strides = [1, 1]} : vector<2x384xf32> to vector<2x128xf32>
    %48 = vector.extract_strided_slice %36 {offsets = [0, 256], sizes = [2, 128], strides = [1, 1]} : vector<2x384xf32> to vector<2x128xf32>
    %49 = vector.broadcast %6 : vector<1x128xf32> to vector<2x128xf32>
    %50 = arith.addf %48, %49 : vector<2x128xf32>
    %51 = arith.mulf %45, %50 : vector<2x128xf32>
    %52 = arith.addf %47, %51 : vector<2x128xf32>
    %53 = math.tanh %52 : vector<2x128xf32>
    %54 = arith.subf %34, %53 : vector<2x128xf32>
    %55 = arith.mulf %46, %54 : vector<2x128xf32>
    %56 = arith.addf %53, %55 : vector<2x128xf32>
    %57 = vector.extract_strided_slice %11 {offsets = [4, 0], sizes = [2, 384], strides = [1, 1]} : vector<8x384xf32> to vector<2x384xf32>
    %cst_17 = arith.constant dense<0.000000e+00> : vector<2x384xf32>
    %58 = tpu.matmul %56, %4, %cst_17 {dimension_numbers = #tpu.dot_dimension_numbers<[1], [0], [0], [1], [0, 0, 1, 1], [], []>} : vector<2x128xf32>, vector<128x384xf32>, vector<2x384xf32> -> vector<2x384xf32>
    %59 = vector.extract_strided_slice %57 {offsets = [0, 0], sizes = [2, 256], strides = [1, 1]} : vector<2x384xf32> to vector<2x256xf32>
    %60 = vector.extract_strided_slice %58 {offsets = [0, 0], sizes = [2, 256], strides = [1, 1]} : vector<2x384xf32> to vector<2x256xf32>
    %61 = arith.addf %59, %60 : vector<2x256xf32>
    %62 = arith.negf %61 : vector<2x256xf32>
    %63 = math.exp %62 : vector<2x256xf32>
    %cst_18 = arith.constant 1.000000e+00 : f32
    %64 = vector.broadcast %cst_18 : f32 to vector<2x256xf32>
    %65 = arith.addf %64, %63 : vector<2x256xf32>
    %66 = arith.divf %64, %65 : vector<2x256xf32>
    %67 = vector.extract_strided_slice %66 {offsets = [0, 0], sizes = [2, 128], strides = [1, 1]} : vector<2x256xf32> to vector<2x128xf32>
    %68 = vector.extract_strided_slice %66 {offsets = [0, 128], sizes = [2, 128], strides = [1, 1]} : vector<2x256xf32> to vector<2x128xf32>
    %69 = vector.extract_strided_slice %57 {offsets = [0, 256], sizes = [2, 128], strides = [1, 1]} : vector<2x384xf32> to vector<2x128xf32>
    %70 = vector.extract_strided_slice %58 {offsets = [0, 256], sizes = [2, 128], strides = [1, 1]} : vector<2x384xf32> to vector<2x128xf32>
    %71 = vector.broadcast %6 : vector<1x128xf32> to vector<2x128xf32>
    %72 = arith.addf %70, %71 : vector<2x128xf32>
    %73 = arith.mulf %67, %72 : vector<2x128xf32>
    %74 = arith.addf %69, %73 : vector<2x128xf32>
    %75 = math.tanh %74 : vector<2x128xf32>
    %76 = arith.subf %56, %75 : vector<2x128xf32>
    %77 = arith.mulf %68, %76 : vector<2x128xf32>
    %78 = arith.addf %75, %77 : vector<2x128xf32>
    %79 = vector.extract_strided_slice %11 {offsets = [6, 0], sizes = [2, 384], strides = [1, 1]} : vector<8x384xf32> to vector<2x384xf32>
    %cst_19 = arith.constant dense<0.000000e+00> : vector<2x384xf32>
    %80 = tpu.matmul %78, %4, %cst_19 {dimension_numbers = #tpu.dot_dimension_numbers<[1], [0], [0], [1], [0, 0, 1, 1], [], []>} : vector<2x128xf32>, vector<128x384xf32>, vector<2x384xf32> -> vector<2x384xf32>
    %81 = vector.extract_strided_slice %79 {offsets = [0, 0], sizes = [2, 256], strides = [1, 1]} : vector<2x384xf32> to vector<2x256xf32>
    %82 = vector.extract_strided_slice %80 {offsets = [0, 0], sizes = [2, 256], strides = [1, 1]} : vector<2x384xf32> to vector<2x256xf32>
    %83 = arith.addf %81, %82 : vector<2x256xf32>
    %84 = arith.negf %83 : vector<2x256xf32>
    %85 = math.exp %84 : vector<2x256xf32>
    %cst_20 = arith.constant 1.000000e+00 : f32
    %86 = vector.broadcast %cst_20 : f32 to vector<2x256xf32>
    %87 = arith.addf %86, %85 : vector<2x256xf32>
    %88 = arith.divf %86, %87 : vector<2x256xf32>
    %89 = vector.extract_strided_slice %88 {offsets = [0, 0], sizes = [2, 128], strides = [1, 1]} : vector<2x256xf32> to vector<2x128xf32>
    %90 = vector.extract_strided_slice %88 {offsets = [0, 128], sizes = [2, 128], strides = [1, 1]} : vector<2x256xf32> to vector<2x128xf32>
    %91 = vector.extract_strided_slice %79 {offsets = [0, 256], sizes = [2, 128], strides = [1, 1]} : vector<2x384xf32> to vector<2x128xf32>
    %92 = vector.extract_strided_slice %80 {offsets = [0, 256], sizes = [2, 128], strides = [1, 1]} : vector<2x384xf32> to vector<2x128xf32>
    %93 = vector.broadcast %6 : vector<1x128xf32> to vector<2x128xf32>
    %94 = arith.addf %92, %93 : vector<2x128xf32>
    %95 = arith.mulf %89, %94 : vector<2x128xf32>
    %96 = arith.addf %91, %95 : vector<2x128xf32>
    %97 = math.tanh %96 : vector<2x128xf32>
    %98 = arith.subf %78, %97 : vector<2x128xf32>
    %99 = arith.mulf %90, %98 : vector<2x128xf32>
    %100 = arith.addf %97, %99 : vector<2x128xf32>
    %c0_21 = arith.constant 0 : index
    %c0_22 = arith.constant 0 : index
    %101 = vector.load %arg10[%c0_21, %c0_22] : memref<2x128xf32, #tpu.memory_space<vmem>>, vector<2x128xf32>
    tpu.vector_store %arg10[%c0_21, %c0_22], %100 {strides = array<i32>} : memref<2x128xf32, #tpu.memory_space<vmem>>, vector<2x128xf32>,
    %c1_i32 = arith.constant 1 : i32
    %102 = arith.cmpi eq, %arg1, %c1_i32 : i32
    %103 = arith.extui %102 : i1 to i32
    %c0_i32_23 = arith.constant 0 : i32
    %104 = arith.cmpi ne, %103, %c0_i32_23 : i32
    scf.if %104 {
      %c0_24 = arith.constant 0 : index
      %c0_25 = arith.constant 0 : index
      %105 = vector.load %arg7[%c0_24, %c0_25] : memref<128x128xf32, #tpu.memory_space<vmem>>, vector<128x128xf32>
      %cst_26 = arith.constant dense<0.000000e+00> : vector<2x128xf32>
      %106 = tpu.matmul %100, %105, %cst_26 {dimension_numbers = #tpu.dot_dimension_numbers<[1], [0], [0], [1], [0, 0, 1, 1], [], []>} : vector<2x128xf32>, vector<128x128xf32>, vector<2x128xf32> -> vector<2x128xf32>
      %c0_27 = arith.constant 0 : index
      %c0_28 = arith.constant 0 : index
      %107 = vector.load %arg8[%c0_27, %c0_28] : memref<1x128xf32, #tpu.memory_space<vmem>>, vector<1x128xf32>
      %108 = vector.broadcast %107 : vector<1x128xf32> to vector<2x128xf32>
      %109 = arith.addf %106, %108 : vector<2x128xf32>
      %c0_29 = arith.constant 0 : index
      %c0_30 = arith.constant 0 : index
      %110 = vector.load %arg9[%c0_29, %c0_30] : memref<2x128xf32, #tpu.memory_space<vmem>>, vector<2x128xf32>
      tpu.vector_store %arg9[%c0_29, %c0_30], %109 {strides = array<i32>} : memref<2x128xf32, #tpu.memory_space<vmem>>, vector<2x128xf32>,
    } else {
    }
    return
  }
  func.func @transform_0(%arg0: i32, %arg1: i32) -> (i32, i32, i32) {
    %c0_i32 = arith.constant 0 : i32
    %c0_i32_0 = arith.constant 0 : i32
    return %arg1, %arg0, %c0_i32 : i32, i32, i32
  }
  func.func @transform_1(%arg0: i32, %arg1: i32) -> (i32, i32) {
    %c0_i32 = arith.constant 0 : i32
    %c0_i32_0 = arith.constant 0 : i32
    %c0_i32_1 = arith.constant 0 : i32
    return %c0_i32, %c0_i32_0 : i32, i32
  }
  func.func @transform_2(%arg0: i32, %arg1: i32) -> (i32, i32) {
    %c0_i32 = arith.constant 0 : i32
    %c0_i32_0 = arith.constant 0 : i32
    %c0_i32_1 = arith.constant 0 : i32
    return %c0_i32, %c0_i32_0 : i32, i32
  }
  func.func @transform_3(%arg0: i32, %arg1: i32) -> (i32, i32) {
    %c0_i32 = arith.constant 0 : i32
    %c0_i32_0 = arith.constant 0 : i32
    %c0_i32_1 = arith.constant 0 : i32
    return %c0_i32, %c0_i32_0 : i32, i32
  }
  func.func @transform_4(%arg0: i32, %arg1: i32) -> (i32, i32) {
    %c0_i32 = arith.constant 0 : i32
    %c0_i32_0 = arith.constant 0 : i32
    %c0_i32_1 = arith.constant 0 : i32
    return %c0_i32, %c0_i32_0 : i32, i32
  }
  func.func @transform_5(%arg0: i32, %arg1: i32) -> (i32, i32) {
    %c0_i32 = arith.constant 0 : i32
    %c0_i32_0 = arith.constant 0 : i32
    %c0_i32_1 = arith.constant 0 : i32
    return %c0_i32, %c0_i32_0 : i32, i32
  }
  func.func @transform_6(%arg0: i32, %arg1: i32) -> (i32, i32) {
    %c0_i32 = arith.constant 0 : i32
    %c0_i32_0 = arith.constant 0 : i32
    %c0_i32_1 = arith.constant 0 : i32
    return %c0_i32, %c0_i32_0 : i32, i32
  }
  func.func @transform_7(%arg0: i32, %arg1: i32) -> (i32, i32) {
    %c0_i32 = arith.constant 0 : i32
    %c0_i32_0 = arith.constant 0 : i32
    return %arg0, %c0_i32 : i32, i32
  }
}

module attributes {stable_mosaic.version = 11 : i64} {
  func.func @_gru_head_kernel(%arg0: i32, %arg1: i32, %arg2: memref<4x2x4xf32, #tpu.memory_space<vmem>>, %arg3: memref<4x384xf32, #tpu.memory_space<vmem>>, %arg4: memref<128x384xf32, #tpu.memory_space<vmem>>, %arg5: memref<1x384xf32, #tpu.memory_space<vmem>>, %arg6: memref<1x128xf32, #tpu.memory_space<vmem>>, %arg7: memref<128x128xf32, #tpu.memory_space<vmem>>, %arg8: memref<1x128xf32, #tpu.memory_space<vmem>>, %arg9: memref<2x128xf32, #tpu.memory_space<vmem>>, %arg10: memref<2x128xf32, #tpu.memory_space<vmem>>) attributes {dimension_semantics = [#tpu.dimension_semantics<parallel>, #tpu.dimension_semantics<arbitrary>], iteration_bounds = array<i64: 1, 2>, scalar_prefetch = 0 : i64, scratch_operands = 1 : i64, tpu.core_type = #tpu.core_type<tc>, window_params = [{transform_indices = @transform_0, window_bounds = array<i64: 4, 2, 4>}, {pipeline_mode = #tpu.pipeline_mode<synchronous>, transform_indices = @transform_1, window_bounds = array<i64: 4, 384>}, {pipeline_mode = #tpu.pipeline_mode<synchronous>, transform_indices = @transform_2, window_bounds = array<i64: 128, 384>}, {pipeline_mode = #tpu.pipeline_mode<synchronous>, transform_indices = @transform_3, window_bounds = array<i64: 1, 384>}, {pipeline_mode = #tpu.pipeline_mode<synchronous>, transform_indices = @transform_4, window_bounds = array<i64: 1, 128>}, {pipeline_mode = #tpu.pipeline_mode<synchronous>, transform_indices = @transform_5, window_bounds = array<i64: 128, 128>}, {pipeline_mode = #tpu.pipeline_mode<synchronous>, transform_indices = @transform_6, window_bounds = array<i64: 1, 128>}, {transform_indices = @transform_7, window_bounds = array<i64: 2, 128>}]} {
    %c0_i32 = arith.constant 0 : i32
    %0 = arith.cmpi eq, %arg1, %c0_i32 : i32
    %1 = arith.extui %0 : i1 to i32
    %c0_i32_0 = arith.constant 0 : i32
    %2 = arith.cmpi ne, %1, %c0_i32_0 : i32
    scf.if %2 {
      %cst_24 = arith.constant 0.000000e+00 : f32
      %105 = vector.broadcast %cst_24 : f32 to vector<2x128xf32>
      %c0_25 = arith.constant 0 : index
      %c0_26 = arith.constant 0 : index
      %106 = vector.load %arg10[%c0_25, %c0_26] : memref<2x128xf32, #tpu.memory_space<vmem>>, vector<2x128xf32>
      tpu.vector_store %arg10[%c0_25, %c0_26], %105 {strides = array<i32>} : memref<2x128xf32, #tpu.memory_space<vmem>>, vector<2x128xf32>,
    } else {
    }
    %c0 = arith.constant 0 : index
    %c0_1 = arith.constant 0 : index
    %3 = vector.load %arg3[%c0, %c0_1] : memref<4x384xf32, #tpu.memory_space<vmem>>, vector<4x384xf32>
    %c0_2 = arith.constant 0 : index
    %c0_3 = arith.constant 0 : index
    %4 = vector.load %arg4[%c0_2, %c0_3] : memref<128x384xf32, #tpu.memory_space<vmem>>, vector<128x384xf32>
    %c0_4 = arith.constant 0 : index
    %c0_5 = arith.constant 0 : index
    %5 = vector.load %arg5[%c0_4, %c0_5] : memref<1x384xf32, #tpu.memory_space<vmem>>, vector<1x384xf32>
    %c0_6 = arith.constant 0 : index
    %c0_7 = arith.constant 0 : index
    %6 = vector.load %arg6[%c0_6, %c0_7] : memref<1x128xf32, #tpu.memory_space<vmem>>, vector<1x128xf32>
    %c0_8 = arith.constant 0 : index
    %c0_9 = arith.constant 0 : index
    %c0_10 = arith.constant 0 : index
    %7 = vector.load %arg2[%c0_8, %c0_9, %c0_10] : memref<4x2x4xf32, #tpu.memory_space<vmem>>, vector<4x2x4xf32>
    %8 = vector.shape_cast %7 : vector<4x2x4xf32> to vector<8x4xf32>
    %cst = arith.constant dense<0.000000e+00> : vector<8x384xf32>
    %9 = tpu.matmul %8, %3, %cst {dimension_numbers = #tpu.dot_dimension_numbers<[1], [0], [0], [1], [0, 0, 1, 1], [], []>} : vector<8x4xf32>, vector<4x384xf32>, vector<8x384xf32> -> vector<8x384xf32>
    %10 = vector.broadcast %5 : vector<1x384xf32> to vector<8x384xf32>
    %11 = arith.addf %9, %10 : vector<8x384xf32>
    %c0_11 = arith.constant 0 : index
    %c0_12 = arith.constant 0 : index
    %12 = vector.load %arg10[%c0_11, %c0_12] : memref<2x128xf32, #tpu.memory_space<vmem>>, vector<2x128xf32>
    %13 = vector.extract_strided_slice %11 {offsets = [0, 0], sizes = [2, 384], strides = [1, 1]} : vector<8x384xf32> to vector<2x384xf32>
    %cst_13 = arith.constant dense<0.000000e+00> : vector<2x384xf32>
    %14 = tpu.matmul %12, %4, %cst_13 {dimension_numbers = #tpu.dot_dimension_numbers<[1], [0], [0], [1], [0, 0, 1, 1], [], []>} : vector<2x128xf32>, vector<128x384xf32>, vector<2x384xf32> -> vector<2x384xf32>
    %15 = vector.extract_strided_slice %13 {offsets = [0, 0], sizes = [2, 256], strides = [1, 1]} : vector<2x384xf32> to vector<2x256xf32>
    %16 = vector.extract_strided_slice %14 {offsets = [0, 0], sizes = [2, 256], strides = [1, 1]} : vector<2x384xf32> to vector<2x256xf32>
    %17 = arith.addf %15, %16 : vector<2x256xf32>
    %18 = arith.negf %17 : vector<2x256xf32>
    %19 = math.exp %18 : vector<2x256xf32>
    %cst_14 = arith.constant 1.000000e+00 : f32
    %20 = vector.broadcast %cst_14 : f32 to vector<2x256xf32>
    %21 = arith.addf %20, %19 : vector<2x256xf32>
    %22 = arith.divf %20, %21 : vector<2x256xf32>
    %23 = vector.extract_strided_slice %22 {offsets = [0, 0], sizes = [2, 128], strides = [1, 1]} : vector<2x256xf32> to vector<2x128xf32>
    %24 = vector.extract_strided_slice %22 {offsets = [0, 128], sizes = [2, 128], strides = [1, 1]} : vector<2x256xf32> to vector<2x128xf32>
    %25 = vector.extract_strided_slice %13 {offsets = [0, 256], sizes = [2, 128], strides = [1, 1]} : vector<2x384xf32> to vector<2x128xf32>
    %26 = vector.extract_strided_slice %14 {offsets = [0, 256], sizes = [2, 128], strides = [1, 1]} : vector<2x384xf32> to vector<2x128xf32>
    %27 = vector.broadcast %6 : vector<1x128xf32> to vector<2x128xf32>
    %28 = arith.addf %26, %27 : vector<2x128xf32>
    %29 = arith.mulf %23, %28 : vector<2x128xf32>
    %30 = arith.addf %25, %29 : vector<2x128xf32>
    %31 = math.tanh %30 : vector<2x128xf32>
    %32 = arith.subf %12, %31 : vector<2x128xf32>
    %33 = arith.mulf %24, %32 : vector<2x128xf32>
    %34 = arith.addf %31, %33 : vector<2x128xf32>
    %35 = vector.extract_strided_slice %11 {offsets = [2, 0], sizes = [2, 384], strides = [1, 1]} : vector<8x384xf32> to vector<2x384xf32>
    %cst_15 = arith.constant dense<0.000000e+00> : vector<2x384xf32>
    %36 = tpu.matmul %34, %4, %cst_15 {dimension_numbers = #tpu.dot_dimension_numbers<[1], [0], [0], [1], [0, 0, 1, 1], [], []>} : vector<2x128xf32>, vector<128x384xf32>, vector<2x384xf32> -> vector<2x384xf32>
    %37 = vector.extract_strided_slice %35 {offsets = [0, 0], sizes = [2, 256], strides = [1, 1]} : vector<2x384xf32> to vector<2x256xf32>
    %38 = vector.extract_strided_slice %36 {offsets = [0, 0], sizes = [2, 256], strides = [1, 1]} : vector<2x384xf32> to vector<2x256xf32>
    %39 = arith.addf %37, %38 : vector<2x256xf32>
    %40 = arith.negf %39 : vector<2x256xf32>
    %41 = math.exp %40 : vector<2x256xf32>
    %cst_16 = arith.constant 1.000000e+00 : f32
    %42 = vector.broadcast %cst_16 : f32 to vector<2x256xf32>
    %43 = arith.addf %42, %41 : vector<2x256xf32>
    %44 = arith.divf %42, %43 : vector<2x256xf32>
    %45 = vector.extract_strided_slice %44 {offsets = [0, 0], sizes = [2, 128], strides = [1, 1]} : vector<2x256xf32> to vector<2x128xf32>
    %46 = vector.extract_strided_slice %44 {offsets = [0, 128], sizes = [2, 128], strides = [1, 1]} : vector<2x256xf32> to vector<2x128xf32>
    %47 = vector.extract_strided_slice %35 {offsets = [0, 256], sizes = [2, 128], strides = [1, 1]} : vector<2x384xf32> to vector<2x128xf32>
    %48 = vector.extract_strided_slice %36 {offsets = [0, 256], sizes = [2, 128], strides = [1, 1]} : vector<2x384xf32> to vector<2x128xf32>
    %49 = vector.broadcast %6 : vector<1x128xf32> to vector<2x128xf32>
    %50 = arith.addf %48, %49 : vector<2x128xf32>
    %51 = arith.mulf %45, %50 : vector<2x128xf32>
    %52 = arith.addf %47, %51 : vector<2x128xf32>
    %53 = math.tanh %52 : vector<2x128xf32>
    %54 = arith.subf %34, %53 : vector<2x128xf32>
    %55 = arith.mulf %46, %54 : vector<2x128xf32>
    %56 = arith.addf %53, %55 : vector<2x128xf32>
    %57 = vector.extract_strided_slice %11 {offsets = [4, 0], sizes = [2, 384], strides = [1, 1]} : vector<8x384xf32> to vector<2x384xf32>
    %cst_17 = arith.constant dense<0.000000e+00> : vector<2x384xf32>
    %58 = tpu.matmul %56, %4, %cst_17 {dimension_numbers = #tpu.dot_dimension_numbers<[1], [0], [0], [1], [0, 0, 1, 1], [], []>} : vector<2x128xf32>, vector<128x384xf32>, vector<2x384xf32> -> vector<2x384xf32>
    %59 = vector.extract_strided_slice %57 {offsets = [0, 0], sizes = [2, 256], strides = [1, 1]} : vector<2x384xf32> to vector<2x256xf32>
    %60 = vector.extract_strided_slice %58 {offsets = [0, 0], sizes = [2, 256], strides = [1, 1]} : vector<2x384xf32> to vector<2x256xf32>
    %61 = arith.addf %59, %60 : vector<2x256xf32>
    %62 = arith.negf %61 : vector<2x256xf32>
    %63 = math.exp %62 : vector<2x256xf32>
    %cst_18 = arith.constant 1.000000e+00 : f32
    %64 = vector.broadcast %cst_18 : f32 to vector<2x256xf32>
    %65 = arith.addf %64, %63 : vector<2x256xf32>
    %66 = arith.divf %64, %65 : vector<2x256xf32>
    %67 = vector.extract_strided_slice %66 {offsets = [0, 0], sizes = [2, 128], strides = [1, 1]} : vector<2x256xf32> to vector<2x128xf32>
    %68 = vector.extract_strided_slice %66 {offsets = [0, 128], sizes = [2, 128], strides = [1, 1]} : vector<2x256xf32> to vector<2x128xf32>
    %69 = vector.extract_strided_slice %57 {offsets = [0, 256], sizes = [2, 128], strides = [1, 1]} : vector<2x384xf32> to vector<2x128xf32>
    %70 = vector.extract_strided_slice %58 {offsets = [0, 256], sizes = [2, 128], strides = [1, 1]} : vector<2x384xf32> to vector<2x128xf32>
    %71 = vector.broadcast %6 : vector<1x128xf32> to vector<2x128xf32>
    %72 = arith.addf %70, %71 : vector<2x128xf32>
    %73 = arith.mulf %67, %72 : vector<2x128xf32>
    %74 = arith.addf %69, %73 : vector<2x128xf32>
    %75 = math.tanh %74 : vector<2x128xf32>
    %76 = arith.subf %56, %75 : vector<2x128xf32>
    %77 = arith.mulf %68, %76 : vector<2x128xf32>
    %78 = arith.addf %75, %77 : vector<2x128xf32>
    %79 = vector.extract_strided_slice %11 {offsets = [6, 0], sizes = [2, 384], strides = [1, 1]} : vector<8x384xf32> to vector<2x384xf32>
    %cst_19 = arith.constant dense<0.000000e+00> : vector<2x384xf32>
    %80 = tpu.matmul %78, %4, %cst_19 {dimension_numbers = #tpu.dot_dimension_numbers<[1], [0], [0], [1], [0, 0, 1, 1], [], []>} : vector<2x128xf32>, vector<128x384xf32>, vector<2x384xf32> -> vector<2x384xf32>
    %81 = vector.extract_strided_slice %79 {offsets = [0, 0], sizes = [2, 256], strides = [1, 1]} : vector<2x384xf32> to vector<2x256xf32>
    %82 = vector.extract_strided_slice %80 {offsets = [0, 0], sizes = [2, 256], strides = [1, 1]} : vector<2x384xf32> to vector<2x256xf32>
    %83 = arith.addf %81, %82 : vector<2x256xf32>
    %84 = arith.negf %83 : vector<2x256xf32>
    %85 = math.exp %84 : vector<2x256xf32>
    %cst_20 = arith.constant 1.000000e+00 : f32
    %86 = vector.broadcast %cst_20 : f32 to vector<2x256xf32>
    %87 = arith.addf %86, %85 : vector<2x256xf32>
    %88 = arith.divf %86, %87 : vector<2x256xf32>
    %89 = vector.extract_strided_slice %88 {offsets = [0, 0], sizes = [2, 128], strides = [1, 1]} : vector<2x256xf32> to vector<2x128xf32>
    %90 = vector.extract_strided_slice %88 {offsets = [0, 128], sizes = [2, 128], strides = [1, 1]} : vector<2x256xf32> to vector<2x128xf32>
    %91 = vector.extract_strided_slice %79 {offsets = [0, 256], sizes = [2, 128], strides = [1, 1]} : vector<2x384xf32> to vector<2x128xf32>
    %92 = vector.extract_strided_slice %80 {offsets = [0, 256], sizes = [2, 128], strides = [1, 1]} : vector<2x384xf32> to vector<2x128xf32>
    %93 = vector.broadcast %6 : vector<1x128xf32> to vector<2x128xf32>
    %94 = arith.addf %92, %93 : vector<2x128xf32>
    %95 = arith.mulf %89, %94 : vector<2x128xf32>
    %96 = arith.addf %91, %95 : vector<2x128xf32>
    %97 = math.tanh %96 : vector<2x128xf32>
    %98 = arith.subf %78, %97 : vector<2x128xf32>
    %99 = arith.mulf %90, %98 : vector<2x128xf32>
    %100 = arith.addf %97, %99 : vector<2x128xf32>
    %c0_21 = arith.constant 0 : index
    %c0_22 = arith.constant 0 : index
    %101 = vector.load %arg10[%c0_21, %c0_22] : memref<2x128xf32, #tpu.memory_space<vmem>>, vector<2x128xf32>
    tpu.vector_store %arg10[%c0_21, %c0_22], %100 {strides = array<i32>} : memref<2x128xf32, #tpu.memory_space<vmem>>, vector<2x128xf32>,
    %c1_i32 = arith.constant 1 : i32
    %102 = arith.cmpi eq, %arg1, %c1_i32 : i32
    %103 = arith.extui %102 : i1 to i32
    %c0_i32_23 = arith.constant 0 : i32
    %104 = arith.cmpi ne, %103, %c0_i32_23 : i32
    scf.if %104 {
      %c0_24 = arith.constant 0 : index
      %c0_25 = arith.constant 0 : index
      %105 = vector.load %arg7[%c0_24, %c0_25] : memref<128x128xf32, #tpu.memory_space<vmem>>, vector<128x128xf32>
      %cst_26 = arith.constant dense<0.000000e+00> : vector<2x128xf32>
      %106 = tpu.matmul %100, %105, %cst_26 {dimension_numbers = #tpu.dot_dimension_numbers<[1], [0], [0], [1], [0, 0, 1, 1], [], []>} : vector<2x128xf32>, vector<128x128xf32>, vector<2x128xf32> -> vector<2x128xf32>
      %c0_27 = arith.constant 0 : index
      %c0_28 = arith.constant 0 : index
      %107 = vector.load %arg8[%c0_27, %c0_28] : memref<1x128xf32, #tpu.memory_space<vmem>>, vector<1x128xf32>
      %108 = vector.broadcast %107 : vector<1x128xf32> to vector<2x128xf32>
      %109 = arith.addf %106, %108 : vector<2x128xf32>
      %c0_29 = arith.constant 0 : index
      %c0_30 = arith.constant 0 : index
      %110 = vector.load %arg9[%c0_29, %c0_30] : memref<2x128xf32, #tpu.memory_space<vmem>>, vector<2x128xf32>
      tpu.vector_store %arg9[%c0_29, %c0_30], %109 {strides = array<i32>} : memref<2x128xf32, #tpu.memory_space<vmem>>, vector<2x128xf32>,
    } else {
    }
    return
  }
  func.func @transform_0(%arg0: i32, %arg1: i32) -> (i32, i32, i32) {
    %c0_i32 = arith.constant 0 : i32
    %c0_i32_0 = arith.constant 0 : i32
    return %arg1, %arg0, %c0_i32 : i32, i32, i32
  }
  func.func @transform_1(%arg0: i32, %arg1: i32) -> (i32, i32) {
    %c0_i32 = arith.constant 0 : i32
    %c0_i32_0 = arith.constant 0 : i32
    %c0_i32_1 = arith.constant 0 : i32
    return %c0_i32, %c0_i32_0 : i32, i32
  }
  func.func @transform_2(%arg0: i32, %arg1: i32) -> (i32, i32) {
    %c0_i32 = arith.constant 0 : i32
    %c0_i32_0 = arith.constant 0 : i32
    %c0_i32_1 = arith.constant 0 : i32
    return %c0_i32, %c0_i32_0 : i32, i32
  }
  func.func @transform_3(%arg0: i32, %arg1: i32) -> (i32, i32) {
    %c0_i32 = arith.constant 0 : i32
    %c0_i32_0 = arith.constant 0 : i32
    %c0_i32_1 = arith.constant 0 : i32
    return %c0_i32, %c0_i32_0 : i32, i32
  }
  func.func @transform_4(%arg0: i32, %arg1: i32) -> (i32, i32) {
    %c0_i32 = arith.constant 0 : i32
    %c0_i32_0 = arith.constant 0 : i32
    %c0_i32_1 = arith.constant 0 : i32
    return %c0_i32, %c0_i32_0 : i32, i32
  }
  func.func @transform_5(%arg0: i32, %arg1: i32) -> (i32, i32) {
    %c0_i32 = arith.constant 0 : i32
    %c0_i32_0 = arith.constant 0 : i32
    %c0_i32_1 = arith.constant 0 : i32
    return %c0_i32, %c0_i32_0 : i32, i32
  }
  func.func @transform_6(%arg0: i32, %arg1: i32) -> (i32, i32) {
    %c0_i32 = arith.constant 0 : i32
    %c0_i32_0 = arith.constant 0 : i32
    %c0_i32_1 = arith.constant 0 : i32
    return %c0_i32, %c0_i32_0 : i32, i32
  }
  func.func @transform_7(%arg0: i32, %arg1: i32) -> (i32, i32) {
    %c0_i32 = arith.constant 0 : i32
    %c0_i32_0 = arith.constant 0 : i32
    return %arg0, %c0_i32 : i32, i32
  }
}

</mosaic_0001>

<llo_original>
// kernel: _forward.1
$region0: #{_forward.1}
  #allocation0 [shape = 'u32[]', space=smem, size = 0x4, offset = 0x4, fixed_abs, tag = 'smem constant byte address 0x4 - core index']
  #allocation1 [shape = 'u32[144,128]{1,0:T(1,128)}', space=vmem, size = 0x12000, scoped, tag = 'internal scratch']
  #allocation2 [shape = 'f32[2,128]{1,0:T(2,128)}', space=vmem, size = 0x400, scoped, tag = 'scratch operand']
  %s0 = inlined_call_operand.vmem [shape: f32[8,2,4], index: 0, kind: input, shape index: {}]
  %s1 = inlined_call_operand.vmem [shape: f32[4,384], index: 1, kind: input, shape index: {}]
  %s2 = inlined_call_operand.vmem [shape: f32[128,384], index: 2, kind: input, shape index: {}]
  %s3 = inlined_call_operand.vmem [shape: f32[1,384], index: 3, kind: input, shape index: {}]
  %s4 = inlined_call_operand.vmem [shape: f32[1,128], index: 4, kind: input, shape index: {}]
  %s5 = inlined_call_operand.vmem [shape: f32[128,128], index: 5, kind: input, shape index: {}]
  %s6 = inlined_call_operand.vmem [shape: f32[1,128], index: 6, kind: input, shape index: {}]
  %s7 = inlined_call_operand.hbm [shape: f32[2,128], index: 7, kind: output, shape index: {}]
  %s8 = sld [smem:[#allocation0]]
  $region69: #{_forward.1} parent=0
    _
  %s10 = ssub.s32 1, %s8
  %s11 = scalar_select 0, %s10, %s8
  $region1: #{_forward.1} parent=0
    #allocation3 [shape = 'u8[1024]{0}', space=vmem, size = 0x400, scoped, tag = 'output window, operand 0, single buffered']
    #allocation4 [shape = 's32[2]{0}', space=sflag, size = 0x8, scoped, tag = 'scoped memory for _forward.1']
    %12 = vsyncpa [#allocation4], 0
    loop: start=0, step=1, limit=4
    $region2: #{_forward.1} parent=1 // loop_pre_header
      _
    $region3: #{_forward.1} parent=1 // loop_header
      %s14 = sphi 0, %s18
      %p15 = scmp.ge.s32.totalorder %s14, 4
      %s21 = sphi 0, %s33
      %s22 = sphi 0, %s29
      %s23 = sphi 0, %s21
      %s24 = sphi 0, %s22
      %s25 = sphi 0, %s23
      %s26 = sphi 0, %s24
      %s38 = sphi 0, %s40
      %s41 = sphi 0, %s38
      %s42 = sphi 0, %s41
      %s58 = sphi 0, %s42
      %s62 = sphi 0, %s62
      %s64 = sphi 0, %s62
      %s65 = sphi 0, %s64
      %s79 = sphi 0, %s65
      %s83 = sphi 0, %s83
      %s85 = sphi 0, %s83
      %s86 = sphi 0, %s85
      %s100 = sphi 0, %s86
      %s104 = sphi 0, %s104
      %s106 = sphi 0, %s104
      %s107 = sphi 0, %s106
      %s121 = sphi 0, %s107
      %s125 = sphi 0, %s125
      %s127 = sphi 0, %s125
      %s128 = sphi 0, %s127
      %s142 = sphi 0, %s128
      %s146 = sphi 0, %s146
      %s148 = sphi 0, %s146
      %s149 = sphi 0, %s148
      %s163 = sphi 0, %s149
      %s167 = sphi 0, %s167
      %s169 = sphi 0, %s167
      %s170 = sphi 0, %s169
      %s184 = sphi 0, %s170
      %s190 = sphi 0, %s192
      %s193 = sphi 0, %s190
      %s194 = sphi 0, %s193
      %s210 = sphi 0, %s194
    $region4: #{_forward.1} parent=1 // loop_header_branch
      %17 = sbr.rel (%p15) target = $region8
    $region5: #{_forward.1} parent=1 // loop_body
      %s19 = ssub.s32 %s14, 1
      %s20 = ssub.s32 %s14, 2
      %s27 = sadd.s32 1, %s22
      %p28 = scmp.ge.s32.totalorder %s27, 2
      %s29 = scalar_select %p28, 0, %s27
      %s30 = sadd.s32 1, %s21
      %s31 = scalar_select %p28, %s30, %s21
      %p32 = scmp.ge.s32.totalorder %s31, 1
      %s33 = scalar_select %p32, 0, %s31
      %s34 = ssub.s32 %s22, %s29
      %s35 = ssub.s32 %s21, %s33
      %s36 = sor.u32 %s34, %s35
      %p37 = scmp.eq.s32.totalorder %s36, 0
      %s39 = sadd.s32 %s38, 1
      %s40 = scalar_select %p37, %s38, %s39
      %p43 = pneg %p37
      %p44 = scmp.eq.s32.totalorder %s14, 1
      %p45 = por %p43, %p44
      %p46 = scmp.ne.s32.totalorder %s38, %s41
      %p47 = scmp.eq.s32.totalorder %s14, 0
      %p48 = por %p46, %p47
      %p49 = scmp.ne.s32.totalorder %s38, %s41
      %p50 = scmp.eq.s32.totalorder %s19, 1
      %p51 = por %p49, %p50
      %p52 = scmp.ne.s32.totalorder %s41, %s42
      %p53 = scmp.eq.s32.totalorder %s19, 0
      %p54 = por %p52, %p53
      %p55 = scmp.ne.s32.totalorder %s41, %s42
      %p56 = scmp.eq.s32.totalorder %s20, 1
      %p57 = por %p55, %p56
      %p59 = scmp.ne.s32.totalorder %s42, %s58
      %p60 = scmp.eq.s32.totalorder %s20, 0
      %p61 = por %p59, %p60
      %s63 = sadd.s32 %s62, 1
      %p66 = scmp.eq.s32.totalorder %s14, 1
      %p67 = scmp.ne.s32.totalorder %s62, %s64
      %p68 = scmp.eq.s32.totalorder %s14, 0
      %p69 = por %p67, %p68
      %p70 = scmp.ne.s32.totalorder %s62, %s64
      %p71 = scmp.eq.s32.totalorder %s19, 1
      %p72 = por %p70, %p71
      %p73 = scmp.ne.s32.totalorder %s64, %s65
      %p74 = scmp.eq.s32.totalorder %s19, 0
      %p75 = por %p73, %p74
      %p76 = scmp.ne.s32.totalorder %s64, %s65
      %p77 = scmp.eq.s32.totalorder %s20, 1
      %p78 = por %p76, %p77
      %p80 = scmp.ne.s32.totalorder %s65, %s79
      %p81 = scmp.eq.s32.totalorder %s20, 0
      %p82 = por %p80, %p81
      %s84 = sadd.s32 %s83, 1
      %p87 = scmp.eq.s32.totalorder %s14, 1
      %p88 = scmp.ne.s32.totalorder %s83, %s85
      %p89 = scmp.eq.s32.totalorder %s14, 0
      %p90 = por %p88, %p89
      %p91 = scmp.ne.s32.totalorder %s83, %s85
      %p92 = scmp.eq.s32.totalorder %s19, 1
      %p93 = por %p91, %p92
      %p94 = scmp.ne.s32.totalorder %s85, %s86
      %p95 = scmp.eq.s32.totalorder %s19, 0
      %p96 = por %p94, %p95
      %p97 = scmp.ne.s32.totalorder %s85, %s86
      %p98 = scmp.eq.s32.totalorder %s20, 1
      %p99 = por %p97, %p98
      %p101 = scmp.ne.s32.totalorder %s86, %s100
      %p102 = scmp.eq.s32.totalorder %s20, 0
      %p103 = por %p101, %p102
      %s105 = sadd.s32 %s104, 1
      %p108 = scmp.eq.s32.totalorder %s14, 1
      %p109 = scmp.ne.s32.totalorder %s104, %s106
      %p110 = scmp.eq.s32.totalorder %s14, 0
      %p111 = por %p109, %p110
      %p112 = scmp.ne.s32.totalorder %s104, %s106
      %p113 = scmp.eq.s32.totalorder %s19, 1
      %p114 = por %p112, %p113
      %p115 = scmp.ne.s32.totalorder %s106, %s107
      %p116 = scmp.eq.s32.totalorder %s19, 0
      %p117 = por %p115, %p116
      %p118 = scmp.ne.s32.totalorder %s106, %s107
      %p119 = scmp.eq.s32.totalorder %s20, 1
      %p120 = por %p118, %p119
      %p122 = scmp.ne.s32.totalorder %s107, %s121
      %p123 = scmp.eq.s32.totalorder %s20, 0
      %p124 = por %p122, %p123
      %s126 = sadd.s32 %s125, 1
      %p129 = scmp.eq.s32.totalorder %s14, 1
      %p130 = scmp.ne.s32.totalorder %s125, %s127
      %p131 = scmp.eq.s32.totalorder %s14, 0
      %p132 = por %p130, %p131
      %p133 = scmp.ne.s32.totalorder %s125, %s127
      %p134 = scmp.eq.s32.totalorder %s19, 1
      %p135 = por %p133, %p134
      %p136 = scmp.ne.s32.totalorder %s127, %s128
      %p137 = scmp.eq.s32.totalorder %s19, 0
      %p138 = por %p136, %p137
      %p139 = scmp.ne.s32.totalorder %s127, %s128
      %p140 = scmp.eq.s32.totalorder %s20, 1
      %p141 = por %p139, %p140
      %p143 = scmp.ne.s32.totalorder %s128, %s142
      %p144 = scmp.eq.s32.totalorder %s20, 0
      %p145 = por %p143, %p144
      %s147 = sadd.s32 %s146, 1
      %p150 = scmp.eq.s32.totalorder %s14, 1
      %p151 = scmp.ne.s32.totalorder %s146, %s148
      %p152 = scmp.eq.s32.totalorder %s14, 0
      %p153 = por %p151, %p152
      %p154 = scmp.ne.s32.totalorder %s146, %s148
      %p155 = scmp.eq.s32.totalorder %s19, 1
      %p156 = por %p154, %p155
      %p157 = scmp.ne.s32.totalorder %s148, %s149
      %p158 = scmp.eq.s32.totalorder %s19, 0
      %p159 = por %p157, %p158
      %p160 = scmp.ne.s32.totalorder %s148, %s149
      %p161 = scmp.eq.s32.totalorder %s20, 1
      %p162 = por %p160, %p161
      %p164 = scmp.ne.s32.totalorder %s149, %s163
      %p165 = scmp.eq.s32.totalorder %s20, 0
      %p166 = por %p164, %p165
      %s168 = sadd.s32 %s167, 1
      %p171 = scmp.eq.s32.totalorder %s14, 1
      %p172 = scmp.ne.s32.totalorder %s167, %s169
      %p173 = scmp.eq.s32.totalorder %s14, 0
      %p174 = por %p172, %p173
      %p175 = scmp.ne.s32.totalorder %s167, %s169
      %p176 = scmp.eq.s32.totalorder %s19, 1
      %p177 = por %p175, %p176
      %p178 = scmp.ne.s32.totalorder %s169, %s170
      %p179 = scmp.eq.s32.totalorder %s19, 0
      %p180 = por %p178, %p179
      %p181 = scmp.ne.s32.totalorder %s169, %s170
      %p182 = scmp.eq.s32.totalorder %s20, 1
      %p183 = por %p181, %p182
      %p185 = scmp.ne.s32.totalorder %s170, %s184
      %p186 = scmp.eq.s32.totalorder %s20, 0
      %p187 = por %p185, %p186
      %s188 = ssub.s32 %s21, %s33
      %p189 = scmp.eq.s32.totalorder %s188, 0
      %s191 = sadd.s32 %s190, 1
      %s192 = scalar_select %p189, %s190, %s191
      %p195 = pneg %p189
      %p196 = scmp.eq.s32.totalorder %s14, 1
      %p197 = por %p195, %p196
      %p198 = scmp.ne.s32.totalorder %s190, %s193
      %p199 = scmp.eq.s32.totalorder %s14, 0
      %p200 = por %p198, %p199
      %p201 = scmp.ne.s32.totalorder %s190, %s193
      %p202 = scmp.eq.s32.totalorder %s19, 1
      %p203 = por %p201, %p202
      %p204 = scmp.ne.s32.totalorder %s193, %s194
      %p205 = scmp.eq.s32.totalorder %s19, 0
      %p206 = por %p204, %p205
      %p207 = scmp.ne.s32.totalorder %s193, %s194
      %p208 = scmp.eq.s32.totalorder %s20, 1
      %p209 = por %p207, %p208
      %p211 = scmp.ne.s32.totalorder %s194, %s210
      %p212 = scmp.eq.s32.totalorder %s20, 0
      %p213 = por %p211, %p212
      %p214 = scmp.le.s32.totalorder 1, %s14
      %p215 = scmp.lt.s32.totalorder %s14, 3
      %p216 = pnand %p214, %p215
      %p217 = pneg %p216
      // Predicated region
      $region9: #{_forward.1} parent=5 // pred_check
        _
      $region10: #{_forward.1} parent=5 // pred_check_branch
        %219 = sbr.rel (%p216) target = $region12
      $region11: #{_forward.1} parent=5 // pred_region
        %s220 = ssub.s32 %s14, 1
        // Predicated region
        $region13: #{_forward.1} parent=11 // pred_check
          %p221 = pneg %p75
        $region14: #{_forward.1} parent=11 // pred_check_branch
          %223 = sbr.rel (%p221) target = $region16
        $region15: #{_forward.1} parent=11 // pred_region
          _
        $region16: #{_forward.1} parent=11 // pred_fallthru
          _
        // Predicated region
        $region17: #{_forward.1} parent=11 // pred_check
          %p224 = pneg %p96
        $region18: #{_forward.1} parent=11 // pred_check_branch
          %226 = sbr.rel (%p224) target = $region20
        $region19: #{_forward.1} parent=11 // pred_region
          _
        $region20: #{_forward.1} parent=11 // pred_fallthru
          _
        // Predicated region
        $region21: #{_forward.1} parent=11 // pred_check
          %p227 = pneg %p117
        $region22: #{_forward.1} parent=11 // pred_check_branch
          %229 = sbr.rel (%p227) target = $region24
        $region23: #{_forward.1} parent=11 // pred_region
          _
        $region24: #{_forward.1} parent=11 // pred_fallthru
          _
        // Predicated region
        $region25: #{_forward.1} parent=11 // pred_check
          %p230 = pneg %p138
        $region26: #{_forward.1} parent=11 // pred_check_branch
          %232 = sbr.rel (%p230) target = $region28
        $region27: #{_forward.1} parent=11 // pred_region
          _
        $region28: #{_forward.1} parent=11 // pred_fallthru
          _
        // Predicated region
        $region29: #{_forward.1} parent=11 // pred_check
          %p233 = pneg %p159
        $region30: #{_forward.1} parent=11 // pred_check_branch
          %235 = sbr.rel (%p233) target = $region32
        $region31: #{_forward.1} parent=11 // pred_region
          _
        $region32: #{_forward.1} parent=11 // pred_fallthru
          _
        // Predicated region
        $region33: #{_forward.1} parent=11 // pred_check
          %p236 = pneg %p180
        $region34: #{_forward.1} parent=11 // pred_check_branch
          %238 = sbr.rel (%p236) target = $region36
        $region35: #{_forward.1} parent=11 // pred_region
          _
        $region36: #{_forward.1} parent=11 // pred_fallthru
          _
      $region12: #{_forward.1} parent=5 // pred_fallthru
        _
      %p239 = scmp.lt.s32.totalorder %s14, 2
      // Predicated region
      $region37: #{_forward.1} parent=5 // pred_check
        %p240 = pneg %p239
      $region38: #{_forward.1} parent=5 // pred_check_branch
        %242 = sbr.rel (%p240) target = $region40
      $region39: #{_forward.1} parent=5 // pred_region
        // Predicated region
        $region41: #{_forward.1} parent=39 // pred_check
          %p243 = pneg %p48
        $region42: #{_forward.1} parent=39 // pred_check_branch
          %245 = sbr.rel (%p243) target = $region44
        $region43: #{_forward.1} parent=39 // pred_region
          %s246 = smul.u32 4, %s22
          %p247 = scmp.lt.s32.totalorder %s246, 7
          %s248 = scalar_select %p247, %s246, 7
          %p249 = scmp.lt.s32.totalorder %s21, 0
          %s250 = scalar_select %p249, %s21, 0
          %s251 = sadd.s32 %s250, %s248
          %s252 = smul.addr %s251, 2
          %s253 = scalar_lea.vmem %s0, %s252
          %s254 = smul.u32 4, %s22
        $region44: #{_forward.1} parent=39 // pred_fallthru
          _
      $region40: #{_forward.1} parent=5 // pred_fallthru
        _
      %p255 = scmp.le.s32.totalorder 1, %s14
      %p256 = scmp.lt.s32.totalorder %s14, 3
      %p257 = pnand %p255, %p256
      %p258 = pneg %p257
      // Predicated region
      $region45: #{_forward.1} parent=5 // pred_check
        _
      $region46: #{_forward.1} parent=5 // pred_check_branch
        %260 = sbr.rel (%p257) target = $region48
      $region47: #{_forward.1} parent=5 // pred_region
        %s261 = ssub.s32 %s14, 1
        %s262 = smul.u32 4, %s24
        %p263 = scmp.lt.s32.totalorder %s262, 7
        %s264 = scalar_select %p263, %s262, 7
        %p265 = scmp.lt.s32.totalorder %s23, 0
        %s266 = scalar_select %p265, %s23, 0
        %s267 = sadd.s32 %s266, %s264
        %s268 = smul.addr %s267, 2
        %s269 = scalar_lea.vmem %s0, %s268
        %p270 = pneg %p54
        %p271 = pneg %p51
        %p272 = pneg %p75
        %p273 = pneg %p72
        %p274 = pneg %p96
        %p275 = pneg %p93
        %p276 = pneg %p117
        %p277 = pneg %p114
        %p278 = pneg %p138
        %p279 = pneg %p135
        %p280 = pneg %p159
        %p281 = pneg %p156
        %p282 = pneg %p180
        %p283 = pneg %p177
        %p284 = pneg %p206
        %p285 = pneg %p203
        %s286 = smul.u32 4, %s24
        %p287 = scmp.lt.s32.totalorder %s286, 7
        %s288 = scalar_select %p287, %s286, 7
        %p289 = scmp.lt.s32.totalorder %s23, 0
        %s290 = scalar_select %p289, %s23, 0
        %s291 = sadd.s32 %s290, %s288
        %s292 = smul.addr %s291, 2
        %s293 = scalar_lea.vmem %s0, %s292
        %s294 = smul.u32 4, %s24
        %p295 = scmp.eq.s32.totalorder %s24, 0
        // Predicated region
        $region49: #{_forward.1} parent=47 // pred_check
          %p296 = pneg %p295
        $region50: #{_forward.1} parent=47 // pred_check_branch
          %298 = sbr.rel (%p296) target = $region52
        $region51: #{_forward.1} parent=47 // pred_region
          %299 = vst [vmem:[#allocation2] sm:$0x3] 0.0
        $region52: #{_forward.1} parent=47 // pred_fallthru
          _
        %v300 = vld [vmem:[%s1] sm:$0xff]
        %v301 = vld [vmem:[%s1 + $0x8] sm:$0xf]
        %v302 = vld [vmem:[%s2] sm:$0xff]
        %v303 = vld [vmem:[%s2 + $0x8] sm:$0xff]
        %v304 = vld [vmem:[%s2 + $0x10] sm:$0xff]
        %v305 = vld [vmem:[%s2 + $0x18] sm:$0xff]
        %v306 = vld [vmem:[%s2 + $0x20] sm:$0xff]
        %v307 = vld [vmem:[%s2 + $0x28] sm:$0xff]
        %v308 = vld [vmem:[%s2 + $0x30] sm:$0xff]
        %v309 = vld [vmem:[%s2 + $0x38] sm:$0xff]
        %v310 = vld [vmem:[%s2 + $0x40] sm:$0xff]
        %v311 = vld [vmem:[%s2 + $0x48] sm:$0xff]
        %v312 = vld [vmem:[%s2 + $0x50] sm:$0xff]
        %v313 = vld [vmem:[%s2 + $0x58] sm:$0xff]
        %v314 = vld [vmem:[%s2 + $0x60] sm:$0xff]
        %v315 = vld [vmem:[%s2 + $0x68] sm:$0xff]
        %v316 = vld [vmem:[%s2 + $0x70] sm:$0xff]
        %v317 = vld [vmem:[%s2 + $0x78] sm:$0xff]
        %v318 = vld [vmem:[%s2 + $0x80] sm:$0xff]
        %v319 = vld [vmem:[%s2 + $0x88] sm:$0xff]
        %v320 = vld [vmem:[%s2 + $0x90] sm:$0xff]
        %v321 = vld [vmem:[%s2 + $0x98] sm:$0xff]
        %v322 = vld [vmem:[%s2 + $0xa0] sm:$0xff]
        %v323 = vld [vmem:[%s2 + $0xa8] sm:$0xff]
        %v324 = vld [vmem:[%s2 + $0xb0] sm:$0xff]
        %v325 = vld [vmem:[%s2 + $0xb8] sm:$0xff]
        %v326 = vld [vmem:[%s2 + $0xc0] sm:$0xff]
        %v327 = vld [vmem:[%s2 + $0xc8] sm:$0xff]
        %v328 = vld [vmem:[%s2 + $0xd0] sm:$0xff]
        %v329 = vld [vmem:[%s2 + $0xd8] sm:$0xff]
        %v330 = vld [vmem:[%s2 + $0xe0] sm:$0xff]
        %v331 = vld [vmem:[%s2 + $0xe8] sm:$0xff]
        %v332 = vld [vmem:[%s2 + $0xf0] sm:$0xff]
        %v333 = vld [vmem:[%s2 + $0xf8] sm:$0xff]
        %v334 = vld [vmem:[%s2 + $0x100] sm:$0xff]
        %v335 = vld [vmem:[%s2 + $0x108] sm:$0xff]
        %v336 = vld [vmem:[%s2 + $0x110] sm:$0xff]
        %v337 = vld [vmem:[%s2 + $0x118] sm:$0xff]
        %v338 = vld [vmem:[%s2 + $0x120] sm:$0xff]
        %v339 = vld [vmem:[%s2 + $0x128] sm:$0xff]
        %v340 = vld [vmem:[%s2 + $0x130] sm:$0xff]
        %v341 = vld [vmem:[%s2 + $0x138] sm:$0xff]
        %v342 = vld [vmem:[%s2 + $0x140] sm:$0xff]
        %v343 = vld [vmem:[%s2 + $0x148] sm:$0xff]
        %v344 = vld [vmem:[%s2 + $0x150] sm:$0xff]
        %v345 = vld [vmem:[%s2 + $0x158] sm:$0xff]
        %v346 = vld [vmem:[%s2 + $0x160] sm:$0xff]
        %v347 = vld [vmem:[%s2 + $0x168] sm:$0xff]
        %v348 = vld [vmem:[%s2 + $0x170] sm:$0xff]
        %v349 = vld [vmem:[%s2 + $0x178] sm:$0xff]
        %v350 = vld [vmem:[%s3] sm:$0x7]
        %v351 = vld [vmem:[%s4] sm:$0x1]
        %v352 = vld [vmem:[%s293] sm:$0x3]
        %v353 = vld [vmem:[%s293 + $0x2] sm:$0x3]
        %v354 = vld [vmem:[%s293 + $0x4] sm:$0x3]
        %v355 = vld [vmem:[%s293 + $0x6] sm:$0x3]
        %v357 = vlaneseq
        %v358 = vshrl.u32 %v357, 7
        %v359 = vsub.s32 0, %v358
        %v360 = vrot.slane %v350, %v359
        %v361 = vlaneseq
        %v362 = vshrl.u32 %v361, 7
        %v363 = vsub.s32 1, %v362
        %v364 = vrot.slane %v350, %v363
        %v365 = vlaneseq
        %v366 = vshrl.u32 %v365, 7
        %v367 = vsub.s32 2, %v366
        %v368 = vrot.slane %v350, %v367
        %v376 = vcombine.low %v352, %v353
        %v377 = vcombine.low %v354, %v355
        %v379 = vunpack.c.l.s4 1983009808
        %v380 = vunpack.c.0.s8 %v379
        %v381 = vlaneseq
        %v382 = vshrl.u32 %v381, 7
        %v383 = vsub.s32 %v380, %v382
        %v384 = vrot.slane %v376, %v383
        %v386 = vunpack.c.l.s4 1983009808
        %v387 = vunpack.c.0.s8 %v386
        %v388 = vlaneseq
        %v389 = vshrl.u32 %v388, 7
        %v390 = vsub.s32 %v387, %v389
        %v391 = vrot.slane %v377, %v390
        %v392 = vcombine.low %v384, %v391
        %v395 = vcombine.high %v300, %v300
        %vm396 = vcmask 31744
        %v397 = vsel %vm396, %v392, 0
        %vm399 = vcmask 1043456
        %v400 = vsel %vm399, %v300, 0
        %v402 = vsel %vm399, %v395, 0
        %v404 = vsel %vm399, %v301, 0
        %406 = vmatprep.subr.mxu0 0.0
        %407 = vmatpush1.msra.mxu0 0.0
        %408 = vmatprep.subr.mxu0 0.0
        %409 = vmatpush1.msra.mxu0 0.0
        %410 = vmatprep.subr.mxu0 0.0
        %411 = vmatpush1.msra.mxu0 0.0
        %412 = vmatprep.subr.mxu0 0.0
        %413 = vmatpush1.msra.mxu0 0.0
        %414 = vmatprep.subr.mxu0 0.0
        %415 = vmatpush1.msra.mxu0 0.0
        %416 = vmatprep.subr.mxu0 0.0
        %417 = vmatpush1.msra.mxu0 0.0
        %418 = vmatprep.subr.mxu0 0.0
        %419 = vmatpush1.msra.mxu0 0.0
        %420 = vmatprep.subr.mxu0 0.0
        %421 = vmatpush1.msra.mxu0 0.0
        %422 = vmatprep.subr.mxu0 0.0
        %423 = vmatpush1.msra.mxu0 0.0
        %424 = vmatprep.subr.mxu0 0.0
        %425 = vmatpush1.msra.mxu0 0.0
        %426 = vmatprep.subr.mxu0 0.0
        %427 = vmatpush1.msra.mxu0 0.0
        %428 = vmatprep.subr.mxu0 0.0
        %429 = vmatpush1.msra.mxu0 0.0
        %430 = vmatprep.subr.mxu0 0.0
        %431 = vmatpush1.msra.mxu0 0.0
        %432 = vmatprep.subr.mxu0 0.0
        %433 = vmatpush1.msra.mxu0 0.0
        %434 = vmatprep.subr.mxu0 0.0
        %435 = vmatpush1.msra.mxu0 0.0
        %436 = vmatprep.subr.mxu0 %v402
        %437 = vmatpush1.msra.mxu0 %v400
        %438 = vmatprep.subr.mxu0 0.0
        %439 = vmatpush2.msra.mxu0 0.0
        %440 = vmatprep.subr.mxu0 0.0
        %441 = vmatpush2.msra.mxu0 0.0
        %442 = vmatprep.subr.mxu0 0.0
        %443 = vmatpush2.msra.mxu0 0.0
        %444 = vmatprep.subr.mxu0 0.0
        %445 = vmatpush2.msra.mxu0 0.0
        %446 = vmatprep.subr.mxu0 0.0
        %447 = vmatpush2.msra.mxu0 0.0
        %448 = vmatprep.subr.mxu0 0.0
        %449 = vmatpush2.msra.mxu0 0.0
        %450 = vmatprep.subr.mxu0 0.0
        %451 = vmatpush2.msra.mxu0 0.0
        %452 = vmatprep.subr.mxu0 0.0
        %453 = vmatpush2.msra.mxu0 0.0
        %454 = vmatprep.subr.mxu0 0.0
        %455 = vmatpush2.msra.mxu0 0.0
        %456 = vmatprep.subr.mxu0 0.0
        %457 = vmatpush2.msra.mxu0 0.0
        %458 = vmatprep.subr.mxu0 0.0
        %459 = vmatpush2.msra.mxu0 0.0
        %460 = vmatprep.subr.mxu0 0.0
        %461 = vmatpush2.msra.mxu0 0.0
        %462 = vmatprep.subr.mxu0 0.0
        %463 = vmatpush2.msra.mxu0 0.0
        %464 = vmatprep.subr.mxu0 0.0
        %465 = vmatpush2.msra.mxu0 0.0
        %466 = vmatprep.subr.mxu0 0.0
        %467 = vmatpush2.msra.mxu0 0.0
        %468 = vmatprep.subr.mxu0 0.0
        %469 = vmatpush2.msra.mxu0 0.0
        %470 = vmatprep.mubr.f32.mxu0 0.0
        %471 = vmatmul.mubr.f32.gmra.mxu0 %v397
        %v472 = vpop.f32.mrf.mxu0
        %v473 = vadd.f32 %v360, %v472
        %v474 = vpop.f32.mrf.mxu0
        %v475 = vadd.f32 %v364, %v474
        %476 = vdwg.mxu0
        %477 = vmatprep.subr.mxu0 0.0
        %478 = vmatpush1.msra.mxu0 0.0
        %479 = vmatprep.subr.mxu0 0.0
        %480 = vmatpush1.msra.mxu0 0.0
        %481 = vmatprep.subr.mxu0 0.0
        %482 = vmatpush1.msra.mxu0 0.0
        %483 = vmatprep.subr.mxu0 0.0
        %484 = vmatpush1.msra.mxu0 0.0
        %485 = vmatprep.subr.mxu0 0.0
        %486 = vmatpush1.msra.mxu0 0.0
        %487 = vmatprep.subr.mxu0 0.0
        %488 = vmatpush1.msra.mxu0 0.0
        %489 = vmatprep.subr.mxu0 0.0
        %490 = vmatpush1.msra.mxu0 0.0
        %491 = vmatprep.subr.mxu0 0.0
        %492 = vmatpush1.msra.mxu0 0.0
        %493 = vmatprep.subr.mxu0 0.0
        %494 = vmatpush1.msra.mxu0 0.0
        %495 = vmatprep.subr.mxu0 0.0
        %496 = vmatpush1.msra.mxu0 0.0
        %497 = vmatprep.subr.mxu0 0.0
        %498 = vmatpush1.msra.mxu0 0.0
        %499 = vmatprep.subr.mxu0 0.0
        %500 = vmatpush1.msra.mxu0 0.0
        %501 = vmatprep.subr.mxu0 0.0
        %502 = vmatpush1.msra.mxu0 0.0
        %503 = vmatprep.subr.mxu0 0.0
        %504 = vmatpush1.msra.mxu0 0.0
        %505 = vmatprep.subr.mxu0 0.0
        %506 = vmatpush1.msra.mxu0 0.0
        %507 = vmatprep.subr.mxu0 0.0
        %508 = vmatpush1.msra.mxu0 %v404
        %509 = vmatprep.subr.mxu0 0.0
        %510 = vmatpush2.msra.mxu0 0.0
        %511 = vmatprep.subr.mxu0 0.0
        %512 = vmatpush2.msra.mxu0 0.0
        %513 = vmatprep.subr.mxu0 0.0
        %514 = vmatpush2.msra.mxu0 0.0
        %515 = vmatprep.subr.mxu0 0.0
        %516 = vmatpush2.msra.mxu0 0.0
        %517 = vmatprep.subr.mxu0 0.0
        %518 = vmatpush2.msra.mxu0 0.0
        %519 = vmatprep.subr.mxu0 0.0
        %520 = vmatpush2.msra.mxu0 0.0
        %521 = vmatprep.subr.mxu0 0.0
        %522 = vmatpush2.msra.mxu0 0.0
        %523 = vmatprep.subr.mxu0 0.0
        %524 = vmatpush2.msra.mxu0 0.0
        %525 = vmatprep.subr.mxu0 0.0
        %526 = vmatpush2.msra.mxu0 0.0
        %527 = vmatprep.subr.mxu0 0.0
        %528 = vmatpush2.msra.mxu0 0.0
        %529 = vmatprep.subr.mxu0 0.0
        %530 = vmatpush2.msra.mxu0 0.0
        %531 = vmatprep.subr.mxu0 0.0
        %532 = vmatpush2.msra.mxu0 0.0
        %533 = vmatprep.subr.mxu0 0.0
        %534 = vmatpush2.msra.mxu0 0.0
        %535 = vmatprep.subr.mxu0 0.0
        %536 = vmatpush2.msra.mxu0 0.0
        %537 = vmatprep.subr.mxu0 0.0
        %538 = vmatpush2.msra.mxu0 0.0
        %539 = vmatprep.subr.mxu0 0.0
        %540 = vmatpush2.msra.mxu0 0.0
        %541 = vmatprep.mubr.f32.mxu0 0.0
        %542 = vmatmul.mubr.f32.gmra.mxu0 %v397
        %v543 = vpop.f32.mrf.mxu0
        %v544 = vadd.f32 %v368, %v543
        %v545 = vpop.f32.mrf.mxu0
        %546 = vdwg.mxu0
        %v547 = vld [vmem:[#allocation2] sm:$0x3]
        %548 = vmatprep.subr.mxu0 %v348
        %549 = vmatpush1.msra.mxu0 %v347
        %550 = vmatprep.subr.mxu0 %v345
        %551 = vmatpush1.msra.mxu0 %v344
        %552 = vmatprep.subr.mxu0 %v342
        %553 = vmatpush1.msra.mxu0 %v341
        %554 = vmatprep.subr.mxu0 %v339
        %555 = vmatpush1.msra.mxu0 %v338
        %556 = vmatprep.subr.mxu0 %v336
        %557 = vmatpush1.msra.mxu0 %v335
        %558 = vmatprep.subr.mxu0 %v333
        %559 = vmatpush1.msra.mxu0 %v332
        %560 = vmatprep.subr.mxu0 %v330
        %561 = vmatpush1.msra.mxu0 %v329
        %562 = vmatprep.subr.mxu0 %v327
        %563 = vmatpush1.msra.mxu0 %v326
        %564 = vmatprep.subr.mxu0 %v324
        %565 = vmatpush1.msra.mxu0 %v323
        %566 = vmatprep.subr.mxu0 %v321
        %567 = vmatpush1.msra.mxu0 %v320
        %568 = vmatprep.subr.mxu0 %v318
        %569 = vmatpush1.msra.mxu0 %v317
        %570 = vmatprep.subr.mxu0 %v315
        %571 = vmatpush1.msra.mxu0 %v314
        %572 = vmatprep.subr.mxu0 %v312
        %573 = vmatpush1.msra.mxu0 %v311
        %574 = vmatprep.subr.mxu0 %v309
        %575 = vmatpush1.msra.mxu0 %v308
        %576 = vmatprep.subr.mxu0 %v306
        %577 = vmatpush1.msra.mxu0 %v305
        %578 = vmatprep.subr.mxu0 %v303
        %579 = vmatpush1.msra.mxu0 %v302
        %580 = vmatprep.subr.mxu0 0.0
        %581 = vmatpush2.msra.mxu0 0.0
        %582 = vmatprep.subr.mxu0 0.0
        %583 = vmatpush2.msra.mxu0 0.0
        %584 = vmatprep.subr.mxu0 0.0
        %585 = vmatpush2.msra.mxu0 0.0
        %586 = vmatprep.subr.mxu0 0.0
        %587 = vmatpush2.msra.mxu0 0.0
        %588 = vmatprep.subr.mxu0 0.0
        %589 = vmatpush2.msra.mxu0 0.0
        %590 = vmatprep.subr.mxu0 0.0
        %591 = vmatpush2.msra.mxu0 0.0
        %592 = vmatprep.subr.mxu0 0.0
        %593 = vmatpush2.msra.mxu0 0.0
        %594 = vmatprep.subr.mxu0 0.0
        %595 = vmatpush2.msra.mxu0 0.0
        %596 = vmatprep.subr.mxu0 0.0
        %597 = vmatpush2.msra.mxu0 0.0
        %598 = vmatprep.subr.mxu0 0.0
        %599 = vmatpush2.msra.mxu0 0.0
        %600 = vmatprep.subr.mxu0 0.0
        %601 = vmatpush2.msra.mxu0 0.0
        %602 = vmatprep.subr.mxu0 0.0
        %603 = vmatpush2.msra.mxu0 0.0
        %604 = vmatprep.subr.mxu0 0.0
        %605 = vmatpush2.msra.mxu0 0.0
        %606 = vmatprep.subr.mxu0 0.0
        %607 = vmatpush2.msra.mxu0 0.0
        %608 = vmatprep.subr.mxu0 0.0
        %609 = vmatpush2.msra.mxu0 0.0
        %610 = vmatprep.subr.mxu0 0.0
        %611 = vmatpush2.msra.mxu0 0.0
        %612 = vmatprep.mubr.f32.mxu0 0.0
        %613 = vmatmul.mubr.f32.gmra.mxu0 %v547
        %v614 = vpop.f32.mrf.mxu0
        %v615 = vadd.f32 0.0, %v614
        %v616 = vpop.f32.mrf.mxu0
        %v617 = vadd.f32 0.0, %v616
        %618 = vdwg.mxu0
        %619 = vmatprep.subr.mxu0 0.0
        %620 = vmatpush1.msra.mxu0 %v349
        %621 = vmatprep.subr.mxu0 0.0
        %622 = vmatpush1.msra.mxu0 %v346
        %623 = vmatprep.subr.mxu0 0.0
        %624 = vmatpush1.msra.mxu0 %v343
        %625 = vmatprep.subr.mxu0 0.0
        %626 = vmatpush1.msra.mxu0 %v340
        %627 = vmatprep.subr.mxu0 0.0
        %628 = vmatpush1.msra.mxu0 %v337
        %629 = vmatprep.subr.mxu0 0.0
        %630 = vmatpush1.msra.mxu0 %v334
        %631 = vmatprep.subr.mxu0 0.0
        %632 = vmatpush1.msra.mxu0 %v331
        %633 = vmatprep.subr.mxu0 0.0
        %634 = vmatpush1.msra.mxu0 %v328
        %635 = vmatprep.subr.mxu0 0.0
        %636 = vmatpush1.msra.mxu0 %v325
        %637 = vmatprep.subr.mxu0 0.0
        %638 = vmatpush1.msra.mxu0 %v322
        %639 = vmatprep.subr.mxu0 0.0
        %640 = vmatpush1.msra.mxu0 %v319
        %641 = vmatprep.subr.mxu0 0.0
        %642 = vmatpush1.msra.mxu0 %v316
        %643 = vmatprep.subr.mxu0 0.0
        %644 = vmatpush1.msra.mxu0 %v313
        %645 = vmatprep.subr.mxu0 0.0
        %646 = vmatpush1.msra.mxu0 %v310
        %647 = vmatprep.subr.mxu0 0.0
        %648 = vmatpush1.msra.mxu0 %v307
        %649 = vmatprep.subr.mxu0 0.0
        %650 = vmatpush1.msra.mxu0 %v304
        %651 = vmatprep.subr.mxu0 0.0
        %652 = vmatpush2.msra.mxu0 0.0
        %653 = vmatprep.subr.mxu0 0.0
        %654 = vmatpush2.msra.mxu0 0.0
        %655 = vmatprep.subr.mxu0 0.0
        %656 = vmatpush2.msra.mxu0 0.0
        %657 = vmatprep.subr.mxu0 0.0
        %658 = vmatpush2.msra.mxu0 0.0
        %659 = vmatprep.subr.mxu0 0.0
        %660 = vmatpush2.msra.mxu0 0.0
        %661 = vmatprep.subr.mxu0 0.0
        %662 = vmatpush2.msra.mxu0 0.0
        %663 = vmatprep.subr.mxu0 0.0
        %664 = vmatpush2.msra.mxu0 0.0
        %665 = vmatprep.subr.mxu0 0.0
        %666 = vmatpush2.msra.mxu0 0.0
        %667 = vmatprep.subr.mxu0 0.0
        %668 = vmatpush2.msra.mxu0 0.0
        %669 = vmatprep.subr.mxu0 0.0
        %670 = vmatpush2.msra.mxu0 0.0
        %671 = vmatprep.subr.mxu0 0.0
        %672 = vmatpush2.msra.mxu0 0.0
        %673 = vmatprep.subr.mxu0 0.0
        %674 = vmatpush2.msra.mxu0 0.0
        %675 = vmatprep.subr.mxu0 0.0
        %676 = vmatpush2.msra.mxu0 0.0
        %677 = vmatprep.subr.mxu0 0.0
        %678 = vmatpush2.msra.mxu0 0.0
        %679 = vmatprep.subr.mxu0 0.0
        %680 = vmatpush2.msra.mxu0 0.0
        %681 = vmatprep.subr.mxu0 0.0
        %682 = vmatpush2.msra.mxu0 0.0
        %683 = vmatprep.mubr.f32.mxu0 0.0
        %684 = vmatmul.mubr.f32.gmra.mxu0 %v547
        %v685 = vpop.f32.mrf.mxu0
        %v686 = vadd.f32 0.0, %v685
        %v687 = vpop.f32.mrf.mxu0
        %688 = vdwg.mxu0
        %v689 = vadd.f32 %v473, %v615
        %v690 = vadd.f32 %v475, %v617
        %v691 = vxor.u32 %v689, 2147483648
        %v692 = vxor.u32 %v690, 2147483648
        %v693 = vmul.f32 %v691, 1.442695
        %v694 = vpow.pop %v693
        %v695 = vmul.f32 %v692, 1.442695
        %v696 = vpow.pop %v695
        %v697 = vadd.f32 %v694, 1.0
        %v698 = vadd.f32 %v696, 1.0
        %v699 = vrcp.pop %v697
        %v700 = vmul.f32 1.0, %v699
        %v701 = vrcp.pop %v698
        %v702 = vmul.f32 1.0, %v701
        %v704 = vlaneseq
        %v705 = vshrl.u32 %v704, 7
        %v706 = vsub.s32 0, %v705
        %v707 = vrot.slane %v351, %v706
        %v709 = vadd.f32 %v686, %v707
        %v710 = vmul.f32 %v700, %v709
        %v711 = vadd.f32 %v544, %v710
        %v712 = vtanh.pop %v711
        %v713 = vsub.f32 %v547, %v712
        %v714 = vmul.f32 %v702, %v713
        %v715 = vadd.f32 %v712, %v714
        %716 = vmatprep.subr.mxu0 %v348
        %717 = vmatpush1.msra.mxu0 %v347
        %718 = vmatprep.subr.mxu0 %v345
        %719 = vmatpush1.msra.mxu0 %v344
        %720 = vmatprep.subr.mxu0 %v342
        %721 = vmatpush1.msra.mxu0 %v341
        %722 = vmatprep.subr.mxu0 %v339
        %723 = vmatpush1.msra.mxu0 %v338
        %724 = vmatprep.subr.mxu0 %v336
        %725 = vmatpush1.msra.mxu0 %v335
        %726 = vmatprep.subr.mxu0 %v333
        %727 = vmatpush1.msra.mxu0 %v332
        %728 = vmatprep.subr.mxu0 %v330
        %729 = vmatpush1.msra.mxu0 %v329
        %730 = vmatprep.subr.mxu0 %v327
        %731 = vmatpush1.msra.mxu0 %v326
        %732 = vmatprep.subr.mxu0 %v324
        %733 = vmatpush1.msra.mxu0 %v323
        %734 = vmatprep.subr.mxu0 %v321
        %735 = vmatpush1.msra.mxu0 %v320
        %736 = vmatprep.subr.mxu0 %v318
        %737 = vmatpush1.msra.mxu0 %v317
        %738 = vmatprep.subr.mxu0 %v315
        %739 = vmatpush1.msra.mxu0 %v314
        %740 = vmatprep.subr.mxu0 %v312
        %741 = vmatpush1.msra.mxu0 %v311
        %742 = vmatprep.subr.mxu0 %v309
        %743 = vmatpush1.msra.mxu0 %v308
        %744 = vmatprep.subr.mxu0 %v306
        %745 = vmatpush1.msra.mxu0 %v305
        %746 = vmatprep.subr.mxu0 %v303
        %747 = vmatpush1.msra.mxu0 %v302
        %748 = vmatprep.subr.mxu0 0.0
        %749 = vmatpush2.msra.mxu0 0.0
        %750 = vmatprep.subr.mxu0 0.0
        %751 = vmatpush2.msra.mxu0 0.0
        %752 = vmatprep.subr.mxu0 0.0
        %753 = vmatpush2.msra.mxu0 0.0
        %754 = vmatprep.subr.mxu0 0.0
        %755 = vmatpush2.msra.mxu0 0.0
        %756 = vmatprep.subr.mxu0 0.0
        %757 = vmatpush2.msra.mxu0 0.0
        %758 = vmatprep.subr.mxu0 0.0
        %759 = vmatpush2.msra.mxu0 0.0
        %760 = vmatprep.subr.mxu0 0.0
        %761 = vmatpush2.msra.mxu0 0.0
        %762 = vmatprep.subr.mxu0 0.0
        %763 = vmatpush2.msra.mxu0 0.0
        %764 = vmatprep.subr.mxu0 0.0
        %765 = vmatpush2.msra.mxu0 0.0
        %766 = vmatprep.subr.mxu0 0.0
        %767 = vmatpush2.msra.mxu0 0.0
        %768 = vmatprep.subr.mxu0 0.0
        %769 = vmatpush2.msra.mxu0 0.0
        %770 = vmatprep.subr.mxu0 0.0
        %771 = vmatpush2.msra.mxu0 0.0
        %772 = vmatprep.subr.mxu0 0.0
        %773 = vmatpush2.msra.mxu0 0.0
        %774 = vmatprep.subr.mxu0 0.0
        %775 = vmatpush2.msra.mxu0 0.0
        %776 = vmatprep.subr.mxu0 0.0
        %777 = vmatpush2.msra.mxu0 0.0
        %778 = vmatprep.subr.mxu0 0.0
        %779 = vmatpush2.msra.mxu0 0.0
        %780 = vmatprep.mubr.f32.mxu0 0.0
        %781 = vmatmul.mubr.f32.gmra.mxu0 %v715
        %v782 = vpop.f32.mrf.mxu0
        %v783 = vadd.f32 0.0, %v782
        %v784 = vpop.f32.mrf.mxu0
        %v785 = vadd.f32 0.0, %v784
        %786 = vdwg.mxu0
        %787 = vmatprep.subr.mxu0 0.0
        %788 = vmatpush1.msra.mxu0 %v349
        %789 = vmatprep.subr.mxu0 0.0
        %790 = vmatpush1.msra.mxu0 %v346
        %791 = vmatprep.subr.mxu0 0.0
        %792 = vmatpush1.msra.mxu0 %v343
        %793 = vmatprep.subr.mxu0 0.0
        %794 = vmatpush1.msra.mxu0 %v340
        %795 = vmatprep.subr.mxu0 0.0
        %796 = vmatpush1.msra.mxu0 %v337
        %797 = vmatprep.subr.mxu0 0.0
        %798 = vmatpush1.msra.mxu0 %v334
        %799 = vmatprep.subr.mxu0 0.0
        %800 = vmatpush1.msra.mxu0 %v331
        %801 = vmatprep.subr.mxu0 0.0
        %802 = vmatpush1.msra.mxu0 %v328
        %803 = vmatprep.subr.mxu0 0.0
        %804 = vmatpush1.msra.mxu0 %v325
        %805 = vmatprep.subr.mxu0 0.0
        %806 = vmatpush1.msra.mxu0 %v322
        %807 = vmatprep.subr.mxu0 0.0
        %808 = vmatpush1.msra.mxu0 %v319
        %809 = vmatprep.subr.mxu0 0.0
        %810 = vmatpush1.msra.mxu0 %v316
        %811 = vmatprep.subr.mxu0 0.0
        %812 = vmatpush1.msra.mxu0 %v313
        %813 = vmatprep.subr.mxu0 0.0
        %814 = vmatpush1.msra.mxu0 %v310
        %815 = vmatprep.subr.mxu0 0.0
        %816 = vmatpush1.msra.mxu0 %v307
        %817 = vmatprep.subr.mxu0 0.0
        %818 = vmatpush1.msra.mxu0 %v304
        %819 = vmatprep.subr.mxu0 0.0
        %820 = vmatpush2.msra.mxu0 0.0
        %821 = vmatprep.subr.mxu0 0.0
        %822 = vmatpush2.msra.mxu0 0.0
        %823 = vmatprep.subr.mxu0 0.0
        %824 = vmatpush2.msra.mxu0 0.0
        %825 = vmatprep.subr.mxu0 0.0
        %826 = vmatpush2.msra.mxu0 0.0
        %827 = vmatprep.subr.mxu0 0.0
        %828 = vmatpush2.msra.mxu0 0.0
        %829 = vmatprep.subr.mxu0 0.0
        %830 = vmatpush2.msra.mxu0 0.0
        %831 = vmatprep.subr.mxu0 0.0
        %832 = vmatpush2.msra.mxu0 0.0
        %833 = vmatprep.subr.mxu0 0.0
        %834 = vmatpush2.msra.mxu0 0.0
        %835 = vmatprep.subr.mxu0 0.0
        %836 = vmatpush2.msra.mxu0 0.0
        %837 = vmatprep.subr.mxu0 0.0
        %838 = vmatpush2.msra.mxu0 0.0
        %839 = vmatprep.subr.mxu0 0.0
        %840 = vmatpush2.msra.mxu0 0.0
        %841 = vmatprep.subr.mxu0 0.0
        %842 = vmatpush2.msra.mxu0 0.0
        %843 = vmatprep.subr.mxu0 0.0
        %844 = vmatpush2.msra.mxu0 0.0
        %845 = vmatprep.subr.mxu0 0.0
        %846 = vmatpush2.msra.mxu0 0.0
        %847 = vmatprep.subr.mxu0 0.0
        %848 = vmatpush2.msra.mxu0 0.0
        %849 = vmatprep.subr.mxu0 0.0
        %850 = vmatpush2.msra.mxu0 0.0
        %851 = vmatprep.mubr.f32.mxu0 0.0
        %852 = vmatmul.mubr.f32.gmra.mxu0 %v715
        %v853 = vpop.f32.mrf.mxu0
        %v854 = vadd.f32 0.0, %v853
        %v855 = vpop.f32.mrf.mxu0
        %856 = vdwg.mxu0
        %v859 = vrot.slane %v783, 6
        %v860 = vrot.slane %v785, 6
        %v863 = vadd.f32 %v473, %v859
        %v864 = vadd.f32 %v475, %v860
        %v865 = vxor.u32 %v863, 2147483648
        %v866 = vxor.u32 %v864, 2147483648
        %v867 = vmul.f32 %v865, 1.442695
        %v868 = vpow.pop %v867
        %v869 = vmul.f32 %v866, 1.442695
        %v870 = vpow.pop %v869
        %v871 = vadd.f32 %v868, 1.0
        %v872 = vadd.f32 %v870, 1.0
        %v873 = vrcp.pop %v871
        %v874 = vmul.f32 1.0, %v873
        %v875 = vrcp.pop %v872
        %v876 = vmul.f32 1.0, %v875
        %v877 = vadd.f32 %v854, %v707
        %v879 = vrot.slane %v877, 6
        %v881 = vmul.f32 %v874, %v879
        %v882 = vadd.f32 %v544, %v881
        %v883 = vtanh.pop %v882
        %v885 = vrot.slane %v883, 2
        %v887 = vsub.f32 %v715, %v885
        %v889 = vrot.slane %v887, 6
        %v891 = vmul.f32 %v876, %v889
        %v892 = vadd.f32 %v883, %v891
        %v894 = vrot.slane %v892, 2
        %896 = vmatprep.subr.mxu0 %v348
        %897 = vmatpush1.msra.mxu0 %v347
        %898 = vmatprep.subr.mxu0 %v345
        %899 = vmatpush1.msra.mxu0 %v344
        %900 = vmatprep.subr.mxu0 %v342
        %901 = vmatpush1.msra.mxu0 %v341
        %902 = vmatprep.subr.mxu0 %v339
        %903 = vmatpush1.msra.mxu0 %v338
        %904 = vmatprep.subr.mxu0 %v336
        %905 = vmatpush1.msra.mxu0 %v335
        %906 = vmatprep.subr.mxu0 %v333
        %907 = vmatpush1.msra.mxu0 %v332
        %908 = vmatprep.subr.mxu0 %v330
        %909 = vmatpush1.msra.mxu0 %v329
        %910 = vmatprep.subr.mxu0 %v327
        %911 = vmatpush1.msra.mxu0 %v326
        %912 = vmatprep.subr.mxu0 %v324
        %913 = vmatpush1.msra.mxu0 %v323
        %914 = vmatprep.subr.mxu0 %v321
        %915 = vmatpush1.msra.mxu0 %v320
        %916 = vmatprep.subr.mxu0 %v318
        %917 = vmatpush1.msra.mxu0 %v317
        %918 = vmatprep.subr.mxu0 %v315
        %919 = vmatpush1.msra.mxu0 %v314
        %920 = vmatprep.subr.mxu0 %v312
        %921 = vmatpush1.msra.mxu0 %v311
        %922 = vmatprep.subr.mxu0 %v309
        %923 = vmatpush1.msra.mxu0 %v308
        %924 = vmatprep.subr.mxu0 %v306
        %925 = vmatpush1.msra.mxu0 %v305
        %926 = vmatprep.subr.mxu0 %v303
        %927 = vmatpush1.msra.mxu0 %v302
        %928 = vmatprep.subr.mxu0 0.0
        %929 = vmatpush2.msra.mxu0 0.0
        %930 = vmatprep.subr.mxu0 0.0
        %931 = vmatpush2.msra.mxu0 0.0
        %932 = vmatprep.subr.mxu0 0.0
        %933 = vmatpush2.msra.mxu0 0.0
        %934 = vmatprep.subr.mxu0 0.0
        %935 = vmatpush2.msra.mxu0 0.0
        %936 = vmatprep.subr.mxu0 0.0
        %937 = vmatpush2.msra.mxu0 0.0
        %938 = vmatprep.subr.mxu0 0.0
        %939 = vmatpush2.msra.mxu0 0.0
        %940 = vmatprep.subr.mxu0 0.0
        %941 = vmatpush2.msra.mxu0 0.0
        %942 = vmatprep.subr.mxu0 0.0
        %943 = vmatpush2.msra.mxu0 0.0
        %944 = vmatprep.subr.mxu0 0.0
        %945 = vmatpush2.msra.mxu0 0.0
        %946 = vmatprep.subr.mxu0 0.0
        %947 = vmatpush2.msra.mxu0 0.0
        %948 = vmatprep.subr.mxu0 0.0
        %949 = vmatpush2.msra.mxu0 0.0
        %950 = vmatprep.subr.mxu0 0.0
        %951 = vmatpush2.msra.mxu0 0.0
        %952 = vmatprep.subr.mxu0 0.0
        %953 = vmatpush2.msra.mxu0 0.0
        %954 = vmatprep.subr.mxu0 0.0
        %955 = vmatpush2.msra.mxu0 0.0
        %956 = vmatprep.subr.mxu0 0.0
        %957 = vmatpush2.msra.mxu0 0.0
        %958 = vmatprep.subr.mxu0 0.0
        %959 = vmatpush2.msra.mxu0 0.0
        %960 = vmatprep.mubr.f32.mxu0 0.0
        %961 = vmatmul.mubr.f32.gmra.mxu0 %v894
        %v962 = vpop.f32.mrf.mxu0
        %v963 = vadd.f32 0.0, %v962
        %v964 = vpop.f32.mrf.mxu0
        %v965 = vadd.f32 0.0, %v964
        %966 = vdwg.mxu0
        %967 = vmatprep.subr.mxu0 0.0
        %968 = vmatpush1.msra.mxu0 %v349
        %969 = vmatprep.subr.mxu0 0.0
        %970 = vmatpush1.msra.mxu0 %v346
        %971 = vmatprep.subr.mxu0 0.0
        %972 = vmatpush1.msra.mxu0 %v343
        %973 = vmatprep.subr.mxu0 0.0
        %974 = vmatpush1.msra.mxu0 %v340
        %975 = vmatprep.subr.mxu0 0.0
        %976 = vmatpush1.msra.mxu0 %v337
        %977 = vmatprep.subr.mxu0 0.0
        %978 = vmatpush1.msra.mxu0 %v334
        %979 = vmatprep.subr.mxu0 0.0
        %980 = vmatpush1.msra.mxu0 %v331
        %981 = vmatprep.subr.mxu0 0.0
        %982 = vmatpush1.msra.mxu0 %v328
        %983 = vmatprep.subr.mxu0 0.0
        %984 = vmatpush1.msra.mxu0 %v325
        %985 = vmatprep.subr.mxu0 0.0
        %986 = vmatpush1.msra.mxu0 %v322
        %987 = vmatprep.subr.mxu0 0.0
        %988 = vmatpush1.msra.mxu0 %v319
        %989 = vmatprep.subr.mxu0 0.0
        %990 = vmatpush1.msra.mxu0 %v316
        %991 = vmatprep.subr.mxu0 0.0
        %992 = vmatpush1.msra.mxu0 %v313
        %993 = vmatprep.subr.mxu0 0.0
        %994 = vmatpush1.msra.mxu0 %v310
        %995 = vmatprep.subr.mxu0 0.0
        %996 = vmatpush1.msra.mxu0 %v307
        %997 = vmatprep.subr.mxu0 0.0
        %998 = vmatpush1.msra.mxu0 %v304
        %999 = vmatprep.subr.mxu0 0.0
        %1000 = vmatpush2.msra.mxu0 0.0
        %1001 = vmatprep.subr.mxu0 0.0
        %1002 = vmatpush2.msra.mxu0 0.0
        %1003 = vmatprep.subr.mxu0 0.0
        %1004 = vmatpush2.msra.mxu0 0.0
        %1005 = vmatprep.subr.mxu0 0.0
        %1006 = vmatpush2.msra.mxu0 0.0
        %1007 = vmatprep.subr.mxu0 0.0
        %1008 = vmatpush2.msra.mxu0 0.0
        %1009 = vmatprep.subr.mxu0 0.0
        %1010 = vmatpush2.msra.mxu0 0.0
        %1011 = vmatprep.subr.mxu0 0.0
        %1012 = vmatpush2.msra.mxu0 0.0
        %1013 = vmatprep.subr.mxu0 0.0
        %1014 = vmatpush2.msra.mxu0 0.0
        %1015 = vmatprep.subr.mxu0 0.0
        %1016 = vmatpush2.msra.mxu0 0.0
        %1017 = vmatprep.subr.mxu0 0.0
        %1018 = vmatpush2.msra.mxu0 0.0
        %1019 = vmatprep.subr.mxu0 0.0
        %1020 = vmatpush2.msra.mxu0 0.0
        %1021 = vmatprep.subr.mxu0 0.0
        %1022 = vmatpush2.msra.mxu0 0.0
        %1023 = vmatprep.subr.mxu0 0.0
        %1024 = vmatpush2.msra.mxu0 0.0
        %1025 = vmatprep.subr.mxu0 0.0
        %1026 = vmatpush2.msra.mxu0 0.0
        %1027 = vmatprep.subr.mxu0 0.0
        %1028 = vmatpush2.msra.mxu0 0.0
        %1029 = vmatprep.subr.mxu0 0.0
        %1030 = vmatpush2.msra.mxu0 0.0
        %1031 = vmatprep.mubr.f32.mxu0 0.0
        %1032 = vmatmul.mubr.f32.gmra.mxu0 %v894
        %v1033 = vpop.f32.mrf.mxu0
        %v1034 = vadd.f32 0.0, %v1033
        %v1035 = vpop.f32.mrf.mxu0
        %1036 = vdwg.mxu0
        %v1039 = vrot.slane %v963, 4
        %v1040 = vrot.slane %v965, 4
        %v1043 = vadd.f32 %v473, %v1039
        %v1044 = vadd.f32 %v475, %v1040
        %v1045 = vxor.u32 %v1043, 2147483648
        %v1046 = vxor.u32 %v1044, 2147483648
        %v1047 = vmul.f32 %v1045, 1.442695
        %v1048 = vpow.pop %v1047
        %v1049 = vmul.f32 %v1046, 1.442695
        %v1050 = vpow.pop %v1049
        %v1051 = vadd.f32 %v1048, 1.0
        %v1052 = vadd.f32 %v1050, 1.0
        %v1053 = vrcp.pop %v1051
        %v1054 = vmul.f32 1.0, %v1053
        %v1055 = vrcp.pop %v1052
        %v1056 = vmul.f32 1.0, %v1055
        %v1057 = vadd.f32 %v1034, %v707
        %v1059 = vrot.slane %v1057, 4
        %v1061 = vmul.f32 %v1054, %v1059
        %v1062 = vadd.f32 %v544, %v1061
        %v1063 = vtanh.pop %v1062
        %v1065 = vrot.slane %v1063, 2
        %v1067 = vsub.f32 %v892, %v1065
        %v1069 = vrot.slane %v1067, 6
        %v1071 = vmul.f32 %v1056, %v1069
        %v1072 = vadd.f32 %v1063, %v1071
        %v1074 = vrot.slane %v1072, 4
        %1076 = vmatprep.subr.mxu0 %v348
        %1077 = vmatpush1.msra.mxu0 %v347
        %1078 = vmatprep.subr.mxu0 %v345
        %1079 = vmatpush1.msra.mxu0 %v344
        %1080 = vmatprep.subr.mxu0 %v342
        %1081 = vmatpush1.msra.mxu0 %v341
        %1082 = vmatprep.subr.mxu0 %v339
        %1083 = vmatpush1.msra.mxu0 %v338
        %1084 = vmatprep.subr.mxu0 %v336
        %1085 = vmatpush1.msra.mxu0 %v335
        %1086 = vmatprep.subr.mxu0 %v333
        %1087 = vmatpush1.msra.mxu0 %v332
        %1088 = vmatprep.subr.mxu0 %v330
        %1089 = vmatpush1.msra.mxu0 %v329
        %1090 = vmatprep.subr.mxu0 %v327
        %1091 = vmatpush1.msra.mxu0 %v326
        %1092 = vmatprep.subr.mxu0 %v324
        %1093 = vmatpush1.msra.mxu0 %v323
        %1094 = vmatprep.subr.mxu0 %v321
        %1095 = vmatpush1.msra.mxu0 %v320
        %1096 = vmatprep.subr.mxu0 %v318
        %1097 = vmatpush1.msra.mxu0 %v317
        %1098 = vmatprep.subr.mxu0 %v315
        %1099 = vmatpush1.msra.mxu0 %v314
        %1100 = vmatprep.subr.mxu0 %v312
        %1101 = vmatpush1.msra.mxu0 %v311
        %1102 = vmatprep.subr.mxu0 %v309
        %1103 = vmatpush1.msra.mxu0 %v308
        %1104 = vmatprep.subr.mxu0 %v306
        %1105 = vmatpush1.msra.mxu0 %v305
        %1106 = vmatprep.subr.mxu0 %v303
        %1107 = vmatpush1.msra.mxu0 %v302
        %1108 = vmatprep.subr.mxu0 0.0
        %1109 = vmatpush2.msra.mxu0 0.0
        %1110 = vmatprep.subr.mxu0 0.0
        %1111 = vmatpush2.msra.mxu0 0.0
        %1112 = vmatprep.subr.mxu0 0.0
        %1113 = vmatpush2.msra.mxu0 0.0
        %1114 = vmatprep.subr.mxu0 0.0
        %1115 = vmatpush2.msra.mxu0 0.0
        %1116 = vmatprep.subr.mxu0 0.0
        %1117 = vmatpush2.msra.mxu0 0.0
        %1118 = vmatprep.subr.mxu0 0.0
        %1119 = vmatpush2.msra.mxu0 0.0
        %1120 = vmatprep.subr.mxu0 0.0
        %1121 = vmatpush2.msra.mxu0 0.0
        %1122 = vmatprep.subr.mxu0 0.0
        %1123 = vmatpush2.msra.mxu0 0.0
        %1124 = vmatprep.subr.mxu0 0.0
        %1125 = vmatpush2.msra.mxu0 0.0
        %1126 = vmatprep.subr.mxu0 0.0
        %1127 = vmatpush2.msra.mxu0 0.0
        %1128 = vmatprep.subr.mxu0 0.0
        %1129 = vmatpush2.msra.mxu0 0.0
        %1130 = vmatprep.subr.mxu0 0.0
        %1131 = vmatpush2.msra.mxu0 0.0
        %1132 = vmatprep.subr.mxu0 0.0
        %1133 = vmatpush2.msra.mxu0 0.0
        %1134 = vmatprep.subr.mxu0 0.0
        %1135 = vmatpush2.msra.mxu0 0.0
        %1136 = vmatprep.subr.mxu0 0.0
        %1137 = vmatpush2.msra.mxu0 0.0
        %1138 = vmatprep.subr.mxu0 0.0
        %1139 = vmatpush2.msra.mxu0 0.0
        %1140 = vmatprep.mubr.f32.mxu0 0.0
        %1141 = vmatmul.mubr.f32.gmra.mxu0 %v1074
        %v1142 = vpop.f32.mrf.mxu0
        %v1143 = vadd.f32 0.0, %v1142
        %v1144 = vpop.f32.mrf.mxu0
        %v1145 = vadd.f32 0.0, %v1144
        %1146 = vdwg.mxu0
        %1147 = vmatprep.subr.mxu0 0.0
        %1148 = vmatpush1.msra.mxu0 %v349
        %1149 = vmatprep.subr.mxu0 0.0
        %1150 = vmatpush1.msra.mxu0 %v346
        %1151 = vmatprep.subr.mxu0 0.0
        %1152 = vmatpush1.msra.mxu0 %v343
        %1153 = vmatprep.subr.mxu0 0.0
        %1154 = vmatpush1.msra.mxu0 %v340
        %1155 = vmatprep.subr.mxu0 0.0
        %1156 = vmatpush1.msra.mxu0 %v337
        %1157 = vmatprep.subr.mxu0 0.0
        %1158 = vmatpush1.msra.mxu0 %v334
        %1159 = vmatprep.subr.mxu0 0.0
        %1160 = vmatpush1.msra.mxu0 %v331
        %1161 = vmatprep.subr.mxu0 0.0
        %1162 = vmatpush1.msra.mxu0 %v328
        %1163 = vmatprep.subr.mxu0 0.0
        %1164 = vmatpush1.msra.mxu0 %v325
        %1165 = vmatprep.subr.mxu0 0.0
        %1166 = vmatpush1.msra.mxu0 %v322
        %1167 = vmatprep.subr.mxu0 0.0
        %1168 = vmatpush1.msra.mxu0 %v319
        %1169 = vmatprep.subr.mxu0 0.0
        %1170 = vmatpush1.msra.mxu0 %v316
        %1171 = vmatprep.subr.mxu0 0.0
        %1172 = vmatpush1.msra.mxu0 %v313
        %1173 = vmatprep.subr.mxu0 0.0
        %1174 = vmatpush1.msra.mxu0 %v310
        %1175 = vmatprep.subr.mxu0 0.0
        %1176 = vmatpush1.msra.mxu0 %v307
        %1177 = vmatprep.subr.mxu0 0.0
        %1178 = vmatpush1.msra.mxu0 %v304
        %1179 = vmatprep.subr.mxu0 0.0
        %1180 = vmatpush2.msra.mxu0 0.0
        %1181 = vmatprep.subr.mxu0 0.0
        %1182 = vmatpush2.msra.mxu0 0.0
        %1183 = vmatprep.subr.mxu0 0.0
        %1184 = vmatpush2.msra.mxu0 0.0
        %1185 = vmatprep.subr.mxu0 0.0
        %1186 = vmatpush2.msra.mxu0 0.0
        %1187 = vmatprep.subr.mxu0 0.0
        %1188 = vmatpush2.msra.mxu0 0.0
        %1189 = vmatprep.subr.mxu0 0.0
        %1190 = vmatpush2.msra.mxu0 0.0
        %1191 = vmatprep.subr.mxu0 0.0
        %1192 = vmatpush2.msra.mxu0 0.0
        %1193 = vmatprep.subr.mxu0 0.0
        %1194 = vmatpush2.msra.mxu0 0.0
        %1195 = vmatprep.subr.mxu0 0.0
        %1196 = vmatpush2.msra.mxu0 0.0
        %1197 = vmatprep.subr.mxu0 0.0
        %1198 = vmatpush2.msra.mxu0 0.0
        %1199 = vmatprep.subr.mxu0 0.0
        %1200 = vmatpush2.msra.mxu0 0.0
        %1201 = vmatprep.subr.mxu0 0.0
        %1202 = vmatpush2.msra.mxu0 0.0
        %1203 = vmatprep.subr.mxu0 0.0
        %1204 = vmatpush2.msra.mxu0 0.0
        %1205 = vmatprep.subr.mxu0 0.0
        %1206 = vmatpush2.msra.mxu0 0.0
        %1207 = vmatprep.subr.mxu0 0.0
        %1208 = vmatpush2.msra.mxu0 0.0
        %1209 = vmatprep.subr.mxu0 0.0
        %1210 = vmatpush2.msra.mxu0 0.0
        %1211 = vmatprep.mubr.f32.mxu0 0.0
        %1212 = vmatmul.mubr.f32.gmra.mxu0 %v1074
        %v1213 = vpop.f32.mrf.mxu0
        %v1214 = vadd.f32 0.0, %v1213
        %v1215 = vpop.f32.mrf.mxu0
        %1216 = vdwg.mxu0
        %v1219 = vrot.slane %v1143, 2
        %v1220 = vrot.slane %v1145, 2
        %v1223 = vadd.f32 %v473, %v1219
        %v1224 = vadd.f32 %v475, %v1220
        %v1225 = vxor.u32 %v1223, 2147483648
        %v1226 = vxor.u32 %v1224, 2147483648
        %v1227 = vmul.f32 %v1225, 1.442695
        %v1228 = vpow.pop %v1227
        %v1229 = vmul.f32 %v1226, 1.442695
        %v1230 = vpow.pop %v1229
        %v1231 = vadd.f32 %v1228, 1.0
        %v1232 = vadd.f32 %v1230, 1.0
        %v1233 = vrcp.pop %v1231
        %v1234 = vmul.f32 1.0, %v1233
        %v1235 = vrcp.pop %v1232
        %v1236 = vmul.f32 1.0, %v1235
        %v1237 = vadd.f32 %v1214, %v707
        %v1239 = vrot.slane %v1237, 2
        %v1241 = vmul.f32 %v1234, %v1239
        %v1242 = vadd.f32 %v544, %v1241
        %v1243 = vtanh.pop %v1242
        %v1245 = vrot.slane %v1243, 2
        %v1247 = vsub.f32 %v1072, %v1245
        %v1249 = vrot.slane %v1247, 6
        %v1251 = vmul.f32 %v1236, %v1249
        %v1252 = vadd.f32 %v1243, %v1251
        %1253 = vst [vmem:[#allocation2 - $0x6] sm:$0xc0] %v1252
        %p1254 = scmp.eq.s32.totalorder %s24, 1
        // Predicated region
        $region53: #{_forward.1} parent=47 // pred_check
          %p1255 = pneg %p1254
        $region54: #{_forward.1} parent=47 // pred_check_branch
          %1257 = sbr.rel (%p1255) target = $region56
        $region55: #{_forward.1} parent=47 // pred_region
          %v1258 = vld [vmem:[%s5] sm:$0xff]
          %v1259 = vld [vmem:[%s5 + $0x8] sm:$0xff]
          %v1260 = vld [vmem:[%s5 + $0x10] sm:$0xff]
          %v1261 = vld [vmem:[%s5 + $0x18] sm:$0xff]
          %v1262 = vld [vmem:[%s5 + $0x20] sm:$0xff]
          %v1263 = vld [vmem:[%s5 + $0x28] sm:$0xff]
          %v1264 = vld [vmem:[%s5 + $0x30] sm:$0xff]
          %v1265 = vld [vmem:[%s5 + $0x38] sm:$0xff]
          %v1266 = vld [vmem:[%s5 + $0x40] sm:$0xff]
          %v1267 = vld [vmem:[%s5 + $0x48] sm:$0xff]
          %v1268 = vld [vmem:[%s5 + $0x50] sm:$0xff]
          %v1269 = vld [vmem:[%s5 + $0x58] sm:$0xff]
          %v1270 = vld [vmem:[%s5 + $0x60] sm:$0xff]
          %v1271 = vld [vmem:[%s5 + $0x68] sm:$0xff]
          %v1272 = vld [vmem:[%s5 + $0x70] sm:$0xff]
          %v1273 = vld [vmem:[%s5 + $0x78] sm:$0xff]
          %v1274 = vld [vmem:[%s6] sm:$0x1]
          %v1276 = vlaneseq
          %v1277 = vshrl.u32 %v1276, 7
          %v1278 = vsub.s32 0, %v1277
          %v1279 = vrot.slane %v1274, %v1278
          %v1282 = vrot.slane %v1252, 6
          %1284 = vmatprep.subr.mxu0 0.0
          %1285 = vmatpush1.msra.mxu0 %v1273
          %1286 = vmatprep.subr.mxu0 0.0
          %1287 = vmatpush1.msra.mxu0 %v1272
          %1288 = vmatprep.subr.mxu0 0.0
          %1289 = vmatpush1.msra.mxu0 %v1271
          %1290 = vmatprep.subr.mxu0 0.0
          %1291 = vmatpush1.msra.mxu0 %v1270
          %1292 = vmatprep.subr.mxu0 0.0
          %1293 = vmatpush1.msra.mxu0 %v1269
          %1294 = vmatprep.subr.mxu0 0.0
          %1295 = vmatpush1.msra.mxu0 %v1268
          %1296 = vmatprep.subr.mxu0 0.0
          %1297 = vmatpush1.msra.mxu0 %v1267
          %1298 = vmatprep.subr.mxu0 0.0
          %1299 = vmatpush1.msra.mxu0 %v1266
          %1300 = vmatprep.subr.mxu0 0.0
          %1301 = vmatpush1.msra.mxu0 %v1265
          %1302 = vmatprep.subr.mxu0 0.0
          %1303 = vmatpush1.msra.mxu0 %v1264
          %1304 = vmatprep.subr.mxu0 0.0
          %1305 = vmatpush1.msra.mxu0 %v1263
          %1306 = vmatprep.subr.mxu0 0.0
          %1307 = vmatpush1.msra.mxu0 %v1262
          %1308 = vmatprep.subr.mxu0 0.0
          %1309 = vmatpush1.msra.mxu0 %v1261
          %1310 = vmatprep.subr.mxu0 0.0
          %1311 = vmatpush1.msra.mxu0 %v1260
          %1312 = vmatprep.subr.mxu0 0.0
          %1313 = vmatpush1.msra.mxu0 %v1259
          %1314 = vmatprep.subr.mxu0 0.0
          %1315 = vmatpush1.msra.mxu0 %v1258
          %1316 = vmatprep.subr.mxu0 0.0
          %1317 = vmatpush2.msra.mxu0 0.0
          %1318 = vmatprep.subr.mxu0 0.0
          %1319 = vmatpush2.msra.mxu0 0.0
          %1320 = vmatprep.subr.mxu0 0.0
          %1321 = vmatpush2.msra.mxu0 0.0
          %1322 = vmatprep.subr.mxu0 0.0
          %1323 = vmatpush2.msra.mxu0 0.0
          %1324 = vmatprep.subr.mxu0 0.0
          %1325 = vmatpush2.msra.mxu0 0.0
          %1326 = vmatprep.subr.mxu0 0.0
          %1327 = vmatpush2.msra.mxu0 0.0
          %1328 = vmatprep.subr.mxu0 0.0
          %1329 = vmatpush2.msra.mxu0 0.0
          %1330 = vmatprep.subr.mxu0 0.0
          %1331 = vmatpush2.msra.mxu0 0.0
          %1332 = vmatprep.subr.mxu0 0.0
          %1333 = vmatpush2.msra.mxu0 0.0
          %1334 = vmatprep.subr.mxu0 0.0
          %1335 = vmatpush2.msra.mxu0 0.0
          %1336 = vmatprep.subr.mxu0 0.0
          %1337 = vmatpush2.msra.mxu0 0.0
          %1338 = vmatprep.subr.mxu0 0.0
          %1339 = vmatpush2.msra.mxu0 0.0
          %1340 = vmatprep.subr.mxu0 0.0
          %1341 = vmatpush2.msra.mxu0 0.0
          %1342 = vmatprep.subr.mxu0 0.0
          %1343 = vmatpush2.msra.mxu0 0.0
          %1344 = vmatprep.subr.mxu0 0.0
          %1345 = vmatpush2.msra.mxu0 0.0
          %1346 = vmatprep.subr.mxu0 0.0
          %1347 = vmatpush2.msra.mxu0 0.0
          %1348 = vmatprep.mubr.f32.mxu0 0.0
          %1349 = vmatmul.mubr.f32.gmra.mxu0 %v1282
          %v1350 = vpop.f32.mrf.mxu0
          %v1351 = vadd.f32 %v1279, %v1350
          %v1352 = vpop.f32.mrf.mxu0
          %1353 = vdwg.mxu0
          %1354 = vst [vmem:[#allocation3] sm:$0x3] %v1351
        $region56: #{_forward.1} parent=47 // pred_fallthru
          _
        // Predicated region
        $region57: #{_forward.1} parent=47 // pred_check
          %p1355 = pneg %p203
        $region58: #{_forward.1} parent=47 // pred_check_branch
          %1357 = sbr.rel (%p1355) target = $region60
        $region59: #{_forward.1} parent=47 // pred_region
          %s1359 = ssub.s32 32, 32
          %1360 = vsyncadd [#allocation4], %s1359
          %s1361 = smul.addr %s23, 32
          %s1362 = scalar_lea.hbm %s7, %s1361
          %s1364 = sshll.u32 [#allocation3], 4
          %s1365 = int_to_ptr.vmem [resolvable:$true] %s1364
          %1367 = dma.vmem_to_hbm [thread:$0]  %s1365, 32, %s1362, [#allocation4]
        $region60: #{_forward.1} parent=47 // pred_fallthru
          _
        // Predicated region
        $region61: #{_forward.1} parent=47 // pred_check
          %p1368 = pneg %p203
        $region62: #{_forward.1} parent=47 // pred_check_branch
          %1370 = sbr.rel (%p1368) target = $region64
        $region63: #{_forward.1} parent=47 // pred_region
          %1371 = dma.done [#allocation4], 32
        $region64: #{_forward.1} parent=47 // pred_fallthru
          _
      $region48: #{_forward.1} parent=5 // pred_fallthru
        _
      %p1372 = scmp.le.s32.totalorder 2, %s14
      // Predicated region
      $region65: #{_forward.1} parent=5 // pred_check
        %p1373 = pneg %p1372
      $region66: #{_forward.1} parent=5 // pred_check_branch
        %1375 = sbr.rel (%p1373) target = $region68
      $region67: #{_forward.1} parent=5 // pred_region
        %s1376 = ssub.s32 %s14, 2
      $region68: #{_forward.1} parent=5 // pred_fallthru
        _
    $region6: #{_forward.1} parent=1 // loop_footer
      %s18 = sadd.s32 1, %s14
    $region7: #{_forward.1} parent=1 // loop_footer_branch
      %13 = sbr.rel target = $region3
    $region8: #{_forward.1} parent=1 // loop_exit
      _
    %1377 = vsyncpa [#allocation4], 1
    %s1378 = scalar_lea.sflag [#allocation4], 1
    %1379 = vsyncpa %s1378, 1

// kernel: _forward.1
$region0: #{_forward.1}
  #allocation0 [shape = 'u32[]', space=smem, size = 0x4, offset = 0x4, fixed_abs, tag = 'smem constant byte address 0x4 - core index']
  #allocation1 [shape = 'u32[144,128]{1,0:T(1,128)}', space=vmem, size = 0x12000, scoped, tag = 'internal scratch']
  #allocation2 [shape = 'f32[2,128]{1,0:T(2,128)}', space=vmem, size = 0x400, scoped, tag = 'scratch operand']
  %s0 = inlined_call_operand.vmem [shape: f32[8,2,4], index: 0, kind: input, shape index: {}]
  %s1 = inlined_call_operand.vmem [shape: f32[4,384], index: 1, kind: input, shape index: {}]
  %s2 = inlined_call_operand.vmem [shape: f32[128,384], index: 2, kind: input, shape index: {}]
  %s3 = inlined_call_operand.vmem [shape: f32[1,384], index: 3, kind: input, shape index: {}]
  %s4 = inlined_call_operand.vmem [shape: f32[1,128], index: 4, kind: input, shape index: {}]
  %s5 = inlined_call_operand.vmem [shape: f32[128,128], index: 5, kind: input, shape index: {}]
  %s6 = inlined_call_operand.vmem [shape: f32[1,128], index: 6, kind: input, shape index: {}]
  %s7 = inlined_call_operand.hbm [shape: f32[2,128], index: 7, kind: output, shape index: {}]
  %s8 = sld [smem:[#allocation0]]
  $region69: #{_forward.1} parent=0
    _
  %s10 = ssub.s32 1, %s8
  %s11 = scalar_select 0, %s10, %s8
  $region1: #{_forward.1} parent=0
    #allocation3 [shape = 'u8[1024]{0}', space=vmem, size = 0x400, scoped, tag = 'output window, operand 0, single buffered']
    #allocation4 [shape = 's32[2]{0}', space=sflag, size = 0x8, scoped, tag = 'scoped memory for _forward.1']
    %12 = vsyncpa [#allocation4], 0
    loop: start=0, step=1, limit=4
    $region2: #{_forward.1} parent=1 // loop_pre_header
      _
    $region3: #{_forward.1} parent=1 // loop_header
      %s14 = sphi 0, %s18
      %p15 = scmp.ge.s32.totalorder %s14, 4
      %s21 = sphi 0, %s33
      %s22 = sphi 0, %s29
      %s23 = sphi 0, %s21
      %s24 = sphi 0, %s22
      %s25 = sphi 0, %s23
      %s26 = sphi 0, %s24
      %s38 = sphi 0, %s40
      %s41 = sphi 0, %s38
      %s42 = sphi 0, %s41
      %s58 = sphi 0, %s42
      %s62 = sphi 0, %s62
      %s64 = sphi 0, %s62
      %s65 = sphi 0, %s64
      %s79 = sphi 0, %s65
      %s83 = sphi 0, %s83
      %s85 = sphi 0, %s83
      %s86 = sphi 0, %s85
      %s100 = sphi 0, %s86
      %s104 = sphi 0, %s104
      %s106 = sphi 0, %s104
      %s107 = sphi 0, %s106
      %s121 = sphi 0, %s107
      %s125 = sphi 0, %s125
      %s127 = sphi 0, %s125
      %s128 = sphi 0, %s127
      %s142 = sphi 0, %s128
      %s146 = sphi 0, %s146
      %s148 = sphi 0, %s146
      %s149 = sphi 0, %s148
      %s163 = sphi 0, %s149
      %s167 = sphi 0, %s167
      %s169 = sphi 0, %s167
      %s170 = sphi 0, %s169
      %s184 = sphi 0, %s170
      %s190 = sphi 0, %s192
      %s193 = sphi 0, %s190
      %s194 = sphi 0, %s193
      %s210 = sphi 0, %s194
    $region4: #{_forward.1} parent=1 // loop_header_branch
      %17 = sbr.rel (%p15) target = $region8
    $region5: #{_forward.1} parent=1 // loop_body
      %s19 = ssub.s32 %s14, 1
      %s20 = ssub.s32 %s14, 2
      %s27 = sadd.s32 1, %s22
      %p28 = scmp.ge.s32.totalorder %s27, 2
      %s29 = scalar_select %p28, 0, %s27
      %s30 = sadd.s32 1, %s21
      %s31 = scalar_select %p28, %s30, %s21
      %p32 = scmp.ge.s32.totalorder %s31, 1
      %s33 = scalar_select %p32, 0, %s31
      %s34 = ssub.s32 %s22, %s29
      %s35 = ssub.s32 %s21, %s33
      %s36 = sor.u32 %s34, %s35
      %p37 = scmp.eq.s32.totalorder %s36, 0
      %s39 = sadd.s32 %s38, 1
      %s40 = scalar_select %p37, %s38, %s39
      %p43 = pneg %p37
      %p44 = scmp.eq.s32.totalorder %s14, 1
      %p45 = por %p43, %p44
      %p46 = scmp.ne.s32.totalorder %s38, %s41
      %p47 = scmp.eq.s32.totalorder %s14, 0
      %p48 = por %p46, %p47
      %p49 = scmp.ne.s32.totalorder %s38, %s41
      %p50 = scmp.eq.s32.totalorder %s19, 1
      %p51 = por %p49, %p50
      %p52 = scmp.ne.s32.totalorder %s41, %s42
      %p53 = scmp.eq.s32.totalorder %s19, 0
      %p54 = por %p52, %p53
      %p55 = scmp.ne.s32.totalorder %s41, %s42
      %p56 = scmp.eq.s32.totalorder %s20, 1
      %p57 = por %p55, %p56
      %p59 = scmp.ne.s32.totalorder %s42, %s58
      %p60 = scmp.eq.s32.totalorder %s20, 0
      %p61 = por %p59, %p60
      %s63 = sadd.s32 %s62, 1
      %p66 = scmp.eq.s32.totalorder %s14, 1
      %p67 = scmp.ne.s32.totalorder %s62, %s64
      %p68 = scmp.eq.s32.totalorder %s14, 0
      %p69 = por %p67, %p68
      %p70 = scmp.ne.s32.totalorder %s62, %s64
      %p71 = scmp.eq.s32.totalorder %s19, 1
      %p72 = por %p70, %p71
      %p73 = scmp.ne.s32.totalorder %s64, %s65
      %p74 = scmp.eq.s32.totalorder %s19, 0
      %p75 = por %p73, %p74
      %p76 = scmp.ne.s32.totalorder %s64, %s65
      %p77 = scmp.eq.s32.totalorder %s20, 1
      %p78 = por %p76, %p77
      %p80 = scmp.ne.s32.totalorder %s65, %s79
      %p81 = scmp.eq.s32.totalorder %s20, 0
      %p82 = por %p80, %p81
      %s84 = sadd.s32 %s83, 1
      %p87 = scmp.eq.s32.totalorder %s14, 1
      %p88 = scmp.ne.s32.totalorder %s83, %s85
      %p89 = scmp.eq.s32.totalorder %s14, 0
      %p90 = por %p88, %p89
      %p91 = scmp.ne.s32.totalorder %s83, %s85
      %p92 = scmp.eq.s32.totalorder %s19, 1
      %p93 = por %p91, %p92
      %p94 = scmp.ne.s32.totalorder %s85, %s86
      %p95 = scmp.eq.s32.totalorder %s19, 0
      %p96 = por %p94, %p95
      %p97 = scmp.ne.s32.totalorder %s85, %s86
      %p98 = scmp.eq.s32.totalorder %s20, 1
      %p99 = por %p97, %p98
      %p101 = scmp.ne.s32.totalorder %s86, %s100
      %p102 = scmp.eq.s32.totalorder %s20, 0
      %p103 = por %p101, %p102
      %s105 = sadd.s32 %s104, 1
      %p108 = scmp.eq.s32.totalorder %s14, 1
      %p109 = scmp.ne.s32.totalorder %s104, %s106
      %p110 = scmp.eq.s32.totalorder %s14, 0
      %p111 = por %p109, %p110
      %p112 = scmp.ne.s32.totalorder %s104, %s106
      %p113 = scmp.eq.s32.totalorder %s19, 1
      %p114 = por %p112, %p113
      %p115 = scmp.ne.s32.totalorder %s106, %s107
      %p116 = scmp.eq.s32.totalorder %s19, 0
      %p117 = por %p115, %p116
      %p118 = scmp.ne.s32.totalorder %s106, %s107
      %p119 = scmp.eq.s32.totalorder %s20, 1
      %p120 = por %p118, %p119
      %p122 = scmp.ne.s32.totalorder %s107, %s121
      %p123 = scmp.eq.s32.totalorder %s20, 0
      %p124 = por %p122, %p123
      %s126 = sadd.s32 %s125, 1
      %p129 = scmp.eq.s32.totalorder %s14, 1
      %p130 = scmp.ne.s32.totalorder %s125, %s127
      %p131 = scmp.eq.s32.totalorder %s14, 0
      %p132 = por %p130, %p131
      %p133 = scmp.ne.s32.totalorder %s125, %s127
      %p134 = scmp.eq.s32.totalorder %s19, 1
      %p135 = por %p133, %p134
      %p136 = scmp.ne.s32.totalorder %s127, %s128
      %p137 = scmp.eq.s32.totalorder %s19, 0
      %p138 = por %p136, %p137
      %p139 = scmp.ne.s32.totalorder %s127, %s128
      %p140 = scmp.eq.s32.totalorder %s20, 1
      %p141 = por %p139, %p140
      %p143 = scmp.ne.s32.totalorder %s128, %s142
      %p144 = scmp.eq.s32.totalorder %s20, 0
      %p145 = por %p143, %p144
      %s147 = sadd.s32 %s146, 1
      %p150 = scmp.eq.s32.totalorder %s14, 1
      %p151 = scmp.ne.s32.totalorder %s146, %s148
      %p152 = scmp.eq.s32.totalorder %s14, 0
      %p153 = por %p151, %p152
      %p154 = scmp.ne.s32.totalorder %s146, %s148
      %p155 = scmp.eq.s32.totalorder %s19, 1
      %p156 = por %p154, %p155
      %p157 = scmp.ne.s32.totalorder %s148, %s149
      %p158 = scmp.eq.s32.totalorder %s19, 0
      %p159 = por %p157, %p158
      %p160 = scmp.ne.s32.totalorder %s148, %s149
      %p161 = scmp.eq.s32.totalorder %s20, 1
      %p162 = por %p160, %p161
      %p164 = scmp.ne.s32.totalorder %s149, %s163
      %p165 = scmp.eq.s32.totalorder %s20, 0
      %p166 = por %p164, %p165
      %s168 = sadd.s32 %s167, 1
      %p171 = scmp.eq.s32.totalorder %s14, 1
      %p172 = scmp.ne.s32.totalorder %s167, %s169
      %p173 = scmp.eq.s32.totalorder %s14, 0
      %p174 = por %p172, %p173
      %p175 = scmp.ne.s32.totalorder %s167, %s169
      %p176 = scmp.eq.s32.totalorder %s19, 1
      %p177 = por %p175, %p176
      %p178 = scmp.ne.s32.totalorder %s169, %s170
      %p179 = scmp.eq.s32.totalorder %s19, 0
      %p180 = por %p178, %p179
      %p181 = scmp.ne.s32.totalorder %s169, %s170
      %p182 = scmp.eq.s32.totalorder %s20, 1
      %p183 = por %p181, %p182
      %p185 = scmp.ne.s32.totalorder %s170, %s184
      %p186 = scmp.eq.s32.totalorder %s20, 0
      %p187 = por %p185, %p186
      %s188 = ssub.s32 %s21, %s33
      %p189 = scmp.eq.s32.totalorder %s188, 0
      %s191 = sadd.s32 %s190, 1
      %s192 = scalar_select %p189, %s190, %s191
      %p195 = pneg %p189
      %p196 = scmp.eq.s32.totalorder %s14, 1
      %p197 = por %p195, %p196
      %p198 = scmp.ne.s32.totalorder %s190, %s193
      %p199 = scmp.eq.s32.totalorder %s14, 0
      %p200 = por %p198, %p199
      %p201 = scmp.ne.s32.totalorder %s190, %s193
      %p202 = scmp.eq.s32.totalorder %s19, 1
      %p203 = por %p201, %p202
      %p204 = scmp.ne.s32.totalorder %s193, %s194
      %p205 = scmp.eq.s32.totalorder %s19, 0
      %p206 = por %p204, %p205
      %p207 = scmp.ne.s32.totalorder %s193, %s194
      %p208 = scmp.eq.s32.totalorder %s20, 1
      %p209 = por %p207, %p208
      %p211 = scmp.ne.s32.totalorder %s194, %s210
      %p212 = scmp.eq.s32.totalorder %s20, 0
      %p213 = por %p211, %p212
      %p214 = scmp.le.s32.totalorder 1, %s14
      %p215 = scmp.lt.s32.totalorder %s14, 3
      %p216 = pnand %p214, %p215
      %p217 = pneg %p216
      // Predicated region
      $region9: #{_forward.1} parent=5 // pred_check
        _
      $region10: #{_forward.1} parent=5 // pred_check_branch
        %219 = sbr.rel (%p216) target = $region12
      $region11: #{_forward.1} parent=5 // pred_region
        %s220 = ssub.s32 %s14, 1
        // Predicated region
        $region13: #{_forward.1} parent=11 // pred_check
          %p221 = pneg %p75
        $region14: #{_forward.1} parent=11 // pred_check_branch
          %223 = sbr.rel (%p221) target = $region16
        $region15: #{_forward.1} parent=11 // pred_region
          _
        $region16: #{_forward.1} parent=11 // pred_fallthru
          _
        // Predicated region
        $region17: #{_forward.1} parent=11 // pred_check
          %p224 = pneg %p96
        $region18: #{_forward.1} parent=11 // pred_check_branch
          %226 = sbr.rel (%p224) target = $region20
        $region19: #{_forward.1} parent=11 // pred_region
          _
        $region20: #{_forward.1} parent=11 // pred_fallthru
          _
        // Predicated region
        $region21: #{_forward.1} parent=11 // pred_check
          %p227 = pneg %p117
        $region22: #{_forward.1} parent=11 // pred_check_branch
          %229 = sbr.rel (%p227) target = $region24
        $region23: #{_forward.1} parent=11 // pred_region
          _
        $region24: #{_forward.1} parent=11 // pred_fallthru
          _
        // Predicated region
        $region25: #{_forward.1} parent=11 // pred_check
          %p230 = pneg %p138
        $region26: #{_forward.1} parent=11 // pred_check_branch
          %232 = sbr.rel (%p230) target = $region28
        $region27: #{_forward.1} parent=11 // pred_region
          _
        $region28: #{_forward.1} parent=11 // pred_fallthru
          _
        // Predicated region
        $region29: #{_forward.1} parent=11 // pred_check
          %p233 = pneg %p159
        $region30: #{_forward.1} parent=11 // pred_check_branch
          %235 = sbr.rel (%p233) target = $region32
        $region31: #{_forward.1} parent=11 // pred_region
          _
        $region32: #{_forward.1} parent=11 // pred_fallthru
          _
        // Predicated region
        $region33: #{_forward.1} parent=11 // pred_check
          %p236 = pneg %p180
        $region34: #{_forward.1} parent=11 // pred_check_branch
          %238 = sbr.rel (%p236) target = $region36
        $region35: #{_forward.1} parent=11 // pred_region
          _
        $region36: #{_forward.1} parent=11 // pred_fallthru
          _
      $region12: #{_forward.1} parent=5 // pred_fallthru
        _
      %p239 = scmp.lt.s32.totalorder %s14, 2
      // Predicated region
      $region37: #{_forward.1} parent=5 // pred_check
        %p240 = pneg %p239
      $region38: #{_forward.1} parent=5 // pred_check_branch
        %242 = sbr.rel (%p240) target = $region40
      $region39: #{_forward.1} parent=5 // pred_region
        // Predicated region
        $region41: #{_forward.1} parent=39 // pred_check
          %p243 = pneg %p48
        $region42: #{_forward.1} parent=39 // pred_check_branch
          %245 = sbr.rel (%p243) target = $region44
        $region43: #{_forward.1} parent=39 // pred_region
          %s246 = smul.u32 4, %s22
          %p247 = scmp.lt.s32.totalorder %s246, 7
          %s248 = scalar_select %p247, %s246, 7
          %p249 = scmp.lt.s32.totalorder %s21, 0
          %s250 = scalar_select %p249, %s21, 0
          %s251 = sadd.s32 %s250, %s248
          %s252 = smul.addr %s251, 2
          %s253 = scalar_lea.vmem %s0, %s252
          %s254 = smul.u32 4, %s22
        $region44: #{_forward.1} parent=39 // pred_fallthru
          _
      $region40: #{_forward.1} parent=5 // pred_fallthru
        _
      %p255 = scmp.le.s32.totalorder 1, %s14
      %p256 = scmp.lt.s32.totalorder %s14, 3
      %p257 = pnand %p255, %p256
      %p258 = pneg %p257
      // Predicated region
      $region45: #{_forward.1} parent=5 // pred_check
        _
      $region46: #{_forward.1} parent=5 // pred_check_branch
        %260 = sbr.rel (%p257) target = $region48
      $region47: #{_forward.1} parent=5 // pred_region
        %s261 = ssub.s32 %s14, 1
        %s262 = smul.u32 4, %s24
        %p263 = scmp.lt.s32.totalorder %s262, 7
        %s264 = scalar_select %p263, %s262, 7
        %p265 = scmp.lt.s32.totalorder %s23, 0
        %s266 = scalar_select %p265, %s23, 0
        %s267 = sadd.s32 %s266, %s264
        %s268 = smul.addr %s267, 2
        %s269 = scalar_lea.vmem %s0, %s268
        %p270 = pneg %p54
        %p271 = pneg %p51
        %p272 = pneg %p75
        %p273 = pneg %p72
        %p274 = pneg %p96
        %p275 = pneg %p93
        %p276 = pneg %p117
        %p277 = pneg %p114
        %p278 = pneg %p138
        %p279 = pneg %p135
        %p280 = pneg %p159
        %p281 = pneg %p156
        %p282 = pneg %p180
        %p283 = pneg %p177
        %p284 = pneg %p206
        %p285 = pneg %p203
        %s286 = smul.u32 4, %s24
        %p287 = scmp.lt.s32.totalorder %s286, 7
        %s288 = scalar_select %p287, %s286, 7
        %p289 = scmp.lt.s32.totalorder %s23, 0
        %s290 = scalar_select %p289, %s23, 0
        %s291 = sadd.s32 %s290, %s288
        %s292 = smul.addr %s291, 2
        %s293 = scalar_lea.vmem %s0, %s292
        %s294 = smul.u32 4, %s24
        %p295 = scmp.eq.s32.totalorder %s24, 0
        // Predicated region
        $region49: #{_forward.1} parent=47 // pred_check
          %p296 = pneg %p295
        $region50: #{_forward.1} parent=47 // pred_check_branch
          %298 = sbr.rel (%p296) target = $region52
        $region51: #{_forward.1} parent=47 // pred_region
          %299 = vst [vmem:[#allocation2] sm:$0x3] 0.0
        $region52: #{_forward.1} parent=47 // pred_fallthru
          _
        %v300 = vld [vmem:[%s1] sm:$0xff]
        %v301 = vld [vmem:[%s1 + $0x8] sm:$0xf]
        %v302 = vld [vmem:[%s2] sm:$0xff]
        %v303 = vld [vmem:[%s2 + $0x8] sm:$0xff]
        %v304 = vld [vmem:[%s2 + $0x10] sm:$0xff]
        %v305 = vld [vmem:[%s2 + $0x18] sm:$0xff]
        %v306 = vld [vmem:[%s2 + $0x20] sm:$0xff]
        %v307 = vld [vmem:[%s2 + $0x28] sm:$0xff]
        %v308 = vld [vmem:[%s2 + $0x30] sm:$0xff]
        %v309 = vld [vmem:[%s2 + $0x38] sm:$0xff]
        %v310 = vld [vmem:[%s2 + $0x40] sm:$0xff]
        %v311 = vld [vmem:[%s2 + $0x48] sm:$0xff]
        %v312 = vld [vmem:[%s2 + $0x50] sm:$0xff]
        %v313 = vld [vmem:[%s2 + $0x58] sm:$0xff]
        %v314 = vld [vmem:[%s2 + $0x60] sm:$0xff]
        %v315 = vld [vmem:[%s2 + $0x68] sm:$0xff]
        %v316 = vld [vmem:[%s2 + $0x70] sm:$0xff]
        %v317 = vld [vmem:[%s2 + $0x78] sm:$0xff]
        %v318 = vld [vmem:[%s2 + $0x80] sm:$0xff]
        %v319 = vld [vmem:[%s2 + $0x88] sm:$0xff]
        %v320 = vld [vmem:[%s2 + $0x90] sm:$0xff]
        %v321 = vld [vmem:[%s2 + $0x98] sm:$0xff]
        %v322 = vld [vmem:[%s2 + $0xa0] sm:$0xff]
        %v323 = vld [vmem:[%s2 + $0xa8] sm:$0xff]
        %v324 = vld [vmem:[%s2 + $0xb0] sm:$0xff]
        %v325 = vld [vmem:[%s2 + $0xb8] sm:$0xff]
        %v326 = vld [vmem:[%s2 + $0xc0] sm:$0xff]
        %v327 = vld [vmem:[%s2 + $0xc8] sm:$0xff]
        %v328 = vld [vmem:[%s2 + $0xd0] sm:$0xff]
        %v329 = vld [vmem:[%s2 + $0xd8] sm:$0xff]
        %v330 = vld [vmem:[%s2 + $0xe0] sm:$0xff]
        %v331 = vld [vmem:[%s2 + $0xe8] sm:$0xff]
        %v332 = vld [vmem:[%s2 + $0xf0] sm:$0xff]
        %v333 = vld [vmem:[%s2 + $0xf8] sm:$0xff]
        %v334 = vld [vmem:[%s2 + $0x100] sm:$0xff]
        %v335 = vld [vmem:[%s2 + $0x108] sm:$0xff]
        %v336 = vld [vmem:[%s2 + $0x110] sm:$0xff]
        %v337 = vld [vmem:[%s2 + $0x118] sm:$0xff]
        %v338 = vld [vmem:[%s2 + $0x120] sm:$0xff]
        %v339 = vld [vmem:[%s2 + $0x128] sm:$0xff]
        %v340 = vld [vmem:[%s2 + $0x130] sm:$0xff]
        %v341 = vld [vmem:[%s2 + $0x138] sm:$0xff]
        %v342 = vld [vmem:[%s2 + $0x140] sm:$0xff]
        %v343 = vld [vmem:[%s2 + $0x148] sm:$0xff]
        %v344 = vld [vmem:[%s2 + $0x150] sm:$0xff]
        %v345 = vld [vmem:[%s2 + $0x158] sm:$0xff]
        %v346 = vld [vmem:[%s2 + $0x160] sm:$0xff]
        %v347 = vld [vmem:[%s2 + $0x168] sm:$0xff]
        %v348 = vld [vmem:[%s2 + $0x170] sm:$0xff]
        %v349 = vld [vmem:[%s2 + $0x178] sm:$0xff]
        %v350 = vld [vmem:[%s3] sm:$0x7]
        %v351 = vld [vmem:[%s4] sm:$0x1]
        %v352 = vld [vmem:[%s293] sm:$0x3]
        %v353 = vld [vmem:[%s293 + $0x2] sm:$0x3]
        %v354 = vld [vmem:[%s293 + $0x4] sm:$0x3]
        %v355 = vld [vmem:[%s293 + $0x6] sm:$0x3]
        %v357 = vlaneseq
        %v358 = vshrl.u32 %v357, 7
        %v359 = vsub.s32 0, %v358
        %v360 = vrot.slane %v350, %v359
        %v361 = vlaneseq
        %v362 = vshrl.u32 %v361, 7
        %v363 = vsub.s32 1, %v362
        %v364 = vrot.slane %v350, %v363
        %v365 = vlaneseq
        %v366 = vshrl.u32 %v365, 7
        %v367 = vsub.s32 2, %v366
        %v368 = vrot.slane %v350, %v367
        %v376 = vcombine.low %v352, %v353
        %v377 = vcombine.low %v354, %v355
        %v379 = vunpack.c.l.s4 1983009808
        %v380 = vunpack.c.0.s8 %v379
        %v381 = vlaneseq
        %v382 = vshrl.u32 %v381, 7
        %v383 = vsub.s32 %v380, %v382
        %v384 = vrot.slane %v376, %v383
        %v386 = vunpack.c.l.s4 1983009808
        %v387 = vunpack.c.0.s8 %v386
        %v388 = vlaneseq
        %v389 = vshrl.u32 %v388, 7
        %v390 = vsub.s32 %v387, %v389
        %v391 = vrot.slane %v377, %v390
        %v392 = vcombine.low %v384, %v391
        %v395 = vcombine.high %v300, %v300
        %vm396 = vcmask 31744
        %v397 = vsel %vm396, %v392, 0
        %vm399 = vcmask 1043456
        %v400 = vsel %vm399, %v300, 0
        %v402 = vsel %vm399, %v395, 0
        %v404 = vsel %vm399, %v301, 0
        %406 = vmatprep.subr.mxu0 0.0
        %407 = vmatpush1.msra.mxu0 0.0
        %408 = vmatprep.subr.mxu0 0.0
        %409 = vmatpush1.msra.mxu0 0.0
        %410 = vmatprep.subr.mxu0 0.0
        %411 = vmatpush1.msra.mxu0 0.0
        %412 = vmatprep.subr.mxu0 0.0
        %413 = vmatpush1.msra.mxu0 0.0
        %414 = vmatprep.subr.mxu0 0.0
        %415 = vmatpush1.msra.mxu0 0.0
        %416 = vmatprep.subr.mxu0 0.0
        %417 = vmatpush1.msra.mxu0 0.0
        %418 = vmatprep.subr.mxu0 0.0
        %419 = vmatpush1.msra.mxu0 0.0
        %420 = vmatprep.subr.mxu0 0.0
        %421 = vmatpush1.msra.mxu0 0.0
        %422 = vmatprep.subr.mxu0 0.0
        %423 = vmatpush1.msra.mxu0 0.0
        %424 = vmatprep.subr.mxu0 0.0
        %425 = vmatpush1.msra.mxu0 0.0
        %426 = vmatprep.subr.mxu0 0.0
        %427 = vmatpush1.msra.mxu0 0.0
        %428 = vmatprep.subr.mxu0 0.0
        %429 = vmatpush1.msra.mxu0 0.0
        %430 = vmatprep.subr.mxu0 0.0
        %431 = vmatpush1.msra.mxu0 0.0
        %432 = vmatprep.subr.mxu0 0.0
        %433 = vmatpush1.msra.mxu0 0.0
        %434 = vmatprep.subr.mxu0 0.0
        %435 = vmatpush1.msra.mxu0 0.0
        %436 = vmatprep.subr.mxu0 %v402
        %437 = vmatpush1.msra.mxu0 %v400
        %438 = vmatprep.subr.mxu0 0.0
        %439 = vmatpush2.msra.mxu0 0.0
        %440 = vmatprep.subr.mxu0 0.0
        %441 = vmatpush2.msra.mxu0 0.0
        %442 = vmatprep.subr.mxu0 0.0
        %443 = vmatpush2.msra.mxu0 0.0
        %444 = vmatprep.subr.mxu0 0.0
        %445 = vmatpush2.msra.mxu0 0.0
        %446 = vmatprep.subr.mxu0 0.0
        %447 = vmatpush2.msra.mxu0 0.0
        %448 = vmatprep.subr.mxu0 0.0
        %449 = vmatpush2.msra.mxu0 0.0
        %450 = vmatprep.subr.mxu0 0.0
        %451 = vmatpush2.msra.mxu0 0.0
        %452 = vmatprep.subr.mxu0 0.0
        %453 = vmatpush2.msra.mxu0 0.0
        %454 = vmatprep.subr.mxu0 0.0
        %455 = vmatpush2.msra.mxu0 0.0
        %456 = vmatprep.subr.mxu0 0.0
        %457 = vmatpush2.msra.mxu0 0.0
        %458 = vmatprep.subr.mxu0 0.0
        %459 = vmatpush2.msra.mxu0 0.0
        %460 = vmatprep.subr.mxu0 0.0
        %461 = vmatpush2.msra.mxu0 0.0
        %462 = vmatprep.subr.mxu0 0.0
        %463 = vmatpush2.msra.mxu0 0.0
        %464 = vmatprep.subr.mxu0 0.0
        %465 = vmatpush2.msra.mxu0 0.0
        %466 = vmatprep.subr.mxu0 0.0
        %467 = vmatpush2.msra.mxu0 0.0
        %468 = vmatprep.subr.mxu0 0.0
        %469 = vmatpush2.msra.mxu0 0.0
        %470 = vmatprep.mubr.f32.mxu0 0.0
        %471 = vmatmul.mubr.f32.gmra.mxu0 %v397
        %v472 = vpop.f32.mrf.mxu0
        %v473 = vadd.f32 %v360, %v472
        %v474 = vpop.f32.mrf.mxu0
        %v475 = vadd.f32 %v364, %v474
        %476 = vdwg.mxu0
        %477 = vmatprep.subr.mxu0 0.0
        %478 = vmatpush1.msra.mxu0 0.0
        %479 = vmatprep.subr.mxu0 0.0
        %480 = vmatpush1.msra.mxu0 0.0
        %481 = vmatprep.subr.mxu0 0.0
        %482 = vmatpush1.msra.mxu0 0.0
        %483 = vmatprep.subr.mxu0 0.0
        %484 = vmatpush1.msra.mxu0 0.0
        %485 = vmatprep.subr.mxu0 0.0
        %486 = vmatpush1.msra.mxu0 0.0
        %487 = vmatprep.subr.mxu0 0.0
        %488 = vmatpush1.msra.mxu0 0.0
        %489 = vmatprep.subr.mxu0 0.0
        %490 = vmatpush1.msra.mxu0 0.0
        %491 = vmatprep.subr.mxu0 0.0
        %492 = vmatpush1.msra.mxu0 0.0
        %493 = vmatprep.subr.mxu0 0.0
        %494 = vmatpush1.msra.mxu0 0.0
        %495 = vmatprep.subr.mxu0 0.0
        %496 = vmatpush1.msra.mxu0 0.0
        %497 = vmatprep.subr.mxu0 0.0
        %498 = vmatpush1.msra.mxu0 0.0
        %499 = vmatprep.subr.mxu0 0.0
        %500 = vmatpush1.msra.mxu0 0.0
        %501 = vmatprep.subr.mxu0 0.0
        %502 = vmatpush1.msra.mxu0 0.0
        %503 = vmatprep.subr.mxu0 0.0
        %504 = vmatpush1.msra.mxu0 0.0
        %505 = vmatprep.subr.mxu0 0.0
        %506 = vmatpush1.msra.mxu0 0.0
        %507 = vmatprep.subr.mxu0 0.0
        %508 = vmatpush1.msra.mxu0 %v404
        %509 = vmatprep.subr.mxu0 0.0
        %510 = vmatpush2.msra.mxu0 0.0
        %511 = vmatprep.subr.mxu0 0.0
        %512 = vmatpush2.msra.mxu0 0.0
        %513 = vmatprep.subr.mxu0 0.0
        %514 = vmatpush2.msra.mxu0 0.0
        %515 = vmatprep.subr.mxu0 0.0
        %516 = vmatpush2.msra.mxu0 0.0
        %517 = vmatprep.subr.mxu0 0.0
        %518 = vmatpush2.msra.mxu0 0.0
        %519 = vmatprep.subr.mxu0 0.0
        %520 = vmatpush2.msra.mxu0 0.0
        %521 = vmatprep.subr.mxu0 0.0
        %522 = vmatpush2.msra.mxu0 0.0
        %523 = vmatprep.subr.mxu0 0.0
        %524 = vmatpush2.msra.mxu0 0.0
        %525 = vmatprep.subr.mxu0 0.0
        %526 = vmatpush2.msra.mxu0 0.0
        %527 = vmatprep.subr.mxu0 0.0
        %528 = vmatpush2.msra.mxu0 0.0
        %529 = vmatprep.subr.mxu0 0.0
        %530 = vmatpush2.msra.mxu0 0.0
        %531 = vmatprep.subr.mxu0 0.0
        %532 = vmatpush2.msra.mxu0 0.0
        %533 = vmatprep.subr.mxu0 0.0
        %534 = vmatpush2.msra.mxu0 0.0
        %535 = vmatprep.subr.mxu0 0.0
        %536 = vmatpush2.msra.mxu0 0.0
        %537 = vmatprep.subr.mxu0 0.0
        %538 = vmatpush2.msra.mxu0 0.0
        %539 = vmatprep.subr.mxu0 0.0
        %540 = vmatpush2.msra.mxu0 0.0
        %541 = vmatprep.mubr.f32.mxu0 0.0
        %542 = vmatmul.mubr.f32.gmra.mxu0 %v397
        %v543 = vpop.f32.mrf.mxu0
        %v544 = vadd.f32 %v368, %v543
        %v545 = vpop.f32.mrf.mxu0
        %546 = vdwg.mxu0
        %v547 = vld [vmem:[#allocation2] sm:$0x3]
        %548 = vmatprep.subr.mxu0 %v348
        %549 = vmatpush1.msra.mxu0 %v347
        %550 = vmatprep.subr.mxu0 %v345
        %551 = vmatpush1.msra.mxu0 %v344
        %552 = vmatprep.subr.mxu0 %v342
        %553 = vmatpush1.msra.mxu0 %v341
        %554 = vmatprep.subr.mxu0 %v339
        %555 = vmatpush1.msra.mxu0 %v338
        %556 = vmatprep.subr.mxu0 %v336
        %557 = vmatpush1.msra.mxu0 %v335
        %558 = vmatprep.subr.mxu0 %v333
        %559 = vmatpush1.msra.mxu0 %v332
        %560 = vmatprep.subr.mxu0 %v330
        %561 = vmatpush1.msra.mxu0 %v329
        %562 = vmatprep.subr.mxu0 %v327
        %563 = vmatpush1.msra.mxu0 %v326
        %564 = vmatprep.subr.mxu0 %v324
        %565 = vmatpush1.msra.mxu0 %v323
        %566 = vmatprep.subr.mxu0 %v321
        %567 = vmatpush1.msra.mxu0 %v320
        %568 = vmatprep.subr.mxu0 %v318
        %569 = vmatpush1.msra.mxu0 %v317
        %570 = vmatprep.subr.mxu0 %v315
        %571 = vmatpush1.msra.mxu0 %v314
        %572 = vmatprep.subr.mxu0 %v312
        %573 = vmatpush1.msra.mxu0 %v311
        %574 = vmatprep.subr.mxu0 %v309
        %575 = vmatpush1.msra.mxu0 %v308
        %576 = vmatprep.subr.mxu0 %v306
        %577 = vmatpush1.msra.mxu0 %v305
        %578 = vmatprep.subr.mxu0 %v303
        %579 = vmatpush1.msra.mxu0 %v302
        %580 = vmatprep.subr.mxu0 0.0
        %581 = vmatpush2.msra.mxu0 0.0
        %582 = vmatprep.subr.mxu0 0.0
        %583 = vmatpush2.msra.mxu0 0.0
        %584 = vmatprep.subr.mxu0 0.0
        %585 = vmatpush2.msra.mxu0 0.0
        %586 = vmatprep.subr.mxu0 0.0
        %587 = vmatpush2.msra.mxu0 0.0
        %588 = vmatprep.subr.mxu0 0.0
        %589 = vmatpush2.msra.mxu0 0.0
        %590 = vmatprep.subr.mxu0 0.0
        %591 = vmatpush2.msra.mxu0 0.0
        %592 = vmatprep.subr.mxu0 0.0
        %593 = vmatpush2.msra.mxu0 0.0
        %594 = vmatprep.subr.mxu0 0.0
        %595 = vmatpush2.msra.mxu0 0.0
        %596 = vmatprep.subr.mxu0 0.0
        %597 = vmatpush2.msra.mxu0 0.0
        %598 = vmatprep.subr.mxu0 0.0
        %599 = vmatpush2.msra.mxu0 0.0
        %600 = vmatprep.subr.mxu0 0.0
        %601 = vmatpush2.msra.mxu0 0.0
        %602 = vmatprep.subr.mxu0 0.0
        %603 = vmatpush2.msra.mxu0 0.0
        %604 = vmatprep.subr.mxu0 0.0
        %605 = vmatpush2.msra.mxu0 0.0
        %606 = vmatprep.subr.mxu0 0.0
        %607 = vmatpush2.msra.mxu0 0.0
        %608 = vmatprep.subr.mxu0 0.0
        %609 = vmatpush2.msra.mxu0 0.0
        %610 = vmatprep.subr.mxu0 0.0
        %611 = vmatpush2.msra.mxu0 0.0
        %612 = vmatprep.mubr.f32.mxu0 0.0
        %613 = vmatmul.mubr.f32.gmra.mxu0 %v547
        %v614 = vpop.f32.mrf.mxu0
        %v615 = vadd.f32 0.0, %v614
        %v616 = vpop.f32.mrf.mxu0
        %v617 = vadd.f32 0.0, %v616
        %618 = vdwg.mxu0
        %619 = vmatprep.subr.mxu0 0.0
        %620 = vmatpush1.msra.mxu0 %v349
        %621 = vmatprep.subr.mxu0 0.0
        %622 = vmatpush1.msra.mxu0 %v346
        %623 = vmatprep.subr.mxu0 0.0
        %624 = vmatpush1.msra.mxu0 %v343
        %625 = vmatprep.subr.mxu0 0.0
        %626 = vmatpush1.msra.mxu0 %v340
        %627 = vmatprep.subr.mxu0 0.0
        %628 = vmatpush1.msra.mxu0 %v337
        %629 = vmatprep.subr.mxu0 0.0
        %630 = vmatpush1.msra.mxu0 %v334
        %631 = vmatprep.subr.mxu0 0.0
        %632 = vmatpush1.msra.mxu0 %v331
        %633 = vmatprep.subr.mxu0 0.0
        %634 = vmatpush1.msra.mxu0 %v328
        %635 = vmatprep.subr.mxu0 0.0
        %636 = vmatpush1.msra.mxu0 %v325
        %637 = vmatprep.subr.mxu0 0.0
        %638 = vmatpush1.msra.mxu0 %v322
        %639 = vmatprep.subr.mxu0 0.0
        %640 = vmatpush1.msra.mxu0 %v319
        %641 = vmatprep.subr.mxu0 0.0
        %642 = vmatpush1.msra.mxu0 %v316
        %643 = vmatprep.subr.mxu0 0.0
        %644 = vmatpush1.msra.mxu0 %v313
        %645 = vmatprep.subr.mxu0 0.0
        %646 = vmatpush1.msra.mxu0 %v310
        %647 = vmatprep.subr.mxu0 0.0
        %648 = vmatpush1.msra.mxu0 %v307
        %649 = vmatprep.subr.mxu0 0.0
        %650 = vmatpush1.msra.mxu0 %v304
        %651 = vmatprep.subr.mxu0 0.0
        %652 = vmatpush2.msra.mxu0 0.0
        %653 = vmatprep.subr.mxu0 0.0
        %654 = vmatpush2.msra.mxu0 0.0
        %655 = vmatprep.subr.mxu0 0.0
        %656 = vmatpush2.msra.mxu0 0.0
        %657 = vmatprep.subr.mxu0 0.0
        %658 = vmatpush2.msra.mxu0 0.0
        %659 = vmatprep.subr.mxu0 0.0
        %660 = vmatpush2.msra.mxu0 0.0
        %661 = vmatprep.subr.mxu0 0.0
        %662 = vmatpush2.msra.mxu0 0.0
        %663 = vmatprep.subr.mxu0 0.0
        %664 = vmatpush2.msra.mxu0 0.0
        %665 = vmatprep.subr.mxu0 0.0
        %666 = vmatpush2.msra.mxu0 0.0
        %667 = vmatprep.subr.mxu0 0.0
        %668 = vmatpush2.msra.mxu0 0.0
        %669 = vmatprep.subr.mxu0 0.0
        %670 = vmatpush2.msra.mxu0 0.0
        %671 = vmatprep.subr.mxu0 0.0
        %672 = vmatpush2.msra.mxu0 0.0
        %673 = vmatprep.subr.mxu0 0.0
        %674 = vmatpush2.msra.mxu0 0.0
        %675 = vmatprep.subr.mxu0 0.0
        %676 = vmatpush2.msra.mxu0 0.0
        %677 = vmatprep.subr.mxu0 0.0
        %678 = vmatpush2.msra.mxu0 0.0
        %679 = vmatprep.subr.mxu0 0.0
        %680 = vmatpush2.msra.mxu0 0.0
        %681 = vmatprep.subr.mxu0 0.0
        %682 = vmatpush2.msra.mxu0 0.0
        %683 = vmatprep.mubr.f32.mxu0 0.0
        %684 = vmatmul.mubr.f32.gmra.mxu0 %v547
        %v685 = vpop.f32.mrf.mxu0
        %v686 = vadd.f32 0.0, %v685
        %v687 = vpop.f32.mrf.mxu0
        %688 = vdwg.mxu0
        %v689 = vadd.f32 %v473, %v615
        %v690 = vadd.f32 %v475, %v617
        %v691 = vxor.u32 %v689, 2147483648
        %v692 = vxor.u32 %v690, 2147483648
        %v693 = vmul.f32 %v691, 1.442695
        %v694 = vpow.pop %v693
        %v695 = vmul.f32 %v692, 1.442695
        %v696 = vpow.pop %v695
        %v697 = vadd.f32 %v694, 1.0
        %v698 = vadd.f32 %v696, 1.0
        %v699 = vrcp.pop %v697
        %v700 = vmul.f32 1.0, %v699
        %v701 = vrcp.pop %v698
        %v702 = vmul.f32 1.0, %v701
        %v704 = vlaneseq
        %v705 = vshrl.u32 %v704, 7
        %v706 = vsub.s32 0, %v705
        %v707 = vrot.slane %v351, %v706
        %v709 = vadd.f32 %v686, %v707
        %v710 = vmul.f32 %v700, %v709
        %v711 = vadd.f32 %v544, %v710
        %v712 = vtanh.pop %v711
        %v713 = vsub.f32 %v547, %v712
        %v714 = vmul.f32 %v702, %v713
        %v715 = vadd.f32 %v712, %v714
        %716 = vmatprep.subr.mxu0 %v348
        %717 = vmatpush1.msra.mxu0 %v347
        %718 = vmatprep.subr.mxu0 %v345
        %719 = vmatpush1.msra.mxu0 %v344
        %720 = vmatprep.subr.mxu0 %v342
        %721 = vmatpush1.msra.mxu0 %v341
        %722 = vmatprep.subr.mxu0 %v339
        %723 = vmatpush1.msra.mxu0 %v338
        %724 = vmatprep.subr.mxu0 %v336
        %725 = vmatpush1.msra.mxu0 %v335
        %726 = vmatprep.subr.mxu0 %v333
        %727 = vmatpush1.msra.mxu0 %v332
        %728 = vmatprep.subr.mxu0 %v330
        %729 = vmatpush1.msra.mxu0 %v329
        %730 = vmatprep.subr.mxu0 %v327
        %731 = vmatpush1.msra.mxu0 %v326
        %732 = vmatprep.subr.mxu0 %v324
        %733 = vmatpush1.msra.mxu0 %v323
        %734 = vmatprep.subr.mxu0 %v321
        %735 = vmatpush1.msra.mxu0 %v320
        %736 = vmatprep.subr.mxu0 %v318
        %737 = vmatpush1.msra.mxu0 %v317
        %738 = vmatprep.subr.mxu0 %v315
        %739 = vmatpush1.msra.mxu0 %v314
        %740 = vmatprep.subr.mxu0 %v312
        %741 = vmatpush1.msra.mxu0 %v311
        %742 = vmatprep.subr.mxu0 %v309
        %743 = vmatpush1.msra.mxu0 %v308
        %744 = vmatprep.subr.mxu0 %v306
        %745 = vmatpush1.msra.mxu0 %v305
        %746 = vmatprep.subr.mxu0 %v303
        %747 = vmatpush1.msra.mxu0 %v302
        %748 = vmatprep.subr.mxu0 0.0
        %749 = vmatpush2.msra.mxu0 0.0
        %750 = vmatprep.subr.mxu0 0.0
        %751 = vmatpush2.msra.mxu0 0.0
        %752 = vmatprep.subr.mxu0 0.0
        %753 = vmatpush2.msra.mxu0 0.0
        %754 = vmatprep.subr.mxu0 0.0
        %755 = vmatpush2.msra.mxu0 0.0
        %756 = vmatprep.subr.mxu0 0.0
        %757 = vmatpush2.msra.mxu0 0.0
        %758 = vmatprep.subr.mxu0 0.0
        %759 = vmatpush2.msra.mxu0 0.0
        %760 = vmatprep.subr.mxu0 0.0
        %761 = vmatpush2.msra.mxu0 0.0
        %762 = vmatprep.subr.mxu0 0.0
        %763 = vmatpush2.msra.mxu0 0.0
        %764 = vmatprep.subr.mxu0 0.0
        %765 = vmatpush2.msra.mxu0 0.0
        %766 = vmatprep.subr.mxu0 0.0
        %767 = vmatpush2.msra.mxu0 0.0
        %768 = vmatprep.subr.mxu0 0.0
        %769 = vmatpush2.msra.mxu0 0.0
        %770 = vmatprep.subr.mxu0 0.0
        %771 = vmatpush2.msra.mxu0 0.0
        %772 = vmatprep.subr.mxu0 0.0
        %773 = vmatpush2.msra.mxu0 0.0
        %774 = vmatprep.subr.mxu0 0.0
        %775 = vmatpush2.msra.mxu0 0.0
        %776 = vmatprep.subr.mxu0 0.0
        %777 = vmatpush2.msra.mxu0 0.0
        %778 = vmatprep.subr.mxu0 0.0
        %779 = vmatpush2.msra.mxu0 0.0
        %780 = vmatprep.mubr.f32.mxu0 0.0
        %781 = vmatmul.mubr.f32.gmra.mxu0 %v715
        %v782 = vpop.f32.mrf.mxu0
        %v783 = vadd.f32 0.0, %v782
        %v784 = vpop.f32.mrf.mxu0
        %v785 = vadd.f32 0.0, %v784
        %786 = vdwg.mxu0
        %787 = vmatprep.subr.mxu0 0.0
        %788 = vmatpush1.msra.mxu0 %v349
        %789 = vmatprep.subr.mxu0 0.0
        %790 = vmatpush1.msra.mxu0 %v346
        %791 = vmatprep.subr.mxu0 0.0
        %792 = vmatpush1.msra.mxu0 %v343
        %793 = vmatprep.subr.mxu0 0.0
        %794 = vmatpush1.msra.mxu0 %v340
        %795 = vmatprep.subr.mxu0 0.0
        %796 = vmatpush1.msra.mxu0 %v337
        %797 = vmatprep.subr.mxu0 0.0
        %798 = vmatpush1.msra.mxu0 %v334
        %799 = vmatprep.subr.mxu0 0.0
        %800 = vmatpush1.msra.mxu0 %v331
        %801 = vmatprep.subr.mxu0 0.0
        %802 = vmatpush1.msra.mxu0 %v328
        %803 = vmatprep.subr.mxu0 0.0
        %804 = vmatpush1.msra.mxu0 %v325
        %805 = vmatprep.subr.mxu0 0.0
        %806 = vmatpush1.msra.mxu0 %v322
        %807 = vmatprep.subr.mxu0 0.0
        %808 = vmatpush1.msra.mxu0 %v319
        %809 = vmatprep.subr.mxu0 0.0
        %810 = vmatpush1.msra.mxu0 %v316
        %811 = vmatprep.subr.mxu0 0.0
        %812 = vmatpush1.msra.mxu0 %v313
        %813 = vmatprep.subr.mxu0 0.0
        %814 = vmatpush1.msra.mxu0 %v310
        %815 = vmatprep.subr.mxu0 0.0
        %816 = vmatpush1.msra.mxu0 %v307
        %817 = vmatprep.subr.mxu0 0.0
        %818 = vmatpush1.msra.mxu0 %v304
        %819 = vmatprep.subr.mxu0 0.0
        %820 = vmatpush2.msra.mxu0 0.0
        %821 = vmatprep.subr.mxu0 0.0
        %822 = vmatpush2.msra.mxu0 0.0
        %823 = vmatprep.subr.mxu0 0.0
        %824 = vmatpush2.msra.mxu0 0.0
        %825 = vmatprep.subr.mxu0 0.0
        %826 = vmatpush2.msra.mxu0 0.0
        %827 = vmatprep.subr.mxu0 0.0
        %828 = vmatpush2.msra.mxu0 0.0
        %829 = vmatprep.subr.mxu0 0.0
        %830 = vmatpush2.msra.mxu0 0.0
        %831 = vmatprep.subr.mxu0 0.0
        %832 = vmatpush2.msra.mxu0 0.0
        %833 = vmatprep.subr.mxu0 0.0
        %834 = vmatpush2.msra.mxu0 0.0
        %835 = vmatprep.subr.mxu0 0.0
        %836 = vmatpush2.msra.mxu0 0.0
        %837 = vmatprep.subr.mxu0 0.0
        %838 = vmatpush2.msra.mxu0 0.0
        %839 = vmatprep.subr.mxu0 0.0
        %840 = vmatpush2.msra.mxu0 0.0
        %841 = vmatprep.subr.mxu0 0.0
        %842 = vmatpush2.msra.mxu0 0.0
        %843 = vmatprep.subr.mxu0 0.0
        %844 = vmatpush2.msra.mxu0 0.0
        %845 = vmatprep.subr.mxu0 0.0
        %846 = vmatpush2.msra.mxu0 0.0
        %847 = vmatprep.subr.mxu0 0.0
        %848 = vmatpush2.msra.mxu0 0.0
        %849 = vmatprep.subr.mxu0 0.0
        %850 = vmatpush2.msra.mxu0 0.0
        %851 = vmatprep.mubr.f32.mxu0 0.0
        %852 = vmatmul.mubr.f32.gmra.mxu0 %v715
        %v853 = vpop.f32.mrf.mxu0
        %v854 = vadd.f32 0.0, %v853
        %v855 = vpop.f32.mrf.mxu0
        %856 = vdwg.mxu0
        %v859 = vrot.slane %v783, 6
        %v860 = vrot.slane %v785, 6
        %v863 = vadd.f32 %v473, %v859
        %v864 = vadd.f32 %v475, %v860
        %v865 = vxor.u32 %v863, 2147483648
        %v866 = vxor.u32 %v864, 2147483648
        %v867 = vmul.f32 %v865, 1.442695
        %v868 = vpow.pop %v867
        %v869 = vmul.f32 %v866, 1.442695
        %v870 = vpow.pop %v869
        %v871 = vadd.f32 %v868, 1.0
        %v872 = vadd.f32 %v870, 1.0
        %v873 = vrcp.pop %v871
        %v874 = vmul.f32 1.0, %v873
        %v875 = vrcp.pop %v872
        %v876 = vmul.f32 1.0, %v875
        %v877 = vadd.f32 %v854, %v707
        %v879 = vrot.slane %v877, 6
        %v881 = vmul.f32 %v874, %v879
        %v882 = vadd.f32 %v544, %v881
        %v883 = vtanh.pop %v882
        %v885 = vrot.slane %v883, 2
        %v887 = vsub.f32 %v715, %v885
        %v889 = vrot.slane %v887, 6
        %v891 = vmul.f32 %v876, %v889
        %v892 = vadd.f32 %v883, %v891
        %v894 = vrot.slane %v892, 2
        %896 = vmatprep.subr.mxu0 %v348
        %897 = vmatpush1.msra.mxu0 %v347
        %898 = vmatprep.subr.mxu0 %v345
        %899 = vmatpush1.msra.mxu0 %v344
        %900 = vmatprep.subr.mxu0 %v342
        %901 = vmatpush1.msra.mxu0 %v341
        %902 = vmatprep.subr.mxu0 %v339
        %903 = vmatpush1.msra.mxu0 %v338
        %904 = vmatprep.subr.mxu0 %v336
        %905 = vmatpush1.msra.mxu0 %v335
        %906 = vmatprep.subr.mxu0 %v333
        %907 = vmatpush1.msra.mxu0 %v332
        %908 = vmatprep.subr.mxu0 %v330
        %909 = vmatpush1.msra.mxu0 %v329
        %910 = vmatprep.subr.mxu0 %v327
        %911 = vmatpush1.msra.mxu0 %v326
        %912 = vmatprep.subr.mxu0 %v324
        %913 = vmatpush1.msra.mxu0 %v323
        %914 = vmatprep.subr.mxu0 %v321
        %915 = vmatpush1.msra.mxu0 %v320
        %916 = vmatprep.subr.mxu0 %v318
        %917 = vmatpush1.msra.mxu0 %v317
        %918 = vmatprep.subr.mxu0 %v315
        %919 = vmatpush1.msra.mxu0 %v314
        %920 = vmatprep.subr.mxu0 %v312
        %921 = vmatpush1.msra.mxu0 %v311
        %922 = vmatprep.subr.mxu0 %v309
        %923 = vmatpush1.msra.mxu0 %v308
        %924 = vmatprep.subr.mxu0 %v306
        %925 = vmatpush1.msra.mxu0 %v305
        %926 = vmatprep.subr.mxu0 %v303
        %927 = vmatpush1.msra.mxu0 %v302
        %928 = vmatprep.subr.mxu0 0.0
        %929 = vmatpush2.msra.mxu0 0.0
        %930 = vmatprep.subr.mxu0 0.0
        %931 = vmatpush2.msra.mxu0 0.0
        %932 = vmatprep.subr.mxu0 0.0
        %933 = vmatpush2.msra.mxu0 0.0
        %934 = vmatprep.subr.mxu0 0.0
        %935 = vmatpush2.msra.mxu0 0.0
        %936 = vmatprep.subr.mxu0 0.0
        %937 = vmatpush2.msra.mxu0 0.0
        %938 = vmatprep.subr.mxu0 0.0
        %939 = vmatpush2.msra.mxu0 0.0
        %940 = vmatprep.subr.mxu0 0.0
        %941 = vmatpush2.msra.mxu0 0.0
        %942 = vmatprep.subr.mxu0 0.0
        %943 = vmatpush2.msra.mxu0 0.0
        %944 = vmatprep.subr.mxu0 0.0
        %945 = vmatpush2.msra.mxu0 0.0
        %946 = vmatprep.subr.mxu0 0.0
        %947 = vmatpush2.msra.mxu0 0.0
        %948 = vmatprep.subr.mxu0 0.0
        %949 = vmatpush2.msra.mxu0 0.0
        %950 = vmatprep.subr.mxu0 0.0
        %951 = vmatpush2.msra.mxu0 0.0
        %952 = vmatprep.subr.mxu0 0.0
        %953 = vmatpush2.msra.mxu0 0.0
        %954 = vmatprep.subr.mxu0 0.0
        %955 = vmatpush2.msra.mxu0 0.0
        %956 = vmatprep.subr.mxu0 0.0
        %957 = vmatpush2.msra.mxu0 0.0
        %958 = vmatprep.subr.mxu0 0.0
        %959 = vmatpush2.msra.mxu0 0.0
        %960 = vmatprep.mubr.f32.mxu0 0.0
        %961 = vmatmul.mubr.f32.gmra.mxu0 %v894
        %v962 = vpop.f32.mrf.mxu0
        %v963 = vadd.f32 0.0, %v962
        %v964 = vpop.f32.mrf.mxu0
        %v965 = vadd.f32 0.0, %v964
        %966 = vdwg.mxu0
        %967 = vmatprep.subr.mxu0 0.0
        %968 = vmatpush1.msra.mxu0 %v349
        %969 = vmatprep.subr.mxu0 0.0
        %970 = vmatpush1.msra.mxu0 %v346
        %971 = vmatprep.subr.mxu0 0.0
        %972 = vmatpush1.msra.mxu0 %v343
        %973 = vmatprep.subr.mxu0 0.0
        %974 = vmatpush1.msra.mxu0 %v340
        %975 = vmatprep.subr.mxu0 0.0
        %976 = vmatpush1.msra.mxu0 %v337
        %977 = vmatprep.subr.mxu0 0.0
        %978 = vmatpush1.msra.mxu0 %v334
        %979 = vmatprep.subr.mxu0 0.0
        %980 = vmatpush1.msra.mxu0 %v331
        %981 = vmatprep.subr.mxu0 0.0
        %982 = vmatpush1.msra.mxu0 %v328
        %983 = vmatprep.subr.mxu0 0.0
        %984 = vmatpush1.msra.mxu0 %v325
        %985 = vmatprep.subr.mxu0 0.0
        %986 = vmatpush1.msra.mxu0 %v322
        %987 = vmatprep.subr.mxu0 0.0
        %988 = vmatpush1.msra.mxu0 %v319
        %989 = vmatprep.subr.mxu0 0.0
        %990 = vmatpush1.msra.mxu0 %v316
        %991 = vmatprep.subr.mxu0 0.0
        %992 = vmatpush1.msra.mxu0 %v313
        %993 = vmatprep.subr.mxu0 0.0
        %994 = vmatpush1.msra.mxu0 %v310
        %995 = vmatprep.subr.mxu0 0.0
        %996 = vmatpush1.msra.mxu0 %v307
        %997 = vmatprep.subr.mxu0 0.0
        %998 = vmatpush1.msra.mxu0 %v304
        %999 = vmatprep.subr.mxu0 0.0
        %1000 = vmatpush2.msra.mxu0 0.0
        %1001 = vmatprep.subr.mxu0 0.0
        %1002 = vmatpush2.msra.mxu0 0.0
        %1003 = vmatprep.subr.mxu0 0.0
        %1004 = vmatpush2.msra.mxu0 0.0
        %1005 = vmatprep.subr.mxu0 0.0
        %1006 = vmatpush2.msra.mxu0 0.0
        %1007 = vmatprep.subr.mxu0 0.0
        %1008 = vmatpush2.msra.mxu0 0.0
        %1009 = vmatprep.subr.mxu0 0.0
        %1010 = vmatpush2.msra.mxu0 0.0
        %1011 = vmatprep.subr.mxu0 0.0
        %1012 = vmatpush2.msra.mxu0 0.0
        %1013 = vmatprep.subr.mxu0 0.0
        %1014 = vmatpush2.msra.mxu0 0.0
        %1015 = vmatprep.subr.mxu0 0.0
        %1016 = vmatpush2.msra.mxu0 0.0
        %1017 = vmatprep.subr.mxu0 0.0
        %1018 = vmatpush2.msra.mxu0 0.0
        %1019 = vmatprep.subr.mxu0 0.0
        %1020 = vmatpush2.msra.mxu0 0.0
        %1021 = vmatprep.subr.mxu0 0.0
        %1022 = vmatpush2.msra.mxu0 0.0
        %1023 = vmatprep.subr.mxu0 0.0
        %1024 = vmatpush2.msra.mxu0 0.0
        %1025 = vmatprep.subr.mxu0 0.0
        %1026 = vmatpush2.msra.mxu0 0.0
        %1027 = vmatprep.subr.mxu0 0.0
        %1028 = vmatpush2.msra.mxu0 0.0
        %1029 = vmatprep.subr.mxu0 0.0
        %1030 = vmatpush2.msra.mxu0 0.0
        %1031 = vmatprep.mubr.f32.mxu0 0.0
        %1032 = vmatmul.mubr.f32.gmra.mxu0 %v894
        %v1033 = vpop.f32.mrf.mxu0
        %v1034 = vadd.f32 0.0, %v1033
        %v1035 = vpop.f32.mrf.mxu0
        %1036 = vdwg.mxu0
        %v1039 = vrot.slane %v963, 4
        %v1040 = vrot.slane %v965, 4
        %v1043 = vadd.f32 %v473, %v1039
        %v1044 = vadd.f32 %v475, %v1040
        %v1045 = vxor.u32 %v1043, 2147483648
        %v1046 = vxor.u32 %v1044, 2147483648
        %v1047 = vmul.f32 %v1045, 1.442695
        %v1048 = vpow.pop %v1047
        %v1049 = vmul.f32 %v1046, 1.442695
        %v1050 = vpow.pop %v1049
        %v1051 = vadd.f32 %v1048, 1.0
        %v1052 = vadd.f32 %v1050, 1.0
        %v1053 = vrcp.pop %v1051
        %v1054 = vmul.f32 1.0, %v1053
        %v1055 = vrcp.pop %v1052
        %v1056 = vmul.f32 1.0, %v1055
        %v1057 = vadd.f32 %v1034, %v707
        %v1059 = vrot.slane %v1057, 4
        %v1061 = vmul.f32 %v1054, %v1059
        %v1062 = vadd.f32 %v544, %v1061
        %v1063 = vtanh.pop %v1062
        %v1065 = vrot.slane %v1063, 2
        %v1067 = vsub.f32 %v892, %v1065
        %v1069 = vrot.slane %v1067, 6
        %v1071 = vmul.f32 %v1056, %v1069
        %v1072 = vadd.f32 %v1063, %v1071
        %v1074 = vrot.slane %v1072, 4
        %1076 = vmatprep.subr.mxu0 %v348
        %1077 = vmatpush1.msra.mxu0 %v347
        %1078 = vmatprep.subr.mxu0 %v345
        %1079 = vmatpush1.msra.mxu0 %v344
        %1080 = vmatprep.subr.mxu0 %v342
        %1081 = vmatpush1.msra.mxu0 %v341
        %1082 = vmatprep.subr.mxu0 %v339
        %1083 = vmatpush1.msra.mxu0 %v338
        %1084 = vmatprep.subr.mxu0 %v336
        %1085 = vmatpush1.msra.mxu0 %v335
        %1086 = vmatprep.subr.mxu0 %v333
        %1087 = vmatpush1.msra.mxu0 %v332
        %1088 = vmatprep.subr.mxu0 %v330
        %1089 = vmatpush1.msra.mxu0 %v329
        %1090 = vmatprep.subr.mxu0 %v327
        %1091 = vmatpush1.msra.mxu0 %v326
        %1092 = vmatprep.subr.mxu0 %v324
        %1093 = vmatpush1.msra.mxu0 %v323
        %1094 = vmatprep.subr.mxu0 %v321
        %1095 = vmatpush1.msra.mxu0 %v320
        %1096 = vmatprep.subr.mxu0 %v318
        %1097 = vmatpush1.msra.mxu0 %v317
        %1098 = vmatprep.subr.mxu0 %v315
        %1099 = vmatpush1.msra.mxu0 %v314
        %1100 = vmatprep.subr.mxu0 %v312
        %1101 = vmatpush1.msra.mxu0 %v311
        %1102 = vmatprep.subr.mxu0 %v309
        %1103 = vmatpush1.msra.mxu0 %v308
        %1104 = vmatprep.subr.mxu0 %v306
        %1105 = vmatpush1.msra.mxu0 %v305
        %1106 = vmatprep.subr.mxu0 %v303
        %1107 = vmatpush1.msra.mxu0 %v302
        %1108 = vmatprep.subr.mxu0 0.0
        %1109 = vmatpush2.msra.mxu0 0.0
        %1110 = vmatprep.subr.mxu0 0.0
        %1111 = vmatpush2.msra.mxu0 0.0
        %1112 = vmatprep.subr.mxu0 0.0
        %1113 = vmatpush2.msra.mxu0 0.0
        %1114 = vmatprep.subr.mxu0 0.0
        %1115 = vmatpush2.msra.mxu0 0.0
        %1116 = vmatprep.subr.mxu0 0.0
        %1117 = vmatpush2.msra.mxu0 0.0
        %1118 = vmatprep.subr.mxu0 0.0
        %1119 = vmatpush2.msra.mxu0 0.0
        %1120 = vmatprep.subr.mxu0 0.0
        %1121 = vmatpush2.msra.mxu0 0.0
        %1122 = vmatprep.subr.mxu0 0.0
        %1123 = vmatpush2.msra.mxu0 0.0
        %1124 = vmatprep.subr.mxu0 0.0
        %1125 = vmatpush2.msra.mxu0 0.0
        %1126 = vmatprep.subr.mxu0 0.0
        %1127 = vmatpush2.msra.mxu0 0.0
        %1128 = vmatprep.subr.mxu0 0.0
        %1129 = vmatpush2.msra.mxu0 0.0
        %1130 = vmatprep.subr.mxu0 0.0
        %1131 = vmatpush2.msra.mxu0 0.0
        %1132 = vmatprep.subr.mxu0 0.0
        %1133 = vmatpush2.msra.mxu0 0.0
        %1134 = vmatprep.subr.mxu0 0.0
        %1135 = vmatpush2.msra.mxu0 0.0
        %1136 = vmatprep.subr.mxu0 0.0
        %1137 = vmatpush2.msra.mxu0 0.0
        %1138 = vmatprep.subr.mxu0 0.0
        %1139 = vmatpush2.msra.mxu0 0.0
        %1140 = vmatprep.mubr.f32.mxu0 0.0
        %1141 = vmatmul.mubr.f32.gmra.mxu0 %v1074
        %v1142 = vpop.f32.mrf.mxu0
        %v1143 = vadd.f32 0.0, %v1142
        %v1144 = vpop.f32.mrf.mxu0
        %v1145 = vadd.f32 0.0, %v1144
        %1146 = vdwg.mxu0
        %1147 = vmatprep.subr.mxu0 0.0
        %1148 = vmatpush1.msra.mxu0 %v349
        %1149 = vmatprep.subr.mxu0 0.0
        %1150 = vmatpush1.msra.mxu0 %v346
        %1151 = vmatprep.subr.mxu0 0.0
        %1152 = vmatpush1.msra.mxu0 %v343
        %1153 = vmatprep.subr.mxu0 0.0
        %1154 = vmatpush1.msra.mxu0 %v340
        %1155 = vmatprep.subr.mxu0 0.0
        %1156 = vmatpush1.msra.mxu0 %v337
        %1157 = vmatprep.subr.mxu0 0.0
        %1158 = vmatpush1.msra.mxu0 %v334
        %1159 = vmatprep.subr.mxu0 0.0
        %1160 = vmatpush1.msra.mxu0 %v331
        %1161 = vmatprep.subr.mxu0 0.0
        %1162 = vmatpush1.msra.mxu0 %v328
        %1163 = vmatprep.subr.mxu0 0.0
        %1164 = vmatpush1.msra.mxu0 %v325
        %1165 = vmatprep.subr.mxu0 0.0
        %1166 = vmatpush1.msra.mxu0 %v322
        %1167 = vmatprep.subr.mxu0 0.0
        %1168 = vmatpush1.msra.mxu0 %v319
        %1169 = vmatprep.subr.mxu0 0.0
        %1170 = vmatpush1.msra.mxu0 %v316
        %1171 = vmatprep.subr.mxu0 0.0
        %1172 = vmatpush1.msra.mxu0 %v313
        %1173 = vmatprep.subr.mxu0 0.0
        %1174 = vmatpush1.msra.mxu0 %v310
        %1175 = vmatprep.subr.mxu0 0.0
        %1176 = vmatpush1.msra.mxu0 %v307
        %1177 = vmatprep.subr.mxu0 0.0
        %1178 = vmatpush1.msra.mxu0 %v304
        %1179 = vmatprep.subr.mxu0 0.0
        %1180 = vmatpush2.msra.mxu0 0.0
        %1181 = vmatprep.subr.mxu0 0.0
        %1182 = vmatpush2.msra.mxu0 0.0
        %1183 = vmatprep.subr.mxu0 0.0
        %1184 = vmatpush2.msra.mxu0 0.0
        %1185 = vmatprep.subr.mxu0 0.0
        %1186 = vmatpush2.msra.mxu0 0.0
        %1187 = vmatprep.subr.mxu0 0.0
        %1188 = vmatpush2.msra.mxu0 0.0
        %1189 = vmatprep.subr.mxu0 0.0
        %1190 = vmatpush2.msra.mxu0 0.0
        %1191 = vmatprep.subr.mxu0 0.0
        %1192 = vmatpush2.msra.mxu0 0.0
        %1193 = vmatprep.subr.mxu0 0.0
        %1194 = vmatpush2.msra.mxu0 0.0
        %1195 = vmatprep.subr.mxu0 0.0
        %1196 = vmatpush2.msra.mxu0 0.0
        %1197 = vmatprep.subr.mxu0 0.0
        %1198 = vmatpush2.msra.mxu0 0.0
        %1199 = vmatprep.subr.mxu0 0.0
        %1200 = vmatpush2.msra.mxu0 0.0
        %1201 = vmatprep.subr.mxu0 0.0
        %1202 = vmatpush2.msra.mxu0 0.0
        %1203 = vmatprep.subr.mxu0 0.0
        %1204 = vmatpush2.msra.mxu0 0.0
        %1205 = vmatprep.subr.mxu0 0.0
        %1206 = vmatpush2.msra.mxu0 0.0
        %1207 = vmatprep.subr.mxu0 0.0
        %1208 = vmatpush2.msra.mxu0 0.0
        %1209 = vmatprep.subr.mxu0 0.0
        %1210 = vmatpush2.msra.mxu0 0.0
        %1211 = vmatprep.mubr.f32.mxu0 0.0
        %1212 = vmatmul.mubr.f32.gmra.mxu0 %v1074
        %v1213 = vpop.f32.mrf.mxu0
        %v1214 = vadd.f32 0.0, %v1213
        %v1215 = vpop.f32.mrf.mxu0
        %1216 = vdwg.mxu0
        %v1219 = vrot.slane %v1143, 2
        %v1220 = vrot.slane %v1145, 2
        %v1223 = vadd.f32 %v473, %v1219
        %v1224 = vadd.f32 %v475, %v1220
        %v1225 = vxor.u32 %v1223, 2147483648
        %v1226 = vxor.u32 %v1224, 2147483648
        %v1227 = vmul.f32 %v1225, 1.442695
        %v1228 = vpow.pop %v1227
        %v1229 = vmul.f32 %v1226, 1.442695
        %v1230 = vpow.pop %v1229
        %v1231 = vadd.f32 %v1228, 1.0
        %v1232 = vadd.f32 %v1230, 1.0
        %v1233 = vrcp.pop %v1231
        %v1234 = vmul.f32 1.0, %v1233
        %v1235 = vrcp.pop %v1232
        %v1236 = vmul.f32 1.0, %v1235
        %v1237 = vadd.f32 %v1214, %v707
        %v1239 = vrot.slane %v1237, 2
        %v1241 = vmul.f32 %v1234, %v1239
        %v1242 = vadd.f32 %v544, %v1241
        %v1243 = vtanh.pop %v1242
        %v1245 = vrot.slane %v1243, 2
        %v1247 = vsub.f32 %v1072, %v1245
        %v1249 = vrot.slane %v1247, 6
        %v1251 = vmul.f32 %v1236, %v1249
        %v1252 = vadd.f32 %v1243, %v1251
        %1253 = vst [vmem:[#allocation2 - $0x6] sm:$0xc0] %v1252
        %p1254 = scmp.eq.s32.totalorder %s24, 1
        // Predicated region
        $region53: #{_forward.1} parent=47 // pred_check
          %p1255 = pneg %p1254
        $region54: #{_forward.1} parent=47 // pred_check_branch
          %1257 = sbr.rel (%p1255) target = $region56
        $region55: #{_forward.1} parent=47 // pred_region
          %v1258 = vld [vmem:[%s5] sm:$0xff]
          %v1259 = vld [vmem:[%s5 + $0x8] sm:$0xff]
          %v1260 = vld [vmem:[%s5 + $0x10] sm:$0xff]
          %v1261 = vld [vmem:[%s5 + $0x18] sm:$0xff]
          %v1262 = vld [vmem:[%s5 + $0x20] sm:$0xff]
          %v1263 = vld [vmem:[%s5 + $0x28] sm:$0xff]
          %v1264 = vld [vmem:[%s5 + $0x30] sm:$0xff]
          %v1265 = vld [vmem:[%s5 + $0x38] sm:$0xff]
          %v1266 = vld [vmem:[%s5 + $0x40] sm:$0xff]
          %v1267 = vld [vmem:[%s5 + $0x48] sm:$0xff]
          %v1268 = vld [vmem:[%s5 + $0x50] sm:$0xff]
          %v1269 = vld [vmem:[%s5 + $0x58] sm:$0xff]
          %v1270 = vld [vmem:[%s5 + $0x60] sm:$0xff]
          %v1271 = vld [vmem:[%s5 + $0x68] sm:$0xff]
          %v1272 = vld [vmem:[%s5 + $0x70] sm:$0xff]
          %v1273 = vld [vmem:[%s5 + $0x78] sm:$0xff]
          %v1274 = vld [vmem:[%s6] sm:$0x1]
          %v1276 = vlaneseq
          %v1277 = vshrl.u32 %v1276, 7
          %v1278 = vsub.s32 0, %v1277
          %v1279 = vrot.slane %v1274, %v1278
          %v1282 = vrot.slane %v1252, 6
          %1284 = vmatprep.subr.mxu0 0.0
          %1285 = vmatpush1.msra.mxu0 %v1273
          %1286 = vmatprep.subr.mxu0 0.0
          %1287 = vmatpush1.msra.mxu0 %v1272
          %1288 = vmatprep.subr.mxu0 0.0
          %1289 = vmatpush1.msra.mxu0 %v1271
          %1290 = vmatprep.subr.mxu0 0.0
          %1291 = vmatpush1.msra.mxu0 %v1270
          %1292 = vmatprep.subr.mxu0 0.0
          %1293 = vmatpush1.msra.mxu0 %v1269
          %1294 = vmatprep.subr.mxu0 0.0
          %1295 = vmatpush1.msra.mxu0 %v1268
          %1296 = vmatprep.subr.mxu0 0.0
          %1297 = vmatpush1.msra.mxu0 %v1267
          %1298 = vmatprep.subr.mxu0 0.0
          %1299 = vmatpush1.msra.mxu0 %v1266
          %1300 = vmatprep.subr.mxu0 0.0
          %1301 = vmatpush1.msra.mxu0 %v1265
          %1302 = vmatprep.subr.mxu0 0.0
          %1303 = vmatpush1.msra.mxu0 %v1264
          %1304 = vmatprep.subr.mxu0 0.0
          %1305 = vmatpush1.msra.mxu0 %v1263
          %1306 = vmatprep.subr.mxu0 0.0
          %1307 = vmatpush1.msra.mxu0 %v1262
          %1308 = vmatprep.subr.mxu0 0.0
          %1309 = vmatpush1.msra.mxu0 %v1261
          %1310 = vmatprep.subr.mxu0 0.0
          %1311 = vmatpush1.msra.mxu0 %v1260
          %1312 = vmatprep.subr.mxu0 0.0
          %1313 = vmatpush1.msra.mxu0 %v1259
          %1314 = vmatprep.subr.mxu0 0.0
          %1315 = vmatpush1.msra.mxu0 %v1258
          %1316 = vmatprep.subr.mxu0 0.0
          %1317 = vmatpush2.msra.mxu0 0.0
          %1318 = vmatprep.subr.mxu0 0.0
          %1319 = vmatpush2.msra.mxu0 0.0
          %1320 = vmatprep.subr.mxu0 0.0
          %1321 = vmatpush2.msra.mxu0 0.0
          %1322 = vmatprep.subr.mxu0 0.0
          %1323 = vmatpush2.msra.mxu0 0.0
          %1324 = vmatprep.subr.mxu0 0.0
          %1325 = vmatpush2.msra.mxu0 0.0
          %1326 = vmatprep.subr.mxu0 0.0
          %1327 = vmatpush2.msra.mxu0 0.0
          %1328 = vmatprep.subr.mxu0 0.0
          %1329 = vmatpush2.msra.mxu0 0.0
          %1330 = vmatprep.subr.mxu0 0.0
          %1331 = vmatpush2.msra.mxu0 0.0
          %1332 = vmatprep.subr.mxu0 0.0
          %1333 = vmatpush2.msra.mxu0 0.0
          %1334 = vmatprep.subr.mxu0 0.0
          %1335 = vmatpush2.msra.mxu0 0.0
          %1336 = vmatprep.subr.mxu0 0.0
          %1337 = vmatpush2.msra.mxu0 0.0
          %1338 = vmatprep.subr.mxu0 0.0
          %1339 = vmatpush2.msra.mxu0 0.0
          %1340 = vmatprep.subr.mxu0 0.0
          %1341 = vmatpush2.msra.mxu0 0.0
          %1342 = vmatprep.subr.mxu0 0.0
          %1343 = vmatpush2.msra.mxu0 0.0
          %1344 = vmatprep.subr.mxu0 0.0
          %1345 = vmatpush2.msra.mxu0 0.0
          %1346 = vmatprep.subr.mxu0 0.0
          %1347 = vmatpush2.msra.mxu0 0.0
          %1348 = vmatprep.mubr.f32.mxu0 0.0
          %1349 = vmatmul.mubr.f32.gmra.mxu0 %v1282
          %v1350 = vpop.f32.mrf.mxu0
          %v1351 = vadd.f32 %v1279, %v1350
          %v1352 = vpop.f32.mrf.mxu0
          %1353 = vdwg.mxu0
          %1354 = vst [vmem:[#allocation3] sm:$0x3] %v1351
        $region56: #{_forward.1} parent=47 // pred_fallthru
          _
        // Predicated region
        $region57: #{_forward.1} parent=47 // pred_check
          %p1355 = pneg %p203
        $region58: #{_forward.1} parent=47 // pred_check_branch
          %1357 = sbr.rel (%p1355) target = $region60
        $region59: #{_forward.1} parent=47 // pred_region
          %s1359 = ssub.s32 32, 32
          %1360 = vsyncadd [#allocation4], %s1359
          %s1361 = smul.addr %s23, 32
          %s1362 = scalar_lea.hbm %s7, %s1361
          %s1364 = sshll.u32 [#allocation3], 4
          %s1365 = int_to_ptr.vmem [resolvable:$true] %s1364
          %1367 = dma.vmem_to_hbm [thread:$0]  %s1365, 32, %s1362, [#allocation4]
        $region60: #{_forward.1} parent=47 // pred_fallthru
          _
        // Predicated region
        $region61: #{_forward.1} parent=47 // pred_check
          %p1368 = pneg %p203
        $region62: #{_forward.1} parent=47 // pred_check_branch
          %1370 = sbr.rel (%p1368) target = $region64
        $region63: #{_forward.1} parent=47 // pred_region
          %1371 = dma.done [#allocation4], 32
        $region64: #{_forward.1} parent=47 // pred_fallthru
          _
      $region48: #{_forward.1} parent=5 // pred_fallthru
        _
      %p1372 = scmp.le.s32.totalorder 2, %s14
      // Predicated region
      $region65: #{_forward.1} parent=5 // pred_check
        %p1373 = pneg %p1372
      $region66: #{_forward.1} parent=5 // pred_check_branch
        %1375 = sbr.rel (%p1373) target = $region68
      $region67: #{_forward.1} parent=5 // pred_region
        %s1376 = ssub.s32 %s14, 2
      $region68: #{_forward.1} parent=5 // pred_fallthru
        _
    $region6: #{_forward.1} parent=1 // loop_footer
      %s18 = sadd.s32 1, %s14
    $region7: #{_forward.1} parent=1 // loop_footer_branch
      %13 = sbr.rel target = $region3
    $region8: #{_forward.1} parent=1 // loop_exit
      _
    %1377 = vsyncpa [#allocation4], 1
    %s1378 = scalar_lea.sflag [#allocation4], 1
    %1379 = vsyncpa %s1378, 1

</llo_original>
